<compile_context>
chip_gen: v7x
topology: tpu7x:2x2x1
jax: 0.10.0
libtpu: 0.0.40
codegen_flags: <defaults>
</compile_context>

<pallas_src>
import jax
import jax.numpy as jnp
from jax import lax
from jax.experimental import pallas as pl
from jax.experimental.pallas import tpu as pltpu


# Tables with at most this many rows are gathered with the vectorized VPU
# select chain (cost ~ n * TB * D element ops, fully parallel over the batch
# tile).  Larger tables use the per-row dynamic-slice gather whose cost is
# O(TB * D), independent of n.  Crossover is a few hundred rows for D~32-128.
_SELECT_GATHER_MAX = 128


def _make_kernel(*, D, tb, b_pad, modes):
    """Build the kernel body.  `modes` = ("select"|"rowloop"|"stream") per
    table, ordered (users, gender, age)."""

    def kernel(idx_vmem_ref,   # (tb, 3) int32 block in VMEM (one DMA / step)
               idx_smem_ref,   # (3*b_pad,) int32 in SMEM (scalar-indexed paths)
               users_ref, gender_ref, age_ref,
               o_ref,          # (tb, 3*D)
               *scratch):      # (row_buf, row_sem) iff any table streams
        base = pl.program_id(0) * tb

        def select_gather(col, table_ref, off):
            # Exact one-hot select chain on the VPU (no MXU, no HIGHEST).
            n = table_ref.shape[0]
            idx_col = idx_vmem_ref[:, col:col + 1]              # (tb, 1)
            acc = jnp.zeros((tb, D), dtype=table_ref.dtype)
            for k in range(n):                                  # static unroll
                row = table_ref[pl.ds(k, 1), :]                 # (1, D)
                acc = jnp.where(idx_col == k, row, acc)
            o_ref[:, off:off + D] = acc.astype(o_ref.dtype)

        def rowloop_gather(col, table_ref, off):
            # O(tb*D) gather from the VMEM-resident table: scalar index from
            # SMEM (clamped — VMEM has no bounds check), dynamic row read,
            # row store into this table's lane slice of the output.
            n = table_ref.shape[0]

            def body(r, carry):
                u = idx_smem_ref[col * b_pad + base + r]
                u = jnp.clip(u, 0, n - 1)
                o_ref[pl.ds(r, 1), off:off + D] = (
                    table_ref[pl.ds(u, 1), :].astype(o_ref.dtype))
                return carry

            lax.fori_loop(0, tb, body, 0)

        def stream_gather(col, hbm_ref, off, row_buf, row_sem):
            # Table lives in HBM: double-buffered per-row DMA gather.
            # TODO(synk): batch several rows per DMA descriptor for large D.
            n = hbm_ref.shape[0]

            def row_idx(r):
                return jnp.clip(idx_smem_ref[col * b_pad + base + r], 0, n - 1)

            def start(r, slot):
                pltpu.make_async_copy(hbm_ref.at[pl.ds(row_idx(r), 1), :],
                                      row_buf.at[slot],
                                      row_sem.at[slot]).start()

            start(0, 0)

            def body(r, carry):
                slot = r % 2
                pltpu.make_async_copy(hbm_ref.at[pl.ds(0, 1), :],
                                      row_buf.at[slot],
                                      row_sem.at[slot]).wait()

                @pl.when(r + 1 < tb)
                def _():
                    start(r + 1, 1 - slot)

                o_ref[pl.ds(r, 1), off:off + D] = (
                    row_buf[slot].astype(o_ref.dtype))
                return carry

            lax.fori_loop(0, tb, body, 0)

        tables = (users_ref, gender_ref, age_ref)
        for col, (mode, table_ref) in enumerate(zip(modes, tables)):
            off = col * D
            if mode == "select":
                select_gather(col, table_ref, off)
            elif mode == "rowloop":
                rowloop_gather(col, table_ref, off)
            else:  # "stream"
                row_buf, row_sem = scratch
                stream_gather(col, table_ref, off, row_buf, row_sem)

    return kernel


def user_forward(user_idx, gender_idx, age_idx,
                 emb_users, emb_gender, emb_age,
                 *, block_b=512):
    """Pallas equivalent of user.forward: three embedding gathers + concat."""
    B = int(user_idx.shape[0])
    n_users, D = emb_users.shape
    n_gender, n_age = emb_gender.shape[0], emb_age.shape[0]
    assert emb_gender.shape[1] == D and emb_age.shape[1] == D
    out_dtype = emb_users.dtype
    itemsize = jnp.dtype(out_dtype).itemsize

    # --- batch tiling: bigger tiles amortize per-step overhead --------------
    if B >= block_b:
        tb = block_b
    else:
        tb = max(8, 8 * pl.cdiv(B, 8))            # sublane-aligned tile
    b_pad = tb * pl.cdiv(B, tb)
    grid_steps = b_pad // tb

    def prep(idx):
        idx = jnp.asarray(idx, jnp.int32).reshape(-1)
        if b_pad != B:
            idx = jnp.pad(idx, (0, b_pad - B))    # padded rows are discarded
        return idx

    u_i, g_i, a_i = prep(user_idx), prep(gender_idx), prep(age_idx)
    idx_vmem = jnp.stack([u_i, g_i, a_i], axis=1)           # (b_pad, 3)
    idx_smem = jnp.concatenate([u_i, g_i, a_i], axis=0)     # (3*b_pad,)

    # --- generation-aware VMEM budget ----------------------------------------
    try:
        vmem_cap = int(pltpu.get_tpu_info().vmem_capacity_bytes)
    except Exception:                              # pragma: no cover
        vmem_cap = 64 << 20                        # conservative: v7x per-TC
    ceiling = min(int(vmem_cap * 0.85), vmem_cap - (8 << 20))

    def nbytes(t):
        return int(t.size) * jnp.dtype(t.dtype).itemsize

    users_bytes = nbytes(emb_users)
    small_bytes = nbytes(emb_gender) + nbytes(emb_age)
    # double-buffered per-step blocks (output + packed index) + Mosaic slack
    step_bytes = 2 * tb * 3 * D * itemsize + 2 * tb * 3 * 4 + (2 << 20)

    if small_bytes + step_bytes > ceiling:
        # TODO(synk): stream gender/age tables too if they ever outgrow VMEM.
        raise ValueError("gender/age embedding tables too large for VMEM")

    users_resident = users_bytes + small_bytes + step_bytes <= ceiling

    def pick_mode(n_rows, resident):
        if not resident:
            return "stream"
        return "select" if n_rows <= _SELECT_GATHER_MAX else "rowloop"

    modes = (pick_mode(n_users, users_resident),
             pick_mode(n_gender, True),
             pick_mode(n_age, True))

    vmem_needed = ((users_bytes if users_resident else 2 * D * itemsize)
                   + small_bytes + step_bytes)
    vmem_limit = int(vmem_needed) if vmem_needed > (16 << 20) else None

    scratch_shapes = []
    if "stream" in modes:
        scratch_shapes = [pltpu.VMEM((2, 1, D), out_dtype),
                          pltpu.SemaphoreType.DMA((2,))]

    kernel = _make_kernel(D=D, tb=tb, b_pad=b_pad, modes=modes)

    idx_vmem_spec = pl.BlockSpec((tb, 3), lambda i: (i, 0))
    idx_smem_spec = pl.BlockSpec(memory_space=pltpu.MemorySpace.SMEM)
    out_spec = pl.BlockSpec((tb, 3 * D), lambda i: (i, 0))
    # On v7x each TensorCore has its own VMEM and would DMA its own copy of
    # the resident tables, so only split the grid when it is big enough.
    dim_sem = ("parallel",) if grid_steps >= 4 else ("arbitrary",)

    def run(single_buffer_tables):
        def resident_spec(t):
            if single_buffer_tables:
                # Constant block index -> the block never changes; a single
                # buffer halves the resident tables' VMEM footprint.
                return pl.BlockSpec(t.shape, lambda i: (0, 0),
                                    pipeline_mode=pl.Buffered(1))
            return pl.BlockSpec(t.shape, lambda i: (0, 0))

        users_spec = (resident_spec(emb_users) if users_resident
                      else pl.BlockSpec(memory_space=pl.ANY))

        return pl.pallas_call(
            kernel,
            out_shape=jax.ShapeDtypeStruct((b_pad, 3 * D), out_dtype),
            grid=(grid_steps,),
            in_specs=[idx_vmem_spec, idx_smem_spec, users_spec,
                      resident_spec(emb_gender), resident_spec(emb_age)],
            out_specs=out_spec,
            scratch_shapes=scratch_shapes,
            compiler_params=pltpu.CompilerParams(
                dimension_semantics=dim_sem,
                vmem_limit_bytes=vmem_limit),
        )(idx_vmem, idx_smem, emb_users, emb_gender, emb_age)

    try:
        out = run(single_buffer_tables=True)
    except Exception:                               # pragma: no cover
        # Fallback for jax versions whose pallas_call pipeline rejects
        # pipeline_mode=Buffered(1): default double-buffered resident tables.
        out = run(single_buffer_tables=False)

    return out[:B]


if __name__ == "__main__":
    # Small config consistent with the module's __init__.
    num_users, num_gender, num_age, embedding_dim = 64, 2, 8, 32
    batch = 8

    key = jax.random.PRNGKey(0)
    k1, k2, k3, k4, k5, k6 = jax.random.split(key, 6)

    # Deterministic synthetic "nn.Embedding" weights (~N(0,1), torch default)
    emb_users  = jax.random.normal(k1, (num_users,  embedding_dim), dtype=jnp.float32)
    emb_gender = jax.random.normal(k2, (num_gender, embedding_dim), dtype=jnp.float32)
    emb_age    = jax.random.normal(k3, (num_age,    embedding_dim), dtype=jnp.float32)

    user_idx   = jax.random.randint(k4, (batch,), 0, num_users,  dtype=jnp.int32)
    gender_idx = jax.random.randint(k5, (batch,), 0, num_gender, dtype=jnp.int32)
    age_idx    = jax.random.randint(k6, (batch,), 0, num_age,    dtype=jnp.int32)

    out = user_forward(user_idx, gender_idx, age_idx,
                       emb_users, emb_gender, emb_age)
    out = jax.block_until_ready(out)

    # Pure-JAX reference (same semantics as the PyTorch module)
    ref = jnp.concatenate(
        [emb_users[user_idx], emb_gender[gender_idx], emb_age[age_idx]], axis=1)

    assert out.shape == (batch, 3 * embedding_dim), out.shape
    assert jnp.allclose(out, ref), "mismatch vs reference"
    print("KERNEL_OK")
</pallas_src>

<mosaic_0001>
module attributes {stable_mosaic.version = 11 : i64} {
  func.func @kernel(%arg0: i32, %arg1: memref<8x3xi32, #tpu.memory_space<vmem>>, %arg2: memref<24xi32, #tpu.memory_space<smem>>, %arg3: memref<64x32xf32, #tpu.memory_space<vmem>>, %arg4: memref<2x32xf32, #tpu.memory_space<vmem>>, %arg5: memref<8x32xf32, #tpu.memory_space<vmem>>, %arg6: memref<8x96xf32, #tpu.memory_space<vmem>>) attributes {dimension_semantics = [#tpu.dimension_semantics<arbitrary>], iteration_bounds = array<i64: 1>, scalar_prefetch = 0 : i64, scratch_operands = 0 : i64, tpu.core_type = #tpu.core_type<tc>, window_params = [{transform_indices = @transform_0, window_bounds = array<i64: 8, 3>}, {transform_indices = @transform_1, window_bounds = array<i64: 24>}, {pipeline_mode = #tpu.pipeline_mode<synchronous>, transform_indices = @transform_2, window_bounds = array<i64: 64, 32>}, {pipeline_mode = #tpu.pipeline_mode<synchronous>, transform_indices = @transform_3, window_bounds = array<i64: 2, 32>}, {pipeline_mode = #tpu.pipeline_mode<synchronous>, transform_indices = @transform_4, window_bounds = array<i64: 8, 32>}, {transform_indices = @transform_5, window_bounds = array<i64: 8, 96>}]} {
    %c0 = arith.constant 0 : index
    %c0_0 = arith.constant 0 : index
    %0 = vector.load %arg1[%c0, %c0_0] : memref<8x3xi32, #tpu.memory_space<vmem>>, vector<8x1xi32>
    %cst = arith.constant 0.000000e+00 : f32
    %1 = vector.broadcast %cst : f32 to vector<8x32xf32>
    %c0_1 = arith.constant 0 : index
    %c0_2 = arith.constant 0 : index
    %2 = vector.load %arg3[%c0_1, %c0_2] : memref<64x32xf32, #tpu.memory_space<vmem>>, vector<1x32xf32>
    %c0_i32 = arith.constant 0 : i32
    %3 = vector.broadcast %c0_i32 : i32 to vector<8x1xi32>
    %4 = arith.cmpi eq, %0, %3 : vector<8x1xi32>
    %5 = vector.shape_cast %4 : vector<8x1xi1> to vector<8x1xi1>
    %6 = vector.broadcast %5 : vector<8x1xi1> to vector<8x32xi1>
    %7 = vector.shape_cast %2 : vector<1x32xf32> to vector<1x32xf32>
    %8 = vector.broadcast %7 : vector<1x32xf32> to vector<8x32xf32>
    %9 = arith.select %6, %8, %1 : vector<8x32xi1>, vector<8x32xf32>
    %c1 = arith.constant 1 : index
    %c0_3 = arith.constant 0 : index
    %10 = vector.load %arg3[%c1, %c0_3] : memref<64x32xf32, #tpu.memory_space<vmem>>, vector<1x32xf32>
    %c1_i32 = arith.constant 1 : i32
    %11 = vector.broadcast %c1_i32 : i32 to vector<8x1xi32>
    %12 = arith.cmpi eq, %0, %11 : vector<8x1xi32>
    %13 = vector.shape_cast %12 : vector<8x1xi1> to vector<8x1xi1>
    %14 = vector.broadcast %13 : vector<8x1xi1> to vector<8x32xi1>
    %15 = vector.shape_cast %10 : vector<1x32xf32> to vector<1x32xf32>
    %16 = vector.broadcast %15 : vector<1x32xf32> to vector<8x32xf32>
    %17 = arith.select %14, %16, %9 : vector<8x32xi1>, vector<8x32xf32>
    %c2 = arith.constant 2 : index
    %c0_4 = arith.constant 0 : index
    %18 = vector.load %arg3[%c2, %c0_4] : memref<64x32xf32, #tpu.memory_space<vmem>>, vector<1x32xf32>
    %c2_i32 = arith.constant 2 : i32
    %19 = vector.broadcast %c2_i32 : i32 to vector<8x1xi32>
    %20 = arith.cmpi eq, %0, %19 : vector<8x1xi32>
    %21 = vector.shape_cast %20 : vector<8x1xi1> to vector<8x1xi1>
    %22 = vector.broadcast %21 : vector<8x1xi1> to vector<8x32xi1>
    %23 = vector.shape_cast %18 : vector<1x32xf32> to vector<1x32xf32>
    %24 = vector.broadcast %23 : vector<1x32xf32> to vector<8x32xf32>
    %25 = arith.select %22, %24, %17 : vector<8x32xi1>, vector<8x32xf32>
    %c3 = arith.constant 3 : index
    %c0_5 = arith.constant 0 : index
    %26 = vector.load %arg3[%c3, %c0_5] : memref<64x32xf32, #tpu.memory_space<vmem>>, vector<1x32xf32>
    %c3_i32 = arith.constant 3 : i32
    %27 = vector.broadcast %c3_i32 : i32 to vector<8x1xi32>
    %28 = arith.cmpi eq, %0, %27 : vector<8x1xi32>
    %29 = vector.shape_cast %28 : vector<8x1xi1> to vector<8x1xi1>
    %30 = vector.broadcast %29 : vector<8x1xi1> to vector<8x32xi1>
    %31 = vector.shape_cast %26 : vector<1x32xf32> to vector<1x32xf32>
    %32 = vector.broadcast %31 : vector<1x32xf32> to vector<8x32xf32>
    %33 = arith.select %30, %32, %25 : vector<8x32xi1>, vector<8x32xf32>
    %c4 = arith.constant 4 : index
    %c0_6 = arith.constant 0 : index
    %34 = vector.load %arg3[%c4, %c0_6] : memref<64x32xf32, #tpu.memory_space<vmem>>, vector<1x32xf32>
    %c4_i32 = arith.constant 4 : i32
    %35 = vector.broadcast %c4_i32 : i32 to vector<8x1xi32>
    %36 = arith.cmpi eq, %0, %35 : vector<8x1xi32>
    %37 = vector.shape_cast %36 : vector<8x1xi1> to vector<8x1xi1>
    %38 = vector.broadcast %37 : vector<8x1xi1> to vector<8x32xi1>
    %39 = vector.shape_cast %34 : vector<1x32xf32> to vector<1x32xf32>
    %40 = vector.broadcast %39 : vector<1x32xf32> to vector<8x32xf32>
    %41 = arith.select %38, %40, %33 : vector<8x32xi1>, vector<8x32xf32>
    %c5 = arith.constant 5 : index
    %c0_7 = arith.constant 0 : index
    %42 = vector.load %arg3[%c5, %c0_7] : memref<64x32xf32, #tpu.memory_space<vmem>>, vector<1x32xf32>
    %c5_i32 = arith.constant 5 : i32
    %43 = vector.broadcast %c5_i32 : i32 to vector<8x1xi32>
    %44 = arith.cmpi eq, %0, %43 : vector<8x1xi32>
    %45 = vector.shape_cast %44 : vector<8x1xi1> to vector<8x1xi1>
    %46 = vector.broadcast %45 : vector<8x1xi1> to vector<8x32xi1>
    %47 = vector.shape_cast %42 : vector<1x32xf32> to vector<1x32xf32>
    %48 = vector.broadcast %47 : vector<1x32xf32> to vector<8x32xf32>
    %49 = arith.select %46, %48, %41 : vector<8x32xi1>, vector<8x32xf32>
    %c6 = arith.constant 6 : index
    %c0_8 = arith.constant 0 : index
    %50 = vector.load %arg3[%c6, %c0_8] : memref<64x32xf32, #tpu.memory_space<vmem>>, vector<1x32xf32>
    %c6_i32 = arith.constant 6 : i32
    %51 = vector.broadcast %c6_i32 : i32 to vector<8x1xi32>
    %52 = arith.cmpi eq, %0, %51 : vector<8x1xi32>
    %53 = vector.shape_cast %52 : vector<8x1xi1> to vector<8x1xi1>
    %54 = vector.broadcast %53 : vector<8x1xi1> to vector<8x32xi1>
    %55 = vector.shape_cast %50 : vector<1x32xf32> to vector<1x32xf32>
    %56 = vector.broadcast %55 : vector<1x32xf32> to vector<8x32xf32>
    %57 = arith.select %54, %56, %49 : vector<8x32xi1>, vector<8x32xf32>
    %c7 = arith.constant 7 : index
    %c0_9 = arith.constant 0 : index
    %58 = vector.load %arg3[%c7, %c0_9] : memref<64x32xf32, #tpu.memory_space<vmem>>, vector<1x32xf32>
    %c7_i32 = arith.constant 7 : i32
    %59 = vector.broadcast %c7_i32 : i32 to vector<8x1xi32>
    %60 = arith.cmpi eq, %0, %59 : vector<8x1xi32>
    %61 = vector.shape_cast %60 : vector<8x1xi1> to vector<8x1xi1>
    %62 = vector.broadcast %61 : vector<8x1xi1> to vector<8x32xi1>
    %63 = vector.shape_cast %58 : vector<1x32xf32> to vector<1x32xf32>
    %64 = vector.broadcast %63 : vector<1x32xf32> to vector<8x32xf32>
    %65 = arith.select %62, %64, %57 : vector<8x32xi1>, vector<8x32xf32>
    %c8 = arith.constant 8 : index
    %c0_10 = arith.constant 0 : index
    %66 = vector.load %arg3[%c8, %c0_10] : memref<64x32xf32, #tpu.memory_space<vmem>>, vector<1x32xf32>
    %c8_i32 = arith.constant 8 : i32
    %67 = vector.broadcast %c8_i32 : i32 to vector<8x1xi32>
    %68 = arith.cmpi eq, %0, %67 : vector<8x1xi32>
    %69 = vector.shape_cast %68 : vector<8x1xi1> to vector<8x1xi1>
    %70 = vector.broadcast %69 : vector<8x1xi1> to vector<8x32xi1>
    %71 = vector.shape_cast %66 : vector<1x32xf32> to vector<1x32xf32>
    %72 = vector.broadcast %71 : vector<1x32xf32> to vector<8x32xf32>
    %73 = arith.select %70, %72, %65 : vector<8x32xi1>, vector<8x32xf32>
    %c9 = arith.constant 9 : index
    %c0_11 = arith.constant 0 : index
    %74 = vector.load %arg3[%c9, %c0_11] : memref<64x32xf32, #tpu.memory_space<vmem>>, vector<1x32xf32>
    %c9_i32 = arith.constant 9 : i32
    %75 = vector.broadcast %c9_i32 : i32 to vector<8x1xi32>
    %76 = arith.cmpi eq, %0, %75 : vector<8x1xi32>
    %77 = vector.shape_cast %76 : vector<8x1xi1> to vector<8x1xi1>
    %78 = vector.broadcast %77 : vector<8x1xi1> to vector<8x32xi1>
    %79 = vector.shape_cast %74 : vector<1x32xf32> to vector<1x32xf32>
    %80 = vector.broadcast %79 : vector<1x32xf32> to vector<8x32xf32>
    %81 = arith.select %78, %80, %73 : vector<8x32xi1>, vector<8x32xf32>
    %c10 = arith.constant 10 : index
    %c0_12 = arith.constant 0 : index
    %82 = vector.load %arg3[%c10, %c0_12] : memref<64x32xf32, #tpu.memory_space<vmem>>, vector<1x32xf32>
    %c10_i32 = arith.constant 10 : i32
    %83 = vector.broadcast %c10_i32 : i32 to vector<8x1xi32>
    %84 = arith.cmpi eq, %0, %83 : vector<8x1xi32>
    %85 = vector.shape_cast %84 : vector<8x1xi1> to vector<8x1xi1>
    %86 = vector.broadcast %85 : vector<8x1xi1> to vector<8x32xi1>
    %87 = vector.shape_cast %82 : vector<1x32xf32> to vector<1x32xf32>
    %88 = vector.broadcast %87 : vector<1x32xf32> to vector<8x32xf32>
    %89 = arith.select %86, %88, %81 : vector<8x32xi1>, vector<8x32xf32>
    %c11 = arith.constant 11 : index
    %c0_13 = arith.constant 0 : index
    %90 = vector.load %arg3[%c11, %c0_13] : memref<64x32xf32, #tpu.memory_space<vmem>>, vector<1x32xf32>
    %c11_i32 = arith.constant 11 : i32
    %91 = vector.broadcast %c11_i32 : i32 to vector<8x1xi32>
    %92 = arith.cmpi eq, %0, %91 : vector<8x1xi32>
    %93 = vector.shape_cast %92 : vector<8x1xi1> to vector<8x1xi1>
    %94 = vector.broadcast %93 : vector<8x1xi1> to vector<8x32xi1>
    %95 = vector.shape_cast %90 : vector<1x32xf32> to vector<1x32xf32>
    %96 = vector.broadcast %95 : vector<1x32xf32> to vector<8x32xf32>
    %97 = arith.select %94, %96, %89 : vector<8x32xi1>, vector<8x32xf32>
    %c12 = arith.constant 12 : index
    %c0_14 = arith.constant 0 : index
    %98 = vector.load %arg3[%c12, %c0_14] : memref<64x32xf32, #tpu.memory_space<vmem>>, vector<1x32xf32>
    %c12_i32 = arith.constant 12 : i32
    %99 = vector.broadcast %c12_i32 : i32 to vector<8x1xi32>
    %100 = arith.cmpi eq, %0, %99 : vector<8x1xi32>
    %101 = vector.shape_cast %100 : vector<8x1xi1> to vector<8x1xi1>
    %102 = vector.broadcast %101 : vector<8x1xi1> to vector<8x32xi1>
    %103 = vector.shape_cast %98 : vector<1x32xf32> to vector<1x32xf32>
    %104 = vector.broadcast %103 : vector<1x32xf32> to vector<8x32xf32>
    %105 = arith.select %102, %104, %97 : vector<8x32xi1>, vector<8x32xf32>
    %c13 = arith.constant 13 : index
    %c0_15 = arith.constant 0 : index
    %106 = vector.load %arg3[%c13, %c0_15] : memref<64x32xf32, #tpu.memory_space<vmem>>, vector<1x32xf32>
    %c13_i32 = arith.constant 13 : i32
    %107 = vector.broadcast %c13_i32 : i32 to vector<8x1xi32>
    %108 = arith.cmpi eq, %0, %107 : vector<8x1xi32>
    %109 = vector.shape_cast %108 : vector<8x1xi1> to vector<8x1xi1>
    %110 = vector.broadcast %109 : vector<8x1xi1> to vector<8x32xi1>
    %111 = vector.shape_cast %106 : vector<1x32xf32> to vector<1x32xf32>
    %112 = vector.broadcast %111 : vector<1x32xf32> to vector<8x32xf32>
    %113 = arith.select %110, %112, %105 : vector<8x32xi1>, vector<8x32xf32>
    %c14 = arith.constant 14 : index
    %c0_16 = arith.constant 0 : index
    %114 = vector.load %arg3[%c14, %c0_16] : memref<64x32xf32, #tpu.memory_space<vmem>>, vector<1x32xf32>
    %c14_i32 = arith.constant 14 : i32
    %115 = vector.broadcast %c14_i32 : i32 to vector<8x1xi32>
    %116 = arith.cmpi eq, %0, %115 : vector<8x1xi32>
    %117 = vector.shape_cast %116 : vector<8x1xi1> to vector<8x1xi1>
    %118 = vector.broadcast %117 : vector<8x1xi1> to vector<8x32xi1>
    %119 = vector.shape_cast %114 : vector<1x32xf32> to vector<1x32xf32>
    %120 = vector.broadcast %119 : vector<1x32xf32> to vector<8x32xf32>
    %121 = arith.select %118, %120, %113 : vector<8x32xi1>, vector<8x32xf32>
    %c15 = arith.constant 15 : index
    %c0_17 = arith.constant 0 : index
    %122 = vector.load %arg3[%c15, %c0_17] : memref<64x32xf32, #tpu.memory_space<vmem>>, vector<1x32xf32>
    %c15_i32 = arith.constant 15 : i32
    %123 = vector.broadcast %c15_i32 : i32 to vector<8x1xi32>
    %124 = arith.cmpi eq, %0, %123 : vector<8x1xi32>
    %125 = vector.shape_cast %124 : vector<8x1xi1> to vector<8x1xi1>
    %126 = vector.broadcast %125 : vector<8x1xi1> to vector<8x32xi1>
    %127 = vector.shape_cast %122 : vector<1x32xf32> to vector<1x32xf32>
    %128 = vector.broadcast %127 : vector<1x32xf32> to vector<8x32xf32>
    %129 = arith.select %126, %128, %121 : vector<8x32xi1>, vector<8x32xf32>
    %c16 = arith.constant 16 : index
    %c0_18 = arith.constant 0 : index
    %130 = vector.load %arg3[%c16, %c0_18] : memref<64x32xf32, #tpu.memory_space<vmem>>, vector<1x32xf32>
    %c16_i32 = arith.constant 16 : i32
    %131 = vector.broadcast %c16_i32 : i32 to vector<8x1xi32>
    %132 = arith.cmpi eq, %0, %131 : vector<8x1xi32>
    %133 = vector.shape_cast %132 : vector<8x1xi1> to vector<8x1xi1>
    %134 = vector.broadcast %133 : vector<8x1xi1> to vector<8x32xi1>
    %135 = vector.shape_cast %130 : vector<1x32xf32> to vector<1x32xf32>
    %136 = vector.broadcast %135 : vector<1x32xf32> to vector<8x32xf32>
    %137 = arith.select %134, %136, %129 : vector<8x32xi1>, vector<8x32xf32>
    %c17 = arith.constant 17 : index
    %c0_19 = arith.constant 0 : index
    %138 = vector.load %arg3[%c17, %c0_19] : memref<64x32xf32, #tpu.memory_space<vmem>>, vector<1x32xf32>
    %c17_i32 = arith.constant 17 : i32
    %139 = vector.broadcast %c17_i32 : i32 to vector<8x1xi32>
    %140 = arith.cmpi eq, %0, %139 : vector<8x1xi32>
    %141 = vector.shape_cast %140 : vector<8x1xi1> to vector<8x1xi1>
    %142 = vector.broadcast %141 : vector<8x1xi1> to vector<8x32xi1>
    %143 = vector.shape_cast %138 : vector<1x32xf32> to vector<1x32xf32>
    %144 = vector.broadcast %143 : vector<1x32xf32> to vector<8x32xf32>
    %145 = arith.select %142, %144, %137 : vector<8x32xi1>, vector<8x32xf32>
    %c18 = arith.constant 18 : index
    %c0_20 = arith.constant 0 : index
    %146 = vector.load %arg3[%c18, %c0_20] : memref<64x32xf32, #tpu.memory_space<vmem>>, vector<1x32xf32>
    %c18_i32 = arith.constant 18 : i32
    %147 = vector.broadcast %c18_i32 : i32 to vector<8x1xi32>
    %148 = arith.cmpi eq, %0, %147 : vector<8x1xi32>
    %149 = vector.shape_cast %148 : vector<8x1xi1> to vector<8x1xi1>
    %150 = vector.broadcast %149 : vector<8x1xi1> to vector<8x32xi1>
    %151 = vector.shape_cast %146 : vector<1x32xf32> to vector<1x32xf32>
    %152 = vector.broadcast %151 : vector<1x32xf32> to vector<8x32xf32>
    %153 = arith.select %150, %152, %145 : vector<8x32xi1>, vector<8x32xf32>
    %c19 = arith.constant 19 : index
    %c0_21 = arith.constant 0 : index
    %154 = vector.load %arg3[%c19, %c0_21] : memref<64x32xf32, #tpu.memory_space<vmem>>, vector<1x32xf32>
    %c19_i32 = arith.constant 19 : i32
    %155 = vector.broadcast %c19_i32 : i32 to vector<8x1xi32>
    %156 = arith.cmpi eq, %0, %155 : vector<8x1xi32>
    %157 = vector.shape_cast %156 : vector<8x1xi1> to vector<8x1xi1>
    %158 = vector.broadcast %157 : vector<8x1xi1> to vector<8x32xi1>
    %159 = vector.shape_cast %154 : vector<1x32xf32> to vector<1x32xf32>
    %160 = vector.broadcast %159 : vector<1x32xf32> to vector<8x32xf32>
    %161 = arith.select %158, %160, %153 : vector<8x32xi1>, vector<8x32xf32>
    %c20 = arith.constant 20 : index
    %c0_22 = arith.constant 0 : index
    %162 = vector.load %arg3[%c20, %c0_22] : memref<64x32xf32, #tpu.memory_space<vmem>>, vector<1x32xf32>
    %c20_i32 = arith.constant 20 : i32
    %163 = vector.broadcast %c20_i32 : i32 to vector<8x1xi32>
    %164 = arith.cmpi eq, %0, %163 : vector<8x1xi32>
    %165 = vector.shape_cast %164 : vector<8x1xi1> to vector<8x1xi1>
    %166 = vector.broadcast %165 : vector<8x1xi1> to vector<8x32xi1>
    %167 = vector.shape_cast %162 : vector<1x32xf32> to vector<1x32xf32>
    %168 = vector.broadcast %167 : vector<1x32xf32> to vector<8x32xf32>
    %169 = arith.select %166, %168, %161 : vector<8x32xi1>, vector<8x32xf32>
    %c21 = arith.constant 21 : index
    %c0_23 = arith.constant 0 : index
    %170 = vector.load %arg3[%c21, %c0_23] : memref<64x32xf32, #tpu.memory_space<vmem>>, vector<1x32xf32>
    %c21_i32 = arith.constant 21 : i32
    %171 = vector.broadcast %c21_i32 : i32 to vector<8x1xi32>
    %172 = arith.cmpi eq, %0, %171 : vector<8x1xi32>
    %173 = vector.shape_cast %172 : vector<8x1xi1> to vector<8x1xi1>
    %174 = vector.broadcast %173 : vector<8x1xi1> to vector<8x32xi1>
    %175 = vector.shape_cast %170 : vector<1x32xf32> to vector<1x32xf32>
    %176 = vector.broadcast %175 : vector<1x32xf32> to vector<8x32xf32>
    %177 = arith.select %174, %176, %169 : vector<8x32xi1>, vector<8x32xf32>
    %c22 = arith.constant 22 : index
    %c0_24 = arith.constant 0 : index
    %178 = vector.load %arg3[%c22, %c0_24] : memref<64x32xf32, #tpu.memory_space<vmem>>, vector<1x32xf32>
    %c22_i32 = arith.constant 22 : i32
    %179 = vector.broadcast %c22_i32 : i32 to vector<8x1xi32>
    %180 = arith.cmpi eq, %0, %179 : vector<8x1xi32>
    %181 = vector.shape_cast %180 : vector<8x1xi1> to vector<8x1xi1>
    %182 = vector.broadcast %181 : vector<8x1xi1> to vector<8x32xi1>
    %183 = vector.shape_cast %178 : vector<1x32xf32> to vector<1x32xf32>
    %184 = vector.broadcast %183 : vector<1x32xf32> to vector<8x32xf32>
    %185 = arith.select %182, %184, %177 : vector<8x32xi1>, vector<8x32xf32>
    %c23 = arith.constant 23 : index
    %c0_25 = arith.constant 0 : index
    %186 = vector.load %arg3[%c23, %c0_25] : memref<64x32xf32, #tpu.memory_space<vmem>>, vector<1x32xf32>
    %c23_i32 = arith.constant 23 : i32
    %187 = vector.broadcast %c23_i32 : i32 to vector<8x1xi32>
    %188 = arith.cmpi eq, %0, %187 : vector<8x1xi32>
    %189 = vector.shape_cast %188 : vector<8x1xi1> to vector<8x1xi1>
    %190 = vector.broadcast %189 : vector<8x1xi1> to vector<8x32xi1>
    %191 = vector.shape_cast %186 : vector<1x32xf32> to vector<1x32xf32>
    %192 = vector.broadcast %191 : vector<1x32xf32> to vector<8x32xf32>
    %193 = arith.select %190, %192, %185 : vector<8x32xi1>, vector<8x32xf32>
    %c24 = arith.constant 24 : index
    %c0_26 = arith.constant 0 : index
    %194 = vector.load %arg3[%c24, %c0_26] : memref<64x32xf32, #tpu.memory_space<vmem>>, vector<1x32xf32>
    %c24_i32 = arith.constant 24 : i32
    %195 = vector.broadcast %c24_i32 : i32 to vector<8x1xi32>
    %196 = arith.cmpi eq, %0, %195 : vector<8x1xi32>
    %197 = vector.shape_cast %196 : vector<8x1xi1> to vector<8x1xi1>
    %198 = vector.broadcast %197 : vector<8x1xi1> to vector<8x32xi1>
    %199 = vector.shape_cast %194 : vector<1x32xf32> to vector<1x32xf32>
    %200 = vector.broadcast %199 : vector<1x32xf32> to vector<8x32xf32>
    %201 = arith.select %198, %200, %193 : vector<8x32xi1>, vector<8x32xf32>
    %c25 = arith.constant 25 : index
    %c0_27 = arith.constant 0 : index
    %202 = vector.load %arg3[%c25, %c0_27] : memref<64x32xf32, #tpu.memory_space<vmem>>, vector<1x32xf32>
    %c25_i32 = arith.constant 25 : i32
    %203 = vector.broadcast %c25_i32 : i32 to vector<8x1xi32>
    %204 = arith.cmpi eq, %0, %203 : vector<8x1xi32>
    %205 = vector.shape_cast %204 : vector<8x1xi1> to vector<8x1xi1>
    %206 = vector.broadcast %205 : vector<8x1xi1> to vector<8x32xi1>
    %207 = vector.shape_cast %202 : vector<1x32xf32> to vector<1x32xf32>
    %208 = vector.broadcast %207 : vector<1x32xf32> to vector<8x32xf32>
    %209 = arith.select %206, %208, %201 : vector<8x32xi1>, vector<8x32xf32>
    %c26 = arith.constant 26 : index
    %c0_28 = arith.constant 0 : index
    %210 = vector.load %arg3[%c26, %c0_28] : memref<64x32xf32, #tpu.memory_space<vmem>>, vector<1x32xf32>
    %c26_i32 = arith.constant 26 : i32
    %211 = vector.broadcast %c26_i32 : i32 to vector<8x1xi32>
    %212 = arith.cmpi eq, %0, %211 : vector<8x1xi32>
    %213 = vector.shape_cast %212 : vector<8x1xi1> to vector<8x1xi1>
    %214 = vector.broadcast %213 : vector<8x1xi1> to vector<8x32xi1>
    %215 = vector.shape_cast %210 : vector<1x32xf32> to vector<1x32xf32>
    %216 = vector.broadcast %215 : vector<1x32xf32> to vector<8x32xf32>
    %217 = arith.select %214, %216, %209 : vector<8x32xi1>, vector<8x32xf32>
    %c27 = arith.constant 27 : index
    %c0_29 = arith.constant 0 : index
    %218 = vector.load %arg3[%c27, %c0_29] : memref<64x32xf32, #tpu.memory_space<vmem>>, vector<1x32xf32>
    %c27_i32 = arith.constant 27 : i32
    %219 = vector.broadcast %c27_i32 : i32 to vector<8x1xi32>
    %220 = arith.cmpi eq, %0, %219 : vector<8x1xi32>
    %221 = vector.shape_cast %220 : vector<8x1xi1> to vector<8x1xi1>
    %222 = vector.broadcast %221 : vector<8x1xi1> to vector<8x32xi1>
    %223 = vector.shape_cast %218 : vector<1x32xf32> to vector<1x32xf32>
    %224 = vector.broadcast %223 : vector<1x32xf32> to vector<8x32xf32>
    %225 = arith.select %222, %224, %217 : vector<8x32xi1>, vector<8x32xf32>
    %c28 = arith.constant 28 : index
    %c0_30 = arith.constant 0 : index
    %226 = vector.load %arg3[%c28, %c0_30] : memref<64x32xf32, #tpu.memory_space<vmem>>, vector<1x32xf32>
    %c28_i32 = arith.constant 28 : i32
    %227 = vector.broadcast %c28_i32 : i32 to vector<8x1xi32>
    %228 = arith.cmpi eq, %0, %227 : vector<8x1xi32>
    %229 = vector.shape_cast %228 : vector<8x1xi1> to vector<8x1xi1>
    %230 = vector.broadcast %229 : vector<8x1xi1> to vector<8x32xi1>
    %231 = vector.shape_cast %226 : vector<1x32xf32> to vector<1x32xf32>
    %232 = vector.broadcast %231 : vector<1x32xf32> to vector<8x32xf32>
    %233 = arith.select %230, %232, %225 : vector<8x32xi1>, vector<8x32xf32>
    %c29 = arith.constant 29 : index
    %c0_31 = arith.constant 0 : index
    %234 = vector.load %arg3[%c29, %c0_31] : memref<64x32xf32, #tpu.memory_space<vmem>>, vector<1x32xf32>
    %c29_i32 = arith.constant 29 : i32
    %235 = vector.broadcast %c29_i32 : i32 to vector<8x1xi32>
    %236 = arith.cmpi eq, %0, %235 : vector<8x1xi32>
    %237 = vector.shape_cast %236 : vector<8x1xi1> to vector<8x1xi1>
    %238 = vector.broadcast %237 : vector<8x1xi1> to vector<8x32xi1>
    %239 = vector.shape_cast %234 : vector<1x32xf32> to vector<1x32xf32>
    %240 = vector.broadcast %239 : vector<1x32xf32> to vector<8x32xf32>
    %241 = arith.select %238, %240, %233 : vector<8x32xi1>, vector<8x32xf32>
    %c30 = arith.constant 30 : index
    %c0_32 = arith.constant 0 : index
    %242 = vector.load %arg3[%c30, %c0_32] : memref<64x32xf32, #tpu.memory_space<vmem>>, vector<1x32xf32>
    %c30_i32 = arith.constant 30 : i32
    %243 = vector.broadcast %c30_i32 : i32 to vector<8x1xi32>
    %244 = arith.cmpi eq, %0, %243 : vector<8x1xi32>
    %245 = vector.shape_cast %244 : vector<8x1xi1> to vector<8x1xi1>
    %246 = vector.broadcast %245 : vector<8x1xi1> to vector<8x32xi1>
    %247 = vector.shape_cast %242 : vector<1x32xf32> to vector<1x32xf32>
    %248 = vector.broadcast %247 : vector<1x32xf32> to vector<8x32xf32>
    %249 = arith.select %246, %248, %241 : vector<8x32xi1>, vector<8x32xf32>
    %c31 = arith.constant 31 : index
    %c0_33 = arith.constant 0 : index
    %250 = vector.load %arg3[%c31, %c0_33] : memref<64x32xf32, #tpu.memory_space<vmem>>, vector<1x32xf32>
    %c31_i32 = arith.constant 31 : i32
    %251 = vector.broadcast %c31_i32 : i32 to vector<8x1xi32>
    %252 = arith.cmpi eq, %0, %251 : vector<8x1xi32>
    %253 = vector.shape_cast %252 : vector<8x1xi1> to vector<8x1xi1>
    %254 = vector.broadcast %253 : vector<8x1xi1> to vector<8x32xi1>
    %255 = vector.shape_cast %250 : vector<1x32xf32> to vector<1x32xf32>
    %256 = vector.broadcast %255 : vector<1x32xf32> to vector<8x32xf32>
    %257 = arith.select %254, %256, %249 : vector<8x32xi1>, vector<8x32xf32>
    %c32 = arith.constant 32 : index
    %c0_34 = arith.constant 0 : index
    %258 = vector.load %arg3[%c32, %c0_34] : memref<64x32xf32, #tpu.memory_space<vmem>>, vector<1x32xf32>
    %c32_i32 = arith.constant 32 : i32
    %259 = vector.broadcast %c32_i32 : i32 to vector<8x1xi32>
    %260 = arith.cmpi eq, %0, %259 : vector<8x1xi32>
    %261 = vector.shape_cast %260 : vector<8x1xi1> to vector<8x1xi1>
    %262 = vector.broadcast %261 : vector<8x1xi1> to vector<8x32xi1>
    %263 = vector.shape_cast %258 : vector<1x32xf32> to vector<1x32xf32>
    %264 = vector.broadcast %263 : vector<1x32xf32> to vector<8x32xf32>
    %265 = arith.select %262, %264, %257 : vector<8x32xi1>, vector<8x32xf32>
    %c33 = arith.constant 33 : index
    %c0_35 = arith.constant 0 : index
    %266 = vector.load %arg3[%c33, %c0_35] : memref<64x32xf32, #tpu.memory_space<vmem>>, vector<1x32xf32>
    %c33_i32 = arith.constant 33 : i32
    %267 = vector.broadcast %c33_i32 : i32 to vector<8x1xi32>
    %268 = arith.cmpi eq, %0, %267 : vector<8x1xi32>
    %269 = vector.shape_cast %268 : vector<8x1xi1> to vector<8x1xi1>
    %270 = vector.broadcast %269 : vector<8x1xi1> to vector<8x32xi1>
    %271 = vector.shape_cast %266 : vector<1x32xf32> to vector<1x32xf32>
    %272 = vector.broadcast %271 : vector<1x32xf32> to vector<8x32xf32>
    %273 = arith.select %270, %272, %265 : vector<8x32xi1>, vector<8x32xf32>
    %c34 = arith.constant 34 : index
    %c0_36 = arith.constant 0 : index
    %274 = vector.load %arg3[%c34, %c0_36] : memref<64x32xf32, #tpu.memory_space<vmem>>, vector<1x32xf32>
    %c34_i32 = arith.constant 34 : i32
    %275 = vector.broadcast %c34_i32 : i32 to vector<8x1xi32>
    %276 = arith.cmpi eq, %0, %275 : vector<8x1xi32>
    %277 = vector.shape_cast %276 : vector<8x1xi1> to vector<8x1xi1>
    %278 = vector.broadcast %277 : vector<8x1xi1> to vector<8x32xi1>
    %279 = vector.shape_cast %274 : vector<1x32xf32> to vector<1x32xf32>
    %280 = vector.broadcast %279 : vector<1x32xf32> to vector<8x32xf32>
    %281 = arith.select %278, %280, %273 : vector<8x32xi1>, vector<8x32xf32>
    %c35 = arith.constant 35 : index
    %c0_37 = arith.constant 0 : index
    %282 = vector.load %arg3[%c35, %c0_37] : memref<64x32xf32, #tpu.memory_space<vmem>>, vector<1x32xf32>
    %c35_i32 = arith.constant 35 : i32
    %283 = vector.broadcast %c35_i32 : i32 to vector<8x1xi32>
    %284 = arith.cmpi eq, %0, %283 : vector<8x1xi32>
    %285 = vector.shape_cast %284 : vector<8x1xi1> to vector<8x1xi1>
    %286 = vector.broadcast %285 : vector<8x1xi1> to vector<8x32xi1>
    %287 = vector.shape_cast %282 : vector<1x32xf32> to vector<1x32xf32>
    %288 = vector.broadcast %287 : vector<1x32xf32> to vector<8x32xf32>
    %289 = arith.select %286, %288, %281 : vector<8x32xi1>, vector<8x32xf32>
    %c36 = arith.constant 36 : index
    %c0_38 = arith.constant 0 : index
    %290 = vector.load %arg3[%c36, %c0_38] : memref<64x32xf32, #tpu.memory_space<vmem>>, vector<1x32xf32>
    %c36_i32 = arith.constant 36 : i32
    %291 = vector.broadcast %c36_i32 : i32 to vector<8x1xi32>
    %292 = arith.cmpi eq, %0, %291 : vector<8x1xi32>
    %293 = vector.shape_cast %292 : vector<8x1xi1> to vector<8x1xi1>
    %294 = vector.broadcast %293 : vector<8x1xi1> to vector<8x32xi1>
    %295 = vector.shape_cast %290 : vector<1x32xf32> to vector<1x32xf32>
    %296 = vector.broadcast %295 : vector<1x32xf32> to vector<8x32xf32>
    %297 = arith.select %294, %296, %289 : vector<8x32xi1>, vector<8x32xf32>
    %c37 = arith.constant 37 : index
    %c0_39 = arith.constant 0 : index
    %298 = vector.load %arg3[%c37, %c0_39] : memref<64x32xf32, #tpu.memory_space<vmem>>, vector<1x32xf32>
    %c37_i32 = arith.constant 37 : i32
    %299 = vector.broadcast %c37_i32 : i32 to vector<8x1xi32>
    %300 = arith.cmpi eq, %0, %299 : vector<8x1xi32>
    %301 = vector.shape_cast %300 : vector<8x1xi1> to vector<8x1xi1>
    %302 = vector.broadcast %301 : vector<8x1xi1> to vector<8x32xi1>
    %303 = vector.shape_cast %298 : vector<1x32xf32> to vector<1x32xf32>
    %304 = vector.broadcast %303 : vector<1x32xf32> to vector<8x32xf32>
    %305 = arith.select %302, %304, %297 : vector<8x32xi1>, vector<8x32xf32>
    %c38 = arith.constant 38 : index
    %c0_40 = arith.constant 0 : index
    %306 = vector.load %arg3[%c38, %c0_40] : memref<64x32xf32, #tpu.memory_space<vmem>>, vector<1x32xf32>
    %c38_i32 = arith.constant 38 : i32
    %307 = vector.broadcast %c38_i32 : i32 to vector<8x1xi32>
    %308 = arith.cmpi eq, %0, %307 : vector<8x1xi32>
    %309 = vector.shape_cast %308 : vector<8x1xi1> to vector<8x1xi1>
    %310 = vector.broadcast %309 : vector<8x1xi1> to vector<8x32xi1>
    %311 = vector.shape_cast %306 : vector<1x32xf32> to vector<1x32xf32>
    %312 = vector.broadcast %311 : vector<1x32xf32> to vector<8x32xf32>
    %313 = arith.select %310, %312, %305 : vector<8x32xi1>, vector<8x32xf32>
    %c39 = arith.constant 39 : index
    %c0_41 = arith.constant 0 : index
    %314 = vector.load %arg3[%c39, %c0_41] : memref<64x32xf32, #tpu.memory_space<vmem>>, vector<1x32xf32>
    %c39_i32 = arith.constant 39 : i32
    %315 = vector.broadcast %c39_i32 : i32 to vector<8x1xi32>
    %316 = arith.cmpi eq, %0, %315 : vector<8x1xi32>
    %317 = vector.shape_cast %316 : vector<8x1xi1> to vector<8x1xi1>
    %318 = vector.broadcast %317 : vector<8x1xi1> to vector<8x32xi1>
    %319 = vector.shape_cast %314 : vector<1x32xf32> to vector<1x32xf32>
    %320 = vector.broadcast %319 : vector<1x32xf32> to vector<8x32xf32>
    %321 = arith.select %318, %320, %313 : vector<8x32xi1>, vector<8x32xf32>
    %c40 = arith.constant 40 : index
    %c0_42 = arith.constant 0 : index
    %322 = vector.load %arg3[%c40, %c0_42] : memref<64x32xf32, #tpu.memory_space<vmem>>, vector<1x32xf32>
    %c40_i32 = arith.constant 40 : i32
    %323 = vector.broadcast %c40_i32 : i32 to vector<8x1xi32>
    %324 = arith.cmpi eq, %0, %323 : vector<8x1xi32>
    %325 = vector.shape_cast %324 : vector<8x1xi1> to vector<8x1xi1>
    %326 = vector.broadcast %325 : vector<8x1xi1> to vector<8x32xi1>
    %327 = vector.shape_cast %322 : vector<1x32xf32> to vector<1x32xf32>
    %328 = vector.broadcast %327 : vector<1x32xf32> to vector<8x32xf32>
    %329 = arith.select %326, %328, %321 : vector<8x32xi1>, vector<8x32xf32>
    %c41 = arith.constant 41 : index
    %c0_43 = arith.constant 0 : index
    %330 = vector.load %arg3[%c41, %c0_43] : memref<64x32xf32, #tpu.memory_space<vmem>>, vector<1x32xf32>
    %c41_i32 = arith.constant 41 : i32
    %331 = vector.broadcast %c41_i32 : i32 to vector<8x1xi32>
    %332 = arith.cmpi eq, %0, %331 : vector<8x1xi32>
    %333 = vector.shape_cast %332 : vector<8x1xi1> to vector<8x1xi1>
    %334 = vector.broadcast %333 : vector<8x1xi1> to vector<8x32xi1>
    %335 = vector.shape_cast %330 : vector<1x32xf32> to vector<1x32xf32>
    %336 = vector.broadcast %335 : vector<1x32xf32> to vector<8x32xf32>
    %337 = arith.select %334, %336, %329 : vector<8x32xi1>, vector<8x32xf32>
    %c42 = arith.constant 42 : index
    %c0_44 = arith.constant 0 : index
    %338 = vector.load %arg3[%c42, %c0_44] : memref<64x32xf32, #tpu.memory_space<vmem>>, vector<1x32xf32>
    %c42_i32 = arith.constant 42 : i32
    %339 = vector.broadcast %c42_i32 : i32 to vector<8x1xi32>
    %340 = arith.cmpi eq, %0, %339 : vector<8x1xi32>
    %341 = vector.shape_cast %340 : vector<8x1xi1> to vector<8x1xi1>
    %342 = vector.broadcast %341 : vector<8x1xi1> to vector<8x32xi1>
    %343 = vector.shape_cast %338 : vector<1x32xf32> to vector<1x32xf32>
    %344 = vector.broadcast %343 : vector<1x32xf32> to vector<8x32xf32>
    %345 = arith.select %342, %344, %337 : vector<8x32xi1>, vector<8x32xf32>
    %c43 = arith.constant 43 : index
    %c0_45 = arith.constant 0 : index
    %346 = vector.load %arg3[%c43, %c0_45] : memref<64x32xf32, #tpu.memory_space<vmem>>, vector<1x32xf32>
    %c43_i32 = arith.constant 43 : i32
    %347 = vector.broadcast %c43_i32 : i32 to vector<8x1xi32>
    %348 = arith.cmpi eq, %0, %347 : vector<8x1xi32>
    %349 = vector.shape_cast %348 : vector<8x1xi1> to vector<8x1xi1>
    %350 = vector.broadcast %349 : vector<8x1xi1> to vector<8x32xi1>
    %351 = vector.shape_cast %346 : vector<1x32xf32> to vector<1x32xf32>
    %352 = vector.broadcast %351 : vector<1x32xf32> to vector<8x32xf32>
    %353 = arith.select %350, %352, %345 : vector<8x32xi1>, vector<8x32xf32>
    %c44 = arith.constant 44 : index
    %c0_46 = arith.constant 0 : index
    %354 = vector.load %arg3[%c44, %c0_46] : memref<64x32xf32, #tpu.memory_space<vmem>>, vector<1x32xf32>
    %c44_i32 = arith.constant 44 : i32
    %355 = vector.broadcast %c44_i32 : i32 to vector<8x1xi32>
    %356 = arith.cmpi eq, %0, %355 : vector<8x1xi32>
    %357 = vector.shape_cast %356 : vector<8x1xi1> to vector<8x1xi1>
    %358 = vector.broadcast %357 : vector<8x1xi1> to vector<8x32xi1>
    %359 = vector.shape_cast %354 : vector<1x32xf32> to vector<1x32xf32>
    %360 = vector.broadcast %359 : vector<1x32xf32> to vector<8x32xf32>
    %361 = arith.select %358, %360, %353 : vector<8x32xi1>, vector<8x32xf32>
    %c45 = arith.constant 45 : index
    %c0_47 = arith.constant 0 : index
    %362 = vector.load %arg3[%c45, %c0_47] : memref<64x32xf32, #tpu.memory_space<vmem>>, vector<1x32xf32>
    %c45_i32 = arith.constant 45 : i32
    %363 = vector.broadcast %c45_i32 : i32 to vector<8x1xi32>
    %364 = arith.cmpi eq, %0, %363 : vector<8x1xi32>
    %365 = vector.shape_cast %364 : vector<8x1xi1> to vector<8x1xi1>
    %366 = vector.broadcast %365 : vector<8x1xi1> to vector<8x32xi1>
    %367 = vector.shape_cast %362 : vector<1x32xf32> to vector<1x32xf32>
    %368 = vector.broadcast %367 : vector<1x32xf32> to vector<8x32xf32>
    %369 = arith.select %366, %368, %361 : vector<8x32xi1>, vector<8x32xf32>
    %c46 = arith.constant 46 : index
    %c0_48 = arith.constant 0 : index
    %370 = vector.load %arg3[%c46, %c0_48] : memref<64x32xf32, #tpu.memory_space<vmem>>, vector<1x32xf32>
    %c46_i32 = arith.constant 46 : i32
    %371 = vector.broadcast %c46_i32 : i32 to vector<8x1xi32>
    %372 = arith.cmpi eq, %0, %371 : vector<8x1xi32>
    %373 = vector.shape_cast %372 : vector<8x1xi1> to vector<8x1xi1>
    %374 = vector.broadcast %373 : vector<8x1xi1> to vector<8x32xi1>
    %375 = vector.shape_cast %370 : vector<1x32xf32> to vector<1x32xf32>
    %376 = vector.broadcast %375 : vector<1x32xf32> to vector<8x32xf32>
    %377 = arith.select %374, %376, %369 : vector<8x32xi1>, vector<8x32xf32>
    %c47 = arith.constant 47 : index
    %c0_49 = arith.constant 0 : index
    %378 = vector.load %arg3[%c47, %c0_49] : memref<64x32xf32, #tpu.memory_space<vmem>>, vector<1x32xf32>
    %c47_i32 = arith.constant 47 : i32
    %379 = vector.broadcast %c47_i32 : i32 to vector<8x1xi32>
    %380 = arith.cmpi eq, %0, %379 : vector<8x1xi32>
    %381 = vector.shape_cast %380 : vector<8x1xi1> to vector<8x1xi1>
    %382 = vector.broadcast %381 : vector<8x1xi1> to vector<8x32xi1>
    %383 = vector.shape_cast %378 : vector<1x32xf32> to vector<1x32xf32>
    %384 = vector.broadcast %383 : vector<1x32xf32> to vector<8x32xf32>
    %385 = arith.select %382, %384, %377 : vector<8x32xi1>, vector<8x32xf32>
    %c48 = arith.constant 48 : index
    %c0_50 = arith.constant 0 : index
    %386 = vector.load %arg3[%c48, %c0_50] : memref<64x32xf32, #tpu.memory_space<vmem>>, vector<1x32xf32>
    %c48_i32 = arith.constant 48 : i32
    %387 = vector.broadcast %c48_i32 : i32 to vector<8x1xi32>
    %388 = arith.cmpi eq, %0, %387 : vector<8x1xi32>
    %389 = vector.shape_cast %388 : vector<8x1xi1> to vector<8x1xi1>
    %390 = vector.broadcast %389 : vector<8x1xi1> to vector<8x32xi1>
    %391 = vector.shape_cast %386 : vector<1x32xf32> to vector<1x32xf32>
    %392 = vector.broadcast %391 : vector<1x32xf32> to vector<8x32xf32>
    %393 = arith.select %390, %392, %385 : vector<8x32xi1>, vector<8x32xf32>
    %c49 = arith.constant 49 : index
    %c0_51 = arith.constant 0 : index
    %394 = vector.load %arg3[%c49, %c0_51] : memref<64x32xf32, #tpu.memory_space<vmem>>, vector<1x32xf32>
    %c49_i32 = arith.constant 49 : i32
    %395 = vector.broadcast %c49_i32 : i32 to vector<8x1xi32>
    %396 = arith.cmpi eq, %0, %395 : vector<8x1xi32>
    %397 = vector.shape_cast %396 : vector<8x1xi1> to vector<8x1xi1>
    %398 = vector.broadcast %397 : vector<8x1xi1> to vector<8x32xi1>
    %399 = vector.shape_cast %394 : vector<1x32xf32> to vector<1x32xf32>
    %400 = vector.broadcast %399 : vector<1x32xf32> to vector<8x32xf32>
    %401 = arith.select %398, %400, %393 : vector<8x32xi1>, vector<8x32xf32>
    %c50 = arith.constant 50 : index
    %c0_52 = arith.constant 0 : index
    %402 = vector.load %arg3[%c50, %c0_52] : memref<64x32xf32, #tpu.memory_space<vmem>>, vector<1x32xf32>
    %c50_i32 = arith.constant 50 : i32
    %403 = vector.broadcast %c50_i32 : i32 to vector<8x1xi32>
    %404 = arith.cmpi eq, %0, %403 : vector<8x1xi32>
    %405 = vector.shape_cast %404 : vector<8x1xi1> to vector<8x1xi1>
    %406 = vector.broadcast %405 : vector<8x1xi1> to vector<8x32xi1>
    %407 = vector.shape_cast %402 : vector<1x32xf32> to vector<1x32xf32>
    %408 = vector.broadcast %407 : vector<1x32xf32> to vector<8x32xf32>
    %409 = arith.select %406, %408, %401 : vector<8x32xi1>, vector<8x32xf32>
    %c51 = arith.constant 51 : index
    %c0_53 = arith.constant 0 : index
    %410 = vector.load %arg3[%c51, %c0_53] : memref<64x32xf32, #tpu.memory_space<vmem>>, vector<1x32xf32>
    %c51_i32 = arith.constant 51 : i32
    %411 = vector.broadcast %c51_i32 : i32 to vector<8x1xi32>
    %412 = arith.cmpi eq, %0, %411 : vector<8x1xi32>
    %413 = vector.shape_cast %412 : vector<8x1xi1> to vector<8x1xi1>
    %414 = vector.broadcast %413 : vector<8x1xi1> to vector<8x32xi1>
    %415 = vector.shape_cast %410 : vector<1x32xf32> to vector<1x32xf32>
    %416 = vector.broadcast %415 : vector<1x32xf32> to vector<8x32xf32>
    %417 = arith.select %414, %416, %409 : vector<8x32xi1>, vector<8x32xf32>
    %c52 = arith.constant 52 : index
    %c0_54 = arith.constant 0 : index
    %418 = vector.load %arg3[%c52, %c0_54] : memref<64x32xf32, #tpu.memory_space<vmem>>, vector<1x32xf32>
    %c52_i32 = arith.constant 52 : i32
    %419 = vector.broadcast %c52_i32 : i32 to vector<8x1xi32>
    %420 = arith.cmpi eq, %0, %419 : vector<8x1xi32>
    %421 = vector.shape_cast %420 : vector<8x1xi1> to vector<8x1xi1>
    %422 = vector.broadcast %421 : vector<8x1xi1> to vector<8x32xi1>
    %423 = vector.shape_cast %418 : vector<1x32xf32> to vector<1x32xf32>
    %424 = vector.broadcast %423 : vector<1x32xf32> to vector<8x32xf32>
    %425 = arith.select %422, %424, %417 : vector<8x32xi1>, vector<8x32xf32>
    %c53 = arith.constant 53 : index
    %c0_55 = arith.constant 0 : index
    %426 = vector.load %arg3[%c53, %c0_55] : memref<64x32xf32, #tpu.memory_space<vmem>>, vector<1x32xf32>
    %c53_i32 = arith.constant 53 : i32
    %427 = vector.broadcast %c53_i32 : i32 to vector<8x1xi32>
    %428 = arith.cmpi eq, %0, %427 : vector<8x1xi32>
    %429 = vector.shape_cast %428 : vector<8x1xi1> to vector<8x1xi1>
    %430 = vector.broadcast %429 : vector<8x1xi1> to vector<8x32xi1>
    %431 = vector.shape_cast %426 : vector<1x32xf32> to vector<1x32xf32>
    %432 = vector.broadcast %431 : vector<1x32xf32> to vector<8x32xf32>
    %433 = arith.select %430, %432, %425 : vector<8x32xi1>, vector<8x32xf32>
    %c54 = arith.constant 54 : index
    %c0_56 = arith.constant 0 : index
    %434 = vector.load %arg3[%c54, %c0_56] : memref<64x32xf32, #tpu.memory_space<vmem>>, vector<1x32xf32>
    %c54_i32 = arith.constant 54 : i32
    %435 = vector.broadcast %c54_i32 : i32 to vector<8x1xi32>
    %436 = arith.cmpi eq, %0, %435 : vector<8x1xi32>
    %437 = vector.shape_cast %436 : vector<8x1xi1> to vector<8x1xi1>
    %438 = vector.broadcast %437 : vector<8x1xi1> to vector<8x32xi1>
    %439 = vector.shape_cast %434 : vector<1x32xf32> to vector<1x32xf32>
    %440 = vector.broadcast %439 : vector<1x32xf32> to vector<8x32xf32>
    %441 = arith.select %438, %440, %433 : vector<8x32xi1>, vector<8x32xf32>
    %c55 = arith.constant 55 : index
    %c0_57 = arith.constant 0 : index
    %442 = vector.load %arg3[%c55, %c0_57] : memref<64x32xf32, #tpu.memory_space<vmem>>, vector<1x32xf32>
    %c55_i32 = arith.constant 55 : i32
    %443 = vector.broadcast %c55_i32 : i32 to vector<8x1xi32>
    %444 = arith.cmpi eq, %0, %443 : vector<8x1xi32>
    %445 = vector.shape_cast %444 : vector<8x1xi1> to vector<8x1xi1>
    %446 = vector.broadcast %445 : vector<8x1xi1> to vector<8x32xi1>
    %447 = vector.shape_cast %442 : vector<1x32xf32> to vector<1x32xf32>
    %448 = vector.broadcast %447 : vector<1x32xf32> to vector<8x32xf32>
    %449 = arith.select %446, %448, %441 : vector<8x32xi1>, vector<8x32xf32>
    %c56 = arith.constant 56 : index
    %c0_58 = arith.constant 0 : index
    %450 = vector.load %arg3[%c56, %c0_58] : memref<64x32xf32, #tpu.memory_space<vmem>>, vector<1x32xf32>
    %c56_i32 = arith.constant 56 : i32
    %451 = vector.broadcast %c56_i32 : i32 to vector<8x1xi32>
    %452 = arith.cmpi eq, %0, %451 : vector<8x1xi32>
    %453 = vector.shape_cast %452 : vector<8x1xi1> to vector<8x1xi1>
    %454 = vector.broadcast %453 : vector<8x1xi1> to vector<8x32xi1>
    %455 = vector.shape_cast %450 : vector<1x32xf32> to vector<1x32xf32>
    %456 = vector.broadcast %455 : vector<1x32xf32> to vector<8x32xf32>
    %457 = arith.select %454, %456, %449 : vector<8x32xi1>, vector<8x32xf32>
    %c57 = arith.constant 57 : index
    %c0_59 = arith.constant 0 : index
    %458 = vector.load %arg3[%c57, %c0_59] : memref<64x32xf32, #tpu.memory_space<vmem>>, vector<1x32xf32>
    %c57_i32 = arith.constant 57 : i32
    %459 = vector.broadcast %c57_i32 : i32 to vector<8x1xi32>
    %460 = arith.cmpi eq, %0, %459 : vector<8x1xi32>
    %461 = vector.shape_cast %460 : vector<8x1xi1> to vector<8x1xi1>
    %462 = vector.broadcast %461 : vector<8x1xi1> to vector<8x32xi1>
    %463 = vector.shape_cast %458 : vector<1x32xf32> to vector<1x32xf32>
    %464 = vector.broadcast %463 : vector<1x32xf32> to vector<8x32xf32>
    %465 = arith.select %462, %464, %457 : vector<8x32xi1>, vector<8x32xf32>
    %c58 = arith.constant 58 : index
    %c0_60 = arith.constant 0 : index
    %466 = vector.load %arg3[%c58, %c0_60] : memref<64x32xf32, #tpu.memory_space<vmem>>, vector<1x32xf32>
    %c58_i32 = arith.constant 58 : i32
    %467 = vector.broadcast %c58_i32 : i32 to vector<8x1xi32>
    %468 = arith.cmpi eq, %0, %467 : vector<8x1xi32>
    %469 = vector.shape_cast %468 : vector<8x1xi1> to vector<8x1xi1>
    %470 = vector.broadcast %469 : vector<8x1xi1> to vector<8x32xi1>
    %471 = vector.shape_cast %466 : vector<1x32xf32> to vector<1x32xf32>
    %472 = vector.broadcast %471 : vector<1x32xf32> to vector<8x32xf32>
    %473 = arith.select %470, %472, %465 : vector<8x32xi1>, vector<8x32xf32>
    %c59 = arith.constant 59 : index
    %c0_61 = arith.constant 0 : index
    %474 = vector.load %arg3[%c59, %c0_61] : memref<64x32xf32, #tpu.memory_space<vmem>>, vector<1x32xf32>
    %c59_i32 = arith.constant 59 : i32
    %475 = vector.broadcast %c59_i32 : i32 to vector<8x1xi32>
    %476 = arith.cmpi eq, %0, %475 : vector<8x1xi32>
    %477 = vector.shape_cast %476 : vector<8x1xi1> to vector<8x1xi1>
    %478 = vector.broadcast %477 : vector<8x1xi1> to vector<8x32xi1>
    %479 = vector.shape_cast %474 : vector<1x32xf32> to vector<1x32xf32>
    %480 = vector.broadcast %479 : vector<1x32xf32> to vector<8x32xf32>
    %481 = arith.select %478, %480, %473 : vector<8x32xi1>, vector<8x32xf32>
    %c60 = arith.constant 60 : index
    %c0_62 = arith.constant 0 : index
    %482 = vector.load %arg3[%c60, %c0_62] : memref<64x32xf32, #tpu.memory_space<vmem>>, vector<1x32xf32>
    %c60_i32 = arith.constant 60 : i32
    %483 = vector.broadcast %c60_i32 : i32 to vector<8x1xi32>
    %484 = arith.cmpi eq, %0, %483 : vector<8x1xi32>
    %485 = vector.shape_cast %484 : vector<8x1xi1> to vector<8x1xi1>
    %486 = vector.broadcast %485 : vector<8x1xi1> to vector<8x32xi1>
    %487 = vector.shape_cast %482 : vector<1x32xf32> to vector<1x32xf32>
    %488 = vector.broadcast %487 : vector<1x32xf32> to vector<8x32xf32>
    %489 = arith.select %486, %488, %481 : vector<8x32xi1>, vector<8x32xf32>
    %c61 = arith.constant 61 : index
    %c0_63 = arith.constant 0 : index
    %490 = vector.load %arg3[%c61, %c0_63] : memref<64x32xf32, #tpu.memory_space<vmem>>, vector<1x32xf32>
    %c61_i32 = arith.constant 61 : i32
    %491 = vector.broadcast %c61_i32 : i32 to vector<8x1xi32>
    %492 = arith.cmpi eq, %0, %491 : vector<8x1xi32>
    %493 = vector.shape_cast %492 : vector<8x1xi1> to vector<8x1xi1>
    %494 = vector.broadcast %493 : vector<8x1xi1> to vector<8x32xi1>
    %495 = vector.shape_cast %490 : vector<1x32xf32> to vector<1x32xf32>
    %496 = vector.broadcast %495 : vector<1x32xf32> to vector<8x32xf32>
    %497 = arith.select %494, %496, %489 : vector<8x32xi1>, vector<8x32xf32>
    %c62 = arith.constant 62 : index
    %c0_64 = arith.constant 0 : index
    %498 = vector.load %arg3[%c62, %c0_64] : memref<64x32xf32, #tpu.memory_space<vmem>>, vector<1x32xf32>
    %c62_i32 = arith.constant 62 : i32
    %499 = vector.broadcast %c62_i32 : i32 to vector<8x1xi32>
    %500 = arith.cmpi eq, %0, %499 : vector<8x1xi32>
    %501 = vector.shape_cast %500 : vector<8x1xi1> to vector<8x1xi1>
    %502 = vector.broadcast %501 : vector<8x1xi1> to vector<8x32xi1>
    %503 = vector.shape_cast %498 : vector<1x32xf32> to vector<1x32xf32>
    %504 = vector.broadcast %503 : vector<1x32xf32> to vector<8x32xf32>
    %505 = arith.select %502, %504, %497 : vector<8x32xi1>, vector<8x32xf32>
    %c63 = arith.constant 63 : index
    %c0_65 = arith.constant 0 : index
    %506 = vector.load %arg3[%c63, %c0_65] : memref<64x32xf32, #tpu.memory_space<vmem>>, vector<1x32xf32>
    %c63_i32 = arith.constant 63 : i32
    %507 = vector.broadcast %c63_i32 : i32 to vector<8x1xi32>
    %508 = arith.cmpi eq, %0, %507 : vector<8x1xi32>
    %509 = vector.shape_cast %508 : vector<8x1xi1> to vector<8x1xi1>
    %510 = vector.broadcast %509 : vector<8x1xi1> to vector<8x32xi1>
    %511 = vector.shape_cast %506 : vector<1x32xf32> to vector<1x32xf32>
    %512 = vector.broadcast %511 : vector<1x32xf32> to vector<8x32xf32>
    %513 = arith.select %510, %512, %505 : vector<8x32xi1>, vector<8x32xf32>
    %c0_66 = arith.constant 0 : index
    %c0_67 = arith.constant 0 : index
    %514 = vector.load %arg6[%c0_66, %c0_67] : memref<8x96xf32, #tpu.memory_space<vmem>>, vector<8x32xf32>
    tpu.vector_store %arg6[%c0_66, %c0_67], %513 {strides = array<i32>} : memref<8x96xf32, #tpu.memory_space<vmem>>, vector<8x32xf32>,
    %c0_68 = arith.constant 0 : index
    %c1_69 = arith.constant 1 : index
    %515 = vector.load %arg1[%c0_68, %c1_69] : memref<8x3xi32, #tpu.memory_space<vmem>>, vector<8x1xi32>
    %cst_70 = arith.constant 0.000000e+00 : f32
    %516 = vector.broadcast %cst_70 : f32 to vector<8x32xf32>
    %c0_71 = arith.constant 0 : index
    %c0_72 = arith.constant 0 : index
    %517 = vector.load %arg4[%c0_71, %c0_72] : memref<2x32xf32, #tpu.memory_space<vmem>>, vector<1x32xf32>
    %c0_i32_73 = arith.constant 0 : i32
    %518 = vector.broadcast %c0_i32_73 : i32 to vector<8x1xi32>
    %519 = arith.cmpi eq, %515, %518 : vector<8x1xi32>
    %520 = vector.shape_cast %519 : vector<8x1xi1> to vector<8x1xi1>
    %521 = vector.broadcast %520 : vector<8x1xi1> to vector<8x32xi1>
    %522 = vector.shape_cast %517 : vector<1x32xf32> to vector<1x32xf32>
    %523 = vector.broadcast %522 : vector<1x32xf32> to vector<8x32xf32>
    %524 = arith.select %521, %523, %516 : vector<8x32xi1>, vector<8x32xf32>
    %c1_74 = arith.constant 1 : index
    %c0_75 = arith.constant 0 : index
    %525 = vector.load %arg4[%c1_74, %c0_75] : memref<2x32xf32, #tpu.memory_space<vmem>>, vector<1x32xf32>
    %c1_i32_76 = arith.constant 1 : i32
    %526 = vector.broadcast %c1_i32_76 : i32 to vector<8x1xi32>
    %527 = arith.cmpi eq, %515, %526 : vector<8x1xi32>
    %528 = vector.shape_cast %527 : vector<8x1xi1> to vector<8x1xi1>
    %529 = vector.broadcast %528 : vector<8x1xi1> to vector<8x32xi1>
    %530 = vector.shape_cast %525 : vector<1x32xf32> to vector<1x32xf32>
    %531 = vector.broadcast %530 : vector<1x32xf32> to vector<8x32xf32>
    %532 = arith.select %529, %531, %524 : vector<8x32xi1>, vector<8x32xf32>
    %c0_77 = arith.constant 0 : index
    %c32_78 = arith.constant 32 : index
    %533 = vector.load %arg6[%c0_77, %c32_78] : memref<8x96xf32, #tpu.memory_space<vmem>>, vector<8x32xf32>
    tpu.vector_store %arg6[%c0_77, %c32_78], %532 {strides = array<i32>} : memref<8x96xf32, #tpu.memory_space<vmem>>, vector<8x32xf32>,
    %c0_79 = arith.constant 0 : index
    %c2_80 = arith.constant 2 : index
    %534 = vector.load %arg1[%c0_79, %c2_80] : memref<8x3xi32, #tpu.memory_space<vmem>>, vector<8x1xi32>
    %cst_81 = arith.constant 0.000000e+00 : f32
    %535 = vector.broadcast %cst_81 : f32 to vector<8x32xf32>
    %c0_82 = arith.constant 0 : index
    %c0_83 = arith.constant 0 : index
    %536 = vector.load %arg5[%c0_82, %c0_83] : memref<8x32xf32, #tpu.memory_space<vmem>>, vector<1x32xf32>
    %c0_i32_84 = arith.constant 0 : i32
    %537 = vector.broadcast %c0_i32_84 : i32 to vector<8x1xi32>
    %538 = arith.cmpi eq, %534, %537 : vector<8x1xi32>
    %539 = vector.shape_cast %538 : vector<8x1xi1> to vector<8x1xi1>
    %540 = vector.broadcast %539 : vector<8x1xi1> to vector<8x32xi1>
    %541 = vector.shape_cast %536 : vector<1x32xf32> to vector<1x32xf32>
    %542 = vector.broadcast %541 : vector<1x32xf32> to vector<8x32xf32>
    %543 = arith.select %540, %542, %535 : vector<8x32xi1>, vector<8x32xf32>
    %c1_85 = arith.constant 1 : index
    %c0_86 = arith.constant 0 : index
    %544 = vector.load %arg5[%c1_85, %c0_86] : memref<8x32xf32, #tpu.memory_space<vmem>>, vector<1x32xf32>
    %c1_i32_87 = arith.constant 1 : i32
    %545 = vector.broadcast %c1_i32_87 : i32 to vector<8x1xi32>
    %546 = arith.cmpi eq, %534, %545 : vector<8x1xi32>
    %547 = vector.shape_cast %546 : vector<8x1xi1> to vector<8x1xi1>
    %548 = vector.broadcast %547 : vector<8x1xi1> to vector<8x32xi1>
    %549 = vector.shape_cast %544 : vector<1x32xf32> to vector<1x32xf32>
    %550 = vector.broadcast %549 : vector<1x32xf32> to vector<8x32xf32>
    %551 = arith.select %548, %550, %543 : vector<8x32xi1>, vector<8x32xf32>
    %c2_88 = arith.constant 2 : index
    %c0_89 = arith.constant 0 : index
    %552 = vector.load %arg5[%c2_88, %c0_89] : memref<8x32xf32, #tpu.memory_space<vmem>>, vector<1x32xf32>
    %c2_i32_90 = arith.constant 2 : i32
    %553 = vector.broadcast %c2_i32_90 : i32 to vector<8x1xi32>
    %554 = arith.cmpi eq, %534, %553 : vector<8x1xi32>
    %555 = vector.shape_cast %554 : vector<8x1xi1> to vector<8x1xi1>
    %556 = vector.broadcast %555 : vector<8x1xi1> to vector<8x32xi1>
    %557 = vector.shape_cast %552 : vector<1x32xf32> to vector<1x32xf32>
    %558 = vector.broadcast %557 : vector<1x32xf32> to vector<8x32xf32>
    %559 = arith.select %556, %558, %551 : vector<8x32xi1>, vector<8x32xf32>
    %c3_91 = arith.constant 3 : index
    %c0_92 = arith.constant 0 : index
    %560 = vector.load %arg5[%c3_91, %c0_92] : memref<8x32xf32, #tpu.memory_space<vmem>>, vector<1x32xf32>
    %c3_i32_93 = arith.constant 3 : i32
    %561 = vector.broadcast %c3_i32_93 : i32 to vector<8x1xi32>
    %562 = arith.cmpi eq, %534, %561 : vector<8x1xi32>
    %563 = vector.shape_cast %562 : vector<8x1xi1> to vector<8x1xi1>
    %564 = vector.broadcast %563 : vector<8x1xi1> to vector<8x32xi1>
    %565 = vector.shape_cast %560 : vector<1x32xf32> to vector<1x32xf32>
    %566 = vector.broadcast %565 : vector<1x32xf32> to vector<8x32xf32>
    %567 = arith.select %564, %566, %559 : vector<8x32xi1>, vector<8x32xf32>
    %c4_94 = arith.constant 4 : index
    %c0_95 = arith.constant 0 : index
    %568 = vector.load %arg5[%c4_94, %c0_95] : memref<8x32xf32, #tpu.memory_space<vmem>>, vector<1x32xf32>
    %c4_i32_96 = arith.constant 4 : i32
    %569 = vector.broadcast %c4_i32_96 : i32 to vector<8x1xi32>
    %570 = arith.cmpi eq, %534, %569 : vector<8x1xi32>
    %571 = vector.shape_cast %570 : vector<8x1xi1> to vector<8x1xi1>
    %572 = vector.broadcast %571 : vector<8x1xi1> to vector<8x32xi1>
    %573 = vector.shape_cast %568 : vector<1x32xf32> to vector<1x32xf32>
    %574 = vector.broadcast %573 : vector<1x32xf32> to vector<8x32xf32>
    %575 = arith.select %572, %574, %567 : vector<8x32xi1>, vector<8x32xf32>
    %c5_97 = arith.constant 5 : index
    %c0_98 = arith.constant 0 : index
    %576 = vector.load %arg5[%c5_97, %c0_98] : memref<8x32xf32, #tpu.memory_space<vmem>>, vector<1x32xf32>
    %c5_i32_99 = arith.constant 5 : i32
    %577 = vector.broadcast %c5_i32_99 : i32 to vector<8x1xi32>
    %578 = arith.cmpi eq, %534, %577 : vector<8x1xi32>
    %579 = vector.shape_cast %578 : vector<8x1xi1> to vector<8x1xi1>
    %580 = vector.broadcast %579 : vector<8x1xi1> to vector<8x32xi1>
    %581 = vector.shape_cast %576 : vector<1x32xf32> to vector<1x32xf32>
    %582 = vector.broadcast %581 : vector<1x32xf32> to vector<8x32xf32>
    %583 = arith.select %580, %582, %575 : vector<8x32xi1>, vector<8x32xf32>
    %c6_100 = arith.constant 6 : index
    %c0_101 = arith.constant 0 : index
    %584 = vector.load %arg5[%c6_100, %c0_101] : memref<8x32xf32, #tpu.memory_space<vmem>>, vector<1x32xf32>
    %c6_i32_102 = arith.constant 6 : i32
    %585 = vector.broadcast %c6_i32_102 : i32 to vector<8x1xi32>
    %586 = arith.cmpi eq, %534, %585 : vector<8x1xi32>
    %587 = vector.shape_cast %586 : vector<8x1xi1> to vector<8x1xi1>
    %588 = vector.broadcast %587 : vector<8x1xi1> to vector<8x32xi1>
    %589 = vector.shape_cast %584 : vector<1x32xf32> to vector<1x32xf32>
    %590 = vector.broadcast %589 : vector<1x32xf32> to vector<8x32xf32>
    %591 = arith.select %588, %590, %583 : vector<8x32xi1>, vector<8x32xf32>
    %c7_103 = arith.constant 7 : index
    %c0_104 = arith.constant 0 : index
    %592 = vector.load %arg5[%c7_103, %c0_104] : memref<8x32xf32, #tpu.memory_space<vmem>>, vector<1x32xf32>
    %c7_i32_105 = arith.constant 7 : i32
    %593 = vector.broadcast %c7_i32_105 : i32 to vector<8x1xi32>
    %594 = arith.cmpi eq, %534, %593 : vector<8x1xi32>
    %595 = vector.shape_cast %594 : vector<8x1xi1> to vector<8x1xi1>
    %596 = vector.broadcast %595 : vector<8x1xi1> to vector<8x32xi1>
    %597 = vector.shape_cast %592 : vector<1x32xf32> to vector<1x32xf32>
    %598 = vector.broadcast %597 : vector<1x32xf32> to vector<8x32xf32>
    %599 = arith.select %596, %598, %591 : vector<8x32xi1>, vector<8x32xf32>
    %c0_106 = arith.constant 0 : index
    %c64 = arith.constant 64 : index
    %600 = vector.load %arg6[%c0_106, %c64] : memref<8x96xf32, #tpu.memory_space<vmem>>, vector<8x32xf32>
    tpu.vector_store %arg6[%c0_106, %c64], %599 {strides = array<i32>} : memref<8x96xf32, #tpu.memory_space<vmem>>, vector<8x32xf32>,
    return
  }
  func.func @transform_0(%arg0: i32) -> (i32, i32) {
    %c0_i32 = arith.constant 0 : i32
    %c0_i32_0 = arith.constant 0 : i32
    return %arg0, %c0_i32 : i32, i32
  }
  func.func @transform_1(%arg0: i32) -> i32 {
    %c0_i32 = arith.constant 0 : i32
    %c0_i32_0 = arith.constant 0 : i32
    return %c0_i32 : i32
  }
  func.func @transform_2(%arg0: i32) -> (i32, i32) {
    %c0_i32 = arith.constant 0 : i32
    %c0_i32_0 = arith.constant 0 : i32
    %c0_i32_1 = arith.constant 0 : i32
    return %c0_i32, %c0_i32_0 : i32, i32
  }
  func.func @transform_3(%arg0: i32) -> (i32, i32) {
    %c0_i32 = arith.constant 0 : i32
    %c0_i32_0 = arith.constant 0 : i32
    %c0_i32_1 = arith.constant 0 : i32
    return %c0_i32, %c0_i32_0 : i32, i32
  }
  func.func @transform_4(%arg0: i32) -> (i32, i32) {
    %c0_i32 = arith.constant 0 : i32
    %c0_i32_0 = arith.constant 0 : i32
    %c0_i32_1 = arith.constant 0 : i32
    return %c0_i32, %c0_i32_0 : i32, i32
  }
  func.func @transform_5(%arg0: i32) -> (i32, i32) {
    %c0_i32 = arith.constant 0 : i32
    %c0_i32_0 = arith.constant 0 : i32
    return %arg0, %c0_i32 : i32, i32
  }
}

module attributes {stable_mosaic.version = 11 : i64} {
  func.func @kernel(%arg0: i32, %arg1: memref<8x3xi32, #tpu.memory_space<vmem>>, %arg2: memref<24xi32, #tpu.memory_space<smem>>, %arg3: memref<64x32xf32, #tpu.memory_space<vmem>>, %arg4: memref<2x32xf32, #tpu.memory_space<vmem>>, %arg5: memref<8x32xf32, #tpu.memory_space<vmem>>, %arg6: memref<8x96xf32, #tpu.memory_space<vmem>>) attributes {dimension_semantics = [#tpu.dimension_semantics<arbitrary>], iteration_bounds = array<i64: 1>, scalar_prefetch = 0 : i64, scratch_operands = 0 : i64, tpu.core_type = #tpu.core_type<tc>, window_params = [{transform_indices = @transform_0, window_bounds = array<i64: 8, 3>}, {transform_indices = @transform_1, window_bounds = array<i64: 24>}, {pipeline_mode = #tpu.pipeline_mode<synchronous>, transform_indices = @transform_2, window_bounds = array<i64: 64, 32>}, {pipeline_mode = #tpu.pipeline_mode<synchronous>, transform_indices = @transform_3, window_bounds = array<i64: 2, 32>}, {pipeline_mode = #tpu.pipeline_mode<synchronous>, transform_indices = @transform_4, window_bounds = array<i64: 8, 32>}, {transform_indices = @transform_5, window_bounds = array<i64: 8, 96>}]} {
    %c0 = arith.constant 0 : index
    %c0_0 = arith.constant 0 : index
    %0 = vector.load %arg1[%c0, %c0_0] : memref<8x3xi32, #tpu.memory_space<vmem>>, vector<8x1xi32>
    %cst = arith.constant 0.000000e+00 : f32
    %1 = vector.broadcast %cst : f32 to vector<8x32xf32>
    %c0_1 = arith.constant 0 : index
    %c0_2 = arith.constant 0 : index
    %2 = vector.load %arg3[%c0_1, %c0_2] : memref<64x32xf32, #tpu.memory_space<vmem>>, vector<1x32xf32>
    %c0_i32 = arith.constant 0 : i32
    %3 = vector.broadcast %c0_i32 : i32 to vector<8x1xi32>
    %4 = arith.cmpi eq, %0, %3 : vector<8x1xi32>
    %5 = vector.shape_cast %4 : vector<8x1xi1> to vector<8x1xi1>
    %6 = vector.broadcast %5 : vector<8x1xi1> to vector<8x32xi1>
    %7 = vector.shape_cast %2 : vector<1x32xf32> to vector<1x32xf32>
    %8 = vector.broadcast %7 : vector<1x32xf32> to vector<8x32xf32>
    %9 = arith.select %6, %8, %1 : vector<8x32xi1>, vector<8x32xf32>
    %c1 = arith.constant 1 : index
    %c0_3 = arith.constant 0 : index
    %10 = vector.load %arg3[%c1, %c0_3] : memref<64x32xf32, #tpu.memory_space<vmem>>, vector<1x32xf32>
    %c1_i32 = arith.constant 1 : i32
    %11 = vector.broadcast %c1_i32 : i32 to vector<8x1xi32>
    %12 = arith.cmpi eq, %0, %11 : vector<8x1xi32>
    %13 = vector.shape_cast %12 : vector<8x1xi1> to vector<8x1xi1>
    %14 = vector.broadcast %13 : vector<8x1xi1> to vector<8x32xi1>
    %15 = vector.shape_cast %10 : vector<1x32xf32> to vector<1x32xf32>
    %16 = vector.broadcast %15 : vector<1x32xf32> to vector<8x32xf32>
    %17 = arith.select %14, %16, %9 : vector<8x32xi1>, vector<8x32xf32>
    %c2 = arith.constant 2 : index
    %c0_4 = arith.constant 0 : index
    %18 = vector.load %arg3[%c2, %c0_4] : memref<64x32xf32, #tpu.memory_space<vmem>>, vector<1x32xf32>
    %c2_i32 = arith.constant 2 : i32
    %19 = vector.broadcast %c2_i32 : i32 to vector<8x1xi32>
    %20 = arith.cmpi eq, %0, %19 : vector<8x1xi32>
    %21 = vector.shape_cast %20 : vector<8x1xi1> to vector<8x1xi1>
    %22 = vector.broadcast %21 : vector<8x1xi1> to vector<8x32xi1>
    %23 = vector.shape_cast %18 : vector<1x32xf32> to vector<1x32xf32>
    %24 = vector.broadcast %23 : vector<1x32xf32> to vector<8x32xf32>
    %25 = arith.select %22, %24, %17 : vector<8x32xi1>, vector<8x32xf32>
    %c3 = arith.constant 3 : index
    %c0_5 = arith.constant 0 : index
    %26 = vector.load %arg3[%c3, %c0_5] : memref<64x32xf32, #tpu.memory_space<vmem>>, vector<1x32xf32>
    %c3_i32 = arith.constant 3 : i32
    %27 = vector.broadcast %c3_i32 : i32 to vector<8x1xi32>
    %28 = arith.cmpi eq, %0, %27 : vector<8x1xi32>
    %29 = vector.shape_cast %28 : vector<8x1xi1> to vector<8x1xi1>
    %30 = vector.broadcast %29 : vector<8x1xi1> to vector<8x32xi1>
    %31 = vector.shape_cast %26 : vector<1x32xf32> to vector<1x32xf32>
    %32 = vector.broadcast %31 : vector<1x32xf32> to vector<8x32xf32>
    %33 = arith.select %30, %32, %25 : vector<8x32xi1>, vector<8x32xf32>
    %c4 = arith.constant 4 : index
    %c0_6 = arith.constant 0 : index
    %34 = vector.load %arg3[%c4, %c0_6] : memref<64x32xf32, #tpu.memory_space<vmem>>, vector<1x32xf32>
    %c4_i32 = arith.constant 4 : i32
    %35 = vector.broadcast %c4_i32 : i32 to vector<8x1xi32>
    %36 = arith.cmpi eq, %0, %35 : vector<8x1xi32>
    %37 = vector.shape_cast %36 : vector<8x1xi1> to vector<8x1xi1>
    %38 = vector.broadcast %37 : vector<8x1xi1> to vector<8x32xi1>
    %39 = vector.shape_cast %34 : vector<1x32xf32> to vector<1x32xf32>
    %40 = vector.broadcast %39 : vector<1x32xf32> to vector<8x32xf32>
    %41 = arith.select %38, %40, %33 : vector<8x32xi1>, vector<8x32xf32>
    %c5 = arith.constant 5 : index
    %c0_7 = arith.constant 0 : index
    %42 = vector.load %arg3[%c5, %c0_7] : memref<64x32xf32, #tpu.memory_space<vmem>>, vector<1x32xf32>
    %c5_i32 = arith.constant 5 : i32
    %43 = vector.broadcast %c5_i32 : i32 to vector<8x1xi32>
    %44 = arith.cmpi eq, %0, %43 : vector<8x1xi32>
    %45 = vector.shape_cast %44 : vector<8x1xi1> to vector<8x1xi1>
    %46 = vector.broadcast %45 : vector<8x1xi1> to vector<8x32xi1>
    %47 = vector.shape_cast %42 : vector<1x32xf32> to vector<1x32xf32>
    %48 = vector.broadcast %47 : vector<1x32xf32> to vector<8x32xf32>
    %49 = arith.select %46, %48, %41 : vector<8x32xi1>, vector<8x32xf32>
    %c6 = arith.constant 6 : index
    %c0_8 = arith.constant 0 : index
    %50 = vector.load %arg3[%c6, %c0_8] : memref<64x32xf32, #tpu.memory_space<vmem>>, vector<1x32xf32>
    %c6_i32 = arith.constant 6 : i32
    %51 = vector.broadcast %c6_i32 : i32 to vector<8x1xi32>
    %52 = arith.cmpi eq, %0, %51 : vector<8x1xi32>
    %53 = vector.shape_cast %52 : vector<8x1xi1> to vector<8x1xi1>
    %54 = vector.broadcast %53 : vector<8x1xi1> to vector<8x32xi1>
    %55 = vector.shape_cast %50 : vector<1x32xf32> to vector<1x32xf32>
    %56 = vector.broadcast %55 : vector<1x32xf32> to vector<8x32xf32>
    %57 = arith.select %54, %56, %49 : vector<8x32xi1>, vector<8x32xf32>
    %c7 = arith.constant 7 : index
    %c0_9 = arith.constant 0 : index
    %58 = vector.load %arg3[%c7, %c0_9] : memref<64x32xf32, #tpu.memory_space<vmem>>, vector<1x32xf32>
    %c7_i32 = arith.constant 7 : i32
    %59 = vector.broadcast %c7_i32 : i32 to vector<8x1xi32>
    %60 = arith.cmpi eq, %0, %59 : vector<8x1xi32>
    %61 = vector.shape_cast %60 : vector<8x1xi1> to vector<8x1xi1>
    %62 = vector.broadcast %61 : vector<8x1xi1> to vector<8x32xi1>
    %63 = vector.shape_cast %58 : vector<1x32xf32> to vector<1x32xf32>
    %64 = vector.broadcast %63 : vector<1x32xf32> to vector<8x32xf32>
    %65 = arith.select %62, %64, %57 : vector<8x32xi1>, vector<8x32xf32>
    %c8 = arith.constant 8 : index
    %c0_10 = arith.constant 0 : index
    %66 = vector.load %arg3[%c8, %c0_10] : memref<64x32xf32, #tpu.memory_space<vmem>>, vector<1x32xf32>
    %c8_i32 = arith.constant 8 : i32
    %67 = vector.broadcast %c8_i32 : i32 to vector<8x1xi32>
    %68 = arith.cmpi eq, %0, %67 : vector<8x1xi32>
    %69 = vector.shape_cast %68 : vector<8x1xi1> to vector<8x1xi1>
    %70 = vector.broadcast %69 : vector<8x1xi1> to vector<8x32xi1>
    %71 = vector.shape_cast %66 : vector<1x32xf32> to vector<1x32xf32>
    %72 = vector.broadcast %71 : vector<1x32xf32> to vector<8x32xf32>
    %73 = arith.select %70, %72, %65 : vector<8x32xi1>, vector<8x32xf32>
    %c9 = arith.constant 9 : index
    %c0_11 = arith.constant 0 : index
    %74 = vector.load %arg3[%c9, %c0_11] : memref<64x32xf32, #tpu.memory_space<vmem>>, vector<1x32xf32>
    %c9_i32 = arith.constant 9 : i32
    %75 = vector.broadcast %c9_i32 : i32 to vector<8x1xi32>
    %76 = arith.cmpi eq, %0, %75 : vector<8x1xi32>
    %77 = vector.shape_cast %76 : vector<8x1xi1> to vector<8x1xi1>
    %78 = vector.broadcast %77 : vector<8x1xi1> to vector<8x32xi1>
    %79 = vector.shape_cast %74 : vector<1x32xf32> to vector<1x32xf32>
    %80 = vector.broadcast %79 : vector<1x32xf32> to vector<8x32xf32>
    %81 = arith.select %78, %80, %73 : vector<8x32xi1>, vector<8x32xf32>
    %c10 = arith.constant 10 : index
    %c0_12 = arith.constant 0 : index
    %82 = vector.load %arg3[%c10, %c0_12] : memref<64x32xf32, #tpu.memory_space<vmem>>, vector<1x32xf32>
    %c10_i32 = arith.constant 10 : i32
    %83 = vector.broadcast %c10_i32 : i32 to vector<8x1xi32>
    %84 = arith.cmpi eq, %0, %83 : vector<8x1xi32>
    %85 = vector.shape_cast %84 : vector<8x1xi1> to vector<8x1xi1>
    %86 = vector.broadcast %85 : vector<8x1xi1> to vector<8x32xi1>
    %87 = vector.shape_cast %82 : vector<1x32xf32> to vector<1x32xf32>
    %88 = vector.broadcast %87 : vector<1x32xf32> to vector<8x32xf32>
    %89 = arith.select %86, %88, %81 : vector<8x32xi1>, vector<8x32xf32>
    %c11 = arith.constant 11 : index
    %c0_13 = arith.constant 0 : index
    %90 = vector.load %arg3[%c11, %c0_13] : memref<64x32xf32, #tpu.memory_space<vmem>>, vector<1x32xf32>
    %c11_i32 = arith.constant 11 : i32
    %91 = vector.broadcast %c11_i32 : i32 to vector<8x1xi32>
    %92 = arith.cmpi eq, %0, %91 : vector<8x1xi32>
    %93 = vector.shape_cast %92 : vector<8x1xi1> to vector<8x1xi1>
    %94 = vector.broadcast %93 : vector<8x1xi1> to vector<8x32xi1>
    %95 = vector.shape_cast %90 : vector<1x32xf32> to vector<1x32xf32>
    %96 = vector.broadcast %95 : vector<1x32xf32> to vector<8x32xf32>
    %97 = arith.select %94, %96, %89 : vector<8x32xi1>, vector<8x32xf32>
    %c12 = arith.constant 12 : index
    %c0_14 = arith.constant 0 : index
    %98 = vector.load %arg3[%c12, %c0_14] : memref<64x32xf32, #tpu.memory_space<vmem>>, vector<1x32xf32>
    %c12_i32 = arith.constant 12 : i32
    %99 = vector.broadcast %c12_i32 : i32 to vector<8x1xi32>
    %100 = arith.cmpi eq, %0, %99 : vector<8x1xi32>
    %101 = vector.shape_cast %100 : vector<8x1xi1> to vector<8x1xi1>
    %102 = vector.broadcast %101 : vector<8x1xi1> to vector<8x32xi1>
    %103 = vector.shape_cast %98 : vector<1x32xf32> to vector<1x32xf32>
    %104 = vector.broadcast %103 : vector<1x32xf32> to vector<8x32xf32>
    %105 = arith.select %102, %104, %97 : vector<8x32xi1>, vector<8x32xf32>
    %c13 = arith.constant 13 : index
    %c0_15 = arith.constant 0 : index
    %106 = vector.load %arg3[%c13, %c0_15] : memref<64x32xf32, #tpu.memory_space<vmem>>, vector<1x32xf32>
    %c13_i32 = arith.constant 13 : i32
    %107 = vector.broadcast %c13_i32 : i32 to vector<8x1xi32>
    %108 = arith.cmpi eq, %0, %107 : vector<8x1xi32>
    %109 = vector.shape_cast %108 : vector<8x1xi1> to vector<8x1xi1>
    %110 = vector.broadcast %109 : vector<8x1xi1> to vector<8x32xi1>
    %111 = vector.shape_cast %106 : vector<1x32xf32> to vector<1x32xf32>
    %112 = vector.broadcast %111 : vector<1x32xf32> to vector<8x32xf32>
    %113 = arith.select %110, %112, %105 : vector<8x32xi1>, vector<8x32xf32>
    %c14 = arith.constant 14 : index
    %c0_16 = arith.constant 0 : index
    %114 = vector.load %arg3[%c14, %c0_16] : memref<64x32xf32, #tpu.memory_space<vmem>>, vector<1x32xf32>
    %c14_i32 = arith.constant 14 : i32
    %115 = vector.broadcast %c14_i32 : i32 to vector<8x1xi32>
    %116 = arith.cmpi eq, %0, %115 : vector<8x1xi32>
    %117 = vector.shape_cast %116 : vector<8x1xi1> to vector<8x1xi1>
    %118 = vector.broadcast %117 : vector<8x1xi1> to vector<8x32xi1>
    %119 = vector.shape_cast %114 : vector<1x32xf32> to vector<1x32xf32>
    %120 = vector.broadcast %119 : vector<1x32xf32> to vector<8x32xf32>
    %121 = arith.select %118, %120, %113 : vector<8x32xi1>, vector<8x32xf32>
    %c15 = arith.constant 15 : index
    %c0_17 = arith.constant 0 : index
    %122 = vector.load %arg3[%c15, %c0_17] : memref<64x32xf32, #tpu.memory_space<vmem>>, vector<1x32xf32>
    %c15_i32 = arith.constant 15 : i32
    %123 = vector.broadcast %c15_i32 : i32 to vector<8x1xi32>
    %124 = arith.cmpi eq, %0, %123 : vector<8x1xi32>
    %125 = vector.shape_cast %124 : vector<8x1xi1> to vector<8x1xi1>
    %126 = vector.broadcast %125 : vector<8x1xi1> to vector<8x32xi1>
    %127 = vector.shape_cast %122 : vector<1x32xf32> to vector<1x32xf32>
    %128 = vector.broadcast %127 : vector<1x32xf32> to vector<8x32xf32>
    %129 = arith.select %126, %128, %121 : vector<8x32xi1>, vector<8x32xf32>
    %c16 = arith.constant 16 : index
    %c0_18 = arith.constant 0 : index
    %130 = vector.load %arg3[%c16, %c0_18] : memref<64x32xf32, #tpu.memory_space<vmem>>, vector<1x32xf32>
    %c16_i32 = arith.constant 16 : i32
    %131 = vector.broadcast %c16_i32 : i32 to vector<8x1xi32>
    %132 = arith.cmpi eq, %0, %131 : vector<8x1xi32>
    %133 = vector.shape_cast %132 : vector<8x1xi1> to vector<8x1xi1>
    %134 = vector.broadcast %133 : vector<8x1xi1> to vector<8x32xi1>
    %135 = vector.shape_cast %130 : vector<1x32xf32> to vector<1x32xf32>
    %136 = vector.broadcast %135 : vector<1x32xf32> to vector<8x32xf32>
    %137 = arith.select %134, %136, %129 : vector<8x32xi1>, vector<8x32xf32>
    %c17 = arith.constant 17 : index
    %c0_19 = arith.constant 0 : index
    %138 = vector.load %arg3[%c17, %c0_19] : memref<64x32xf32, #tpu.memory_space<vmem>>, vector<1x32xf32>
    %c17_i32 = arith.constant 17 : i32
    %139 = vector.broadcast %c17_i32 : i32 to vector<8x1xi32>
    %140 = arith.cmpi eq, %0, %139 : vector<8x1xi32>
    %141 = vector.shape_cast %140 : vector<8x1xi1> to vector<8x1xi1>
    %142 = vector.broadcast %141 : vector<8x1xi1> to vector<8x32xi1>
    %143 = vector.shape_cast %138 : vector<1x32xf32> to vector<1x32xf32>
    %144 = vector.broadcast %143 : vector<1x32xf32> to vector<8x32xf32>
    %145 = arith.select %142, %144, %137 : vector<8x32xi1>, vector<8x32xf32>
    %c18 = arith.constant 18 : index
    %c0_20 = arith.constant 0 : index
    %146 = vector.load %arg3[%c18, %c0_20] : memref<64x32xf32, #tpu.memory_space<vmem>>, vector<1x32xf32>
    %c18_i32 = arith.constant 18 : i32
    %147 = vector.broadcast %c18_i32 : i32 to vector<8x1xi32>
    %148 = arith.cmpi eq, %0, %147 : vector<8x1xi32>
    %149 = vector.shape_cast %148 : vector<8x1xi1> to vector<8x1xi1>
    %150 = vector.broadcast %149 : vector<8x1xi1> to vector<8x32xi1>
    %151 = vector.shape_cast %146 : vector<1x32xf32> to vector<1x32xf32>
    %152 = vector.broadcast %151 : vector<1x32xf32> to vector<8x32xf32>
    %153 = arith.select %150, %152, %145 : vector<8x32xi1>, vector<8x32xf32>
    %c19 = arith.constant 19 : index
    %c0_21 = arith.constant 0 : index
    %154 = vector.load %arg3[%c19, %c0_21] : memref<64x32xf32, #tpu.memory_space<vmem>>, vector<1x32xf32>
    %c19_i32 = arith.constant 19 : i32
    %155 = vector.broadcast %c19_i32 : i32 to vector<8x1xi32>
    %156 = arith.cmpi eq, %0, %155 : vector<8x1xi32>
    %157 = vector.shape_cast %156 : vector<8x1xi1> to vector<8x1xi1>
    %158 = vector.broadcast %157 : vector<8x1xi1> to vector<8x32xi1>
    %159 = vector.shape_cast %154 : vector<1x32xf32> to vector<1x32xf32>
    %160 = vector.broadcast %159 : vector<1x32xf32> to vector<8x32xf32>
    %161 = arith.select %158, %160, %153 : vector<8x32xi1>, vector<8x32xf32>
    %c20 = arith.constant 20 : index
    %c0_22 = arith.constant 0 : index
    %162 = vector.load %arg3[%c20, %c0_22] : memref<64x32xf32, #tpu.memory_space<vmem>>, vector<1x32xf32>
    %c20_i32 = arith.constant 20 : i32
    %163 = vector.broadcast %c20_i32 : i32 to vector<8x1xi32>
    %164 = arith.cmpi eq, %0, %163 : vector<8x1xi32>
    %165 = vector.shape_cast %164 : vector<8x1xi1> to vector<8x1xi1>
    %166 = vector.broadcast %165 : vector<8x1xi1> to vector<8x32xi1>
    %167 = vector.shape_cast %162 : vector<1x32xf32> to vector<1x32xf32>
    %168 = vector.broadcast %167 : vector<1x32xf32> to vector<8x32xf32>
    %169 = arith.select %166, %168, %161 : vector<8x32xi1>, vector<8x32xf32>
    %c21 = arith.constant 21 : index
    %c0_23 = arith.constant 0 : index
    %170 = vector.load %arg3[%c21, %c0_23] : memref<64x32xf32, #tpu.memory_space<vmem>>, vector<1x32xf32>
    %c21_i32 = arith.constant 21 : i32
    %171 = vector.broadcast %c21_i32 : i32 to vector<8x1xi32>
    %172 = arith.cmpi eq, %0, %171 : vector<8x1xi32>
    %173 = vector.shape_cast %172 : vector<8x1xi1> to vector<8x1xi1>
    %174 = vector.broadcast %173 : vector<8x1xi1> to vector<8x32xi1>
    %175 = vector.shape_cast %170 : vector<1x32xf32> to vector<1x32xf32>
    %176 = vector.broadcast %175 : vector<1x32xf32> to vector<8x32xf32>
    %177 = arith.select %174, %176, %169 : vector<8x32xi1>, vector<8x32xf32>
    %c22 = arith.constant 22 : index
    %c0_24 = arith.constant 0 : index
    %178 = vector.load %arg3[%c22, %c0_24] : memref<64x32xf32, #tpu.memory_space<vmem>>, vector<1x32xf32>
    %c22_i32 = arith.constant 22 : i32
    %179 = vector.broadcast %c22_i32 : i32 to vector<8x1xi32>
    %180 = arith.cmpi eq, %0, %179 : vector<8x1xi32>
    %181 = vector.shape_cast %180 : vector<8x1xi1> to vector<8x1xi1>
    %182 = vector.broadcast %181 : vector<8x1xi1> to vector<8x32xi1>
    %183 = vector.shape_cast %178 : vector<1x32xf32> to vector<1x32xf32>
    %184 = vector.broadcast %183 : vector<1x32xf32> to vector<8x32xf32>
    %185 = arith.select %182, %184, %177 : vector<8x32xi1>, vector<8x32xf32>
    %c23 = arith.constant 23 : index
    %c0_25 = arith.constant 0 : index
    %186 = vector.load %arg3[%c23, %c0_25] : memref<64x32xf32, #tpu.memory_space<vmem>>, vector<1x32xf32>
    %c23_i32 = arith.constant 23 : i32
    %187 = vector.broadcast %c23_i32 : i32 to vector<8x1xi32>
    %188 = arith.cmpi eq, %0, %187 : vector<8x1xi32>
    %189 = vector.shape_cast %188 : vector<8x1xi1> to vector<8x1xi1>
    %190 = vector.broadcast %189 : vector<8x1xi1> to vector<8x32xi1>
    %191 = vector.shape_cast %186 : vector<1x32xf32> to vector<1x32xf32>
    %192 = vector.broadcast %191 : vector<1x32xf32> to vector<8x32xf32>
    %193 = arith.select %190, %192, %185 : vector<8x32xi1>, vector<8x32xf32>
    %c24 = arith.constant 24 : index
    %c0_26 = arith.constant 0 : index
    %194 = vector.load %arg3[%c24, %c0_26] : memref<64x32xf32, #tpu.memory_space<vmem>>, vector<1x32xf32>
    %c24_i32 = arith.constant 24 : i32
    %195 = vector.broadcast %c24_i32 : i32 to vector<8x1xi32>
    %196 = arith.cmpi eq, %0, %195 : vector<8x1xi32>
    %197 = vector.shape_cast %196 : vector<8x1xi1> to vector<8x1xi1>
    %198 = vector.broadcast %197 : vector<8x1xi1> to vector<8x32xi1>
    %199 = vector.shape_cast %194 : vector<1x32xf32> to vector<1x32xf32>
    %200 = vector.broadcast %199 : vector<1x32xf32> to vector<8x32xf32>
    %201 = arith.select %198, %200, %193 : vector<8x32xi1>, vector<8x32xf32>
    %c25 = arith.constant 25 : index
    %c0_27 = arith.constant 0 : index
    %202 = vector.load %arg3[%c25, %c0_27] : memref<64x32xf32, #tpu.memory_space<vmem>>, vector<1x32xf32>
    %c25_i32 = arith.constant 25 : i32
    %203 = vector.broadcast %c25_i32 : i32 to vector<8x1xi32>
    %204 = arith.cmpi eq, %0, %203 : vector<8x1xi32>
    %205 = vector.shape_cast %204 : vector<8x1xi1> to vector<8x1xi1>
    %206 = vector.broadcast %205 : vector<8x1xi1> to vector<8x32xi1>
    %207 = vector.shape_cast %202 : vector<1x32xf32> to vector<1x32xf32>
    %208 = vector.broadcast %207 : vector<1x32xf32> to vector<8x32xf32>
    %209 = arith.select %206, %208, %201 : vector<8x32xi1>, vector<8x32xf32>
    %c26 = arith.constant 26 : index
    %c0_28 = arith.constant 0 : index
    %210 = vector.load %arg3[%c26, %c0_28] : memref<64x32xf32, #tpu.memory_space<vmem>>, vector<1x32xf32>
    %c26_i32 = arith.constant 26 : i32
    %211 = vector.broadcast %c26_i32 : i32 to vector<8x1xi32>
    %212 = arith.cmpi eq, %0, %211 : vector<8x1xi32>
    %213 = vector.shape_cast %212 : vector<8x1xi1> to vector<8x1xi1>
    %214 = vector.broadcast %213 : vector<8x1xi1> to vector<8x32xi1>
    %215 = vector.shape_cast %210 : vector<1x32xf32> to vector<1x32xf32>
    %216 = vector.broadcast %215 : vector<1x32xf32> to vector<8x32xf32>
    %217 = arith.select %214, %216, %209 : vector<8x32xi1>, vector<8x32xf32>
    %c27 = arith.constant 27 : index
    %c0_29 = arith.constant 0 : index
    %218 = vector.load %arg3[%c27, %c0_29] : memref<64x32xf32, #tpu.memory_space<vmem>>, vector<1x32xf32>
    %c27_i32 = arith.constant 27 : i32
    %219 = vector.broadcast %c27_i32 : i32 to vector<8x1xi32>
    %220 = arith.cmpi eq, %0, %219 : vector<8x1xi32>
    %221 = vector.shape_cast %220 : vector<8x1xi1> to vector<8x1xi1>
    %222 = vector.broadcast %221 : vector<8x1xi1> to vector<8x32xi1>
    %223 = vector.shape_cast %218 : vector<1x32xf32> to vector<1x32xf32>
    %224 = vector.broadcast %223 : vector<1x32xf32> to vector<8x32xf32>
    %225 = arith.select %222, %224, %217 : vector<8x32xi1>, vector<8x32xf32>
    %c28 = arith.constant 28 : index
    %c0_30 = arith.constant 0 : index
    %226 = vector.load %arg3[%c28, %c0_30] : memref<64x32xf32, #tpu.memory_space<vmem>>, vector<1x32xf32>
    %c28_i32 = arith.constant 28 : i32
    %227 = vector.broadcast %c28_i32 : i32 to vector<8x1xi32>
    %228 = arith.cmpi eq, %0, %227 : vector<8x1xi32>
    %229 = vector.shape_cast %228 : vector<8x1xi1> to vector<8x1xi1>
    %230 = vector.broadcast %229 : vector<8x1xi1> to vector<8x32xi1>
    %231 = vector.shape_cast %226 : vector<1x32xf32> to vector<1x32xf32>
    %232 = vector.broadcast %231 : vector<1x32xf32> to vector<8x32xf32>
    %233 = arith.select %230, %232, %225 : vector<8x32xi1>, vector<8x32xf32>
    %c29 = arith.constant 29 : index
    %c0_31 = arith.constant 0 : index
    %234 = vector.load %arg3[%c29, %c0_31] : memref<64x32xf32, #tpu.memory_space<vmem>>, vector<1x32xf32>
    %c29_i32 = arith.constant 29 : i32
    %235 = vector.broadcast %c29_i32 : i32 to vector<8x1xi32>
    %236 = arith.cmpi eq, %0, %235 : vector<8x1xi32>
    %237 = vector.shape_cast %236 : vector<8x1xi1> to vector<8x1xi1>
    %238 = vector.broadcast %237 : vector<8x1xi1> to vector<8x32xi1>
    %239 = vector.shape_cast %234 : vector<1x32xf32> to vector<1x32xf32>
    %240 = vector.broadcast %239 : vector<1x32xf32> to vector<8x32xf32>
    %241 = arith.select %238, %240, %233 : vector<8x32xi1>, vector<8x32xf32>
    %c30 = arith.constant 30 : index
    %c0_32 = arith.constant 0 : index
    %242 = vector.load %arg3[%c30, %c0_32] : memref<64x32xf32, #tpu.memory_space<vmem>>, vector<1x32xf32>
    %c30_i32 = arith.constant 30 : i32
    %243 = vector.broadcast %c30_i32 : i32 to vector<8x1xi32>
    %244 = arith.cmpi eq, %0, %243 : vector<8x1xi32>
    %245 = vector.shape_cast %244 : vector<8x1xi1> to vector<8x1xi1>
    %246 = vector.broadcast %245 : vector<8x1xi1> to vector<8x32xi1>
    %247 = vector.shape_cast %242 : vector<1x32xf32> to vector<1x32xf32>
    %248 = vector.broadcast %247 : vector<1x32xf32> to vector<8x32xf32>
    %249 = arith.select %246, %248, %241 : vector<8x32xi1>, vector<8x32xf32>
    %c31 = arith.constant 31 : index
    %c0_33 = arith.constant 0 : index
    %250 = vector.load %arg3[%c31, %c0_33] : memref<64x32xf32, #tpu.memory_space<vmem>>, vector<1x32xf32>
    %c31_i32 = arith.constant 31 : i32
    %251 = vector.broadcast %c31_i32 : i32 to vector<8x1xi32>
    %252 = arith.cmpi eq, %0, %251 : vector<8x1xi32>
    %253 = vector.shape_cast %252 : vector<8x1xi1> to vector<8x1xi1>
    %254 = vector.broadcast %253 : vector<8x1xi1> to vector<8x32xi1>
    %255 = vector.shape_cast %250 : vector<1x32xf32> to vector<1x32xf32>
    %256 = vector.broadcast %255 : vector<1x32xf32> to vector<8x32xf32>
    %257 = arith.select %254, %256, %249 : vector<8x32xi1>, vector<8x32xf32>
    %c32 = arith.constant 32 : index
    %c0_34 = arith.constant 0 : index
    %258 = vector.load %arg3[%c32, %c0_34] : memref<64x32xf32, #tpu.memory_space<vmem>>, vector<1x32xf32>
    %c32_i32 = arith.constant 32 : i32
    %259 = vector.broadcast %c32_i32 : i32 to vector<8x1xi32>
    %260 = arith.cmpi eq, %0, %259 : vector<8x1xi32>
    %261 = vector.shape_cast %260 : vector<8x1xi1> to vector<8x1xi1>
    %262 = vector.broadcast %261 : vector<8x1xi1> to vector<8x32xi1>
    %263 = vector.shape_cast %258 : vector<1x32xf32> to vector<1x32xf32>
    %264 = vector.broadcast %263 : vector<1x32xf32> to vector<8x32xf32>
    %265 = arith.select %262, %264, %257 : vector<8x32xi1>, vector<8x32xf32>
    %c33 = arith.constant 33 : index
    %c0_35 = arith.constant 0 : index
    %266 = vector.load %arg3[%c33, %c0_35] : memref<64x32xf32, #tpu.memory_space<vmem>>, vector<1x32xf32>
    %c33_i32 = arith.constant 33 : i32
    %267 = vector.broadcast %c33_i32 : i32 to vector<8x1xi32>
    %268 = arith.cmpi eq, %0, %267 : vector<8x1xi32>
    %269 = vector.shape_cast %268 : vector<8x1xi1> to vector<8x1xi1>
    %270 = vector.broadcast %269 : vector<8x1xi1> to vector<8x32xi1>
    %271 = vector.shape_cast %266 : vector<1x32xf32> to vector<1x32xf32>
    %272 = vector.broadcast %271 : vector<1x32xf32> to vector<8x32xf32>
    %273 = arith.select %270, %272, %265 : vector<8x32xi1>, vector<8x32xf32>
    %c34 = arith.constant 34 : index
    %c0_36 = arith.constant 0 : index
    %274 = vector.load %arg3[%c34, %c0_36] : memref<64x32xf32, #tpu.memory_space<vmem>>, vector<1x32xf32>
    %c34_i32 = arith.constant 34 : i32
    %275 = vector.broadcast %c34_i32 : i32 to vector<8x1xi32>
    %276 = arith.cmpi eq, %0, %275 : vector<8x1xi32>
    %277 = vector.shape_cast %276 : vector<8x1xi1> to vector<8x1xi1>
    %278 = vector.broadcast %277 : vector<8x1xi1> to vector<8x32xi1>
    %279 = vector.shape_cast %274 : vector<1x32xf32> to vector<1x32xf32>
    %280 = vector.broadcast %279 : vector<1x32xf32> to vector<8x32xf32>
    %281 = arith.select %278, %280, %273 : vector<8x32xi1>, vector<8x32xf32>
    %c35 = arith.constant 35 : index
    %c0_37 = arith.constant 0 : index
    %282 = vector.load %arg3[%c35, %c0_37] : memref<64x32xf32, #tpu.memory_space<vmem>>, vector<1x32xf32>
    %c35_i32 = arith.constant 35 : i32
    %283 = vector.broadcast %c35_i32 : i32 to vector<8x1xi32>
    %284 = arith.cmpi eq, %0, %283 : vector<8x1xi32>
    %285 = vector.shape_cast %284 : vector<8x1xi1> to vector<8x1xi1>
    %286 = vector.broadcast %285 : vector<8x1xi1> to vector<8x32xi1>
    %287 = vector.shape_cast %282 : vector<1x32xf32> to vector<1x32xf32>
    %288 = vector.broadcast %287 : vector<1x32xf32> to vector<8x32xf32>
    %289 = arith.select %286, %288, %281 : vector<8x32xi1>, vector<8x32xf32>
    %c36 = arith.constant 36 : index
    %c0_38 = arith.constant 0 : index
    %290 = vector.load %arg3[%c36, %c0_38] : memref<64x32xf32, #tpu.memory_space<vmem>>, vector<1x32xf32>
    %c36_i32 = arith.constant 36 : i32
    %291 = vector.broadcast %c36_i32 : i32 to vector<8x1xi32>
    %292 = arith.cmpi eq, %0, %291 : vector<8x1xi32>
    %293 = vector.shape_cast %292 : vector<8x1xi1> to vector<8x1xi1>
    %294 = vector.broadcast %293 : vector<8x1xi1> to vector<8x32xi1>
    %295 = vector.shape_cast %290 : vector<1x32xf32> to vector<1x32xf32>
    %296 = vector.broadcast %295 : vector<1x32xf32> to vector<8x32xf32>
    %297 = arith.select %294, %296, %289 : vector<8x32xi1>, vector<8x32xf32>
    %c37 = arith.constant 37 : index
    %c0_39 = arith.constant 0 : index
    %298 = vector.load %arg3[%c37, %c0_39] : memref<64x32xf32, #tpu.memory_space<vmem>>, vector<1x32xf32>
    %c37_i32 = arith.constant 37 : i32
    %299 = vector.broadcast %c37_i32 : i32 to vector<8x1xi32>
    %300 = arith.cmpi eq, %0, %299 : vector<8x1xi32>
    %301 = vector.shape_cast %300 : vector<8x1xi1> to vector<8x1xi1>
    %302 = vector.broadcast %301 : vector<8x1xi1> to vector<8x32xi1>
    %303 = vector.shape_cast %298 : vector<1x32xf32> to vector<1x32xf32>
    %304 = vector.broadcast %303 : vector<1x32xf32> to vector<8x32xf32>
    %305 = arith.select %302, %304, %297 : vector<8x32xi1>, vector<8x32xf32>
    %c38 = arith.constant 38 : index
    %c0_40 = arith.constant 0 : index
    %306 = vector.load %arg3[%c38, %c0_40] : memref<64x32xf32, #tpu.memory_space<vmem>>, vector<1x32xf32>
    %c38_i32 = arith.constant 38 : i32
    %307 = vector.broadcast %c38_i32 : i32 to vector<8x1xi32>
    %308 = arith.cmpi eq, %0, %307 : vector<8x1xi32>
    %309 = vector.shape_cast %308 : vector<8x1xi1> to vector<8x1xi1>
    %310 = vector.broadcast %309 : vector<8x1xi1> to vector<8x32xi1>
    %311 = vector.shape_cast %306 : vector<1x32xf32> to vector<1x32xf32>
    %312 = vector.broadcast %311 : vector<1x32xf32> to vector<8x32xf32>
    %313 = arith.select %310, %312, %305 : vector<8x32xi1>, vector<8x32xf32>
    %c39 = arith.constant 39 : index
    %c0_41 = arith.constant 0 : index
    %314 = vector.load %arg3[%c39, %c0_41] : memref<64x32xf32, #tpu.memory_space<vmem>>, vector<1x32xf32>
    %c39_i32 = arith.constant 39 : i32
    %315 = vector.broadcast %c39_i32 : i32 to vector<8x1xi32>
    %316 = arith.cmpi eq, %0, %315 : vector<8x1xi32>
    %317 = vector.shape_cast %316 : vector<8x1xi1> to vector<8x1xi1>
    %318 = vector.broadcast %317 : vector<8x1xi1> to vector<8x32xi1>
    %319 = vector.shape_cast %314 : vector<1x32xf32> to vector<1x32xf32>
    %320 = vector.broadcast %319 : vector<1x32xf32> to vector<8x32xf32>
    %321 = arith.select %318, %320, %313 : vector<8x32xi1>, vector<8x32xf32>
    %c40 = arith.constant 40 : index
    %c0_42 = arith.constant 0 : index
    %322 = vector.load %arg3[%c40, %c0_42] : memref<64x32xf32, #tpu.memory_space<vmem>>, vector<1x32xf32>
    %c40_i32 = arith.constant 40 : i32
    %323 = vector.broadcast %c40_i32 : i32 to vector<8x1xi32>
    %324 = arith.cmpi eq, %0, %323 : vector<8x1xi32>
    %325 = vector.shape_cast %324 : vector<8x1xi1> to vector<8x1xi1>
    %326 = vector.broadcast %325 : vector<8x1xi1> to vector<8x32xi1>
    %327 = vector.shape_cast %322 : vector<1x32xf32> to vector<1x32xf32>
    %328 = vector.broadcast %327 : vector<1x32xf32> to vector<8x32xf32>
    %329 = arith.select %326, %328, %321 : vector<8x32xi1>, vector<8x32xf32>
    %c41 = arith.constant 41 : index
    %c0_43 = arith.constant 0 : index
    %330 = vector.load %arg3[%c41, %c0_43] : memref<64x32xf32, #tpu.memory_space<vmem>>, vector<1x32xf32>
    %c41_i32 = arith.constant 41 : i32
    %331 = vector.broadcast %c41_i32 : i32 to vector<8x1xi32>
    %332 = arith.cmpi eq, %0, %331 : vector<8x1xi32>
    %333 = vector.shape_cast %332 : vector<8x1xi1> to vector<8x1xi1>
    %334 = vector.broadcast %333 : vector<8x1xi1> to vector<8x32xi1>
    %335 = vector.shape_cast %330 : vector<1x32xf32> to vector<1x32xf32>
    %336 = vector.broadcast %335 : vector<1x32xf32> to vector<8x32xf32>
    %337 = arith.select %334, %336, %329 : vector<8x32xi1>, vector<8x32xf32>
    %c42 = arith.constant 42 : index
    %c0_44 = arith.constant 0 : index
    %338 = vector.load %arg3[%c42, %c0_44] : memref<64x32xf32, #tpu.memory_space<vmem>>, vector<1x32xf32>
    %c42_i32 = arith.constant 42 : i32
    %339 = vector.broadcast %c42_i32 : i32 to vector<8x1xi32>
    %340 = arith.cmpi eq, %0, %339 : vector<8x1xi32>
    %341 = vector.shape_cast %340 : vector<8x1xi1> to vector<8x1xi1>
    %342 = vector.broadcast %341 : vector<8x1xi1> to vector<8x32xi1>
    %343 = vector.shape_cast %338 : vector<1x32xf32> to vector<1x32xf32>
    %344 = vector.broadcast %343 : vector<1x32xf32> to vector<8x32xf32>
    %345 = arith.select %342, %344, %337 : vector<8x32xi1>, vector<8x32xf32>
    %c43 = arith.constant 43 : index
    %c0_45 = arith.constant 0 : index
    %346 = vector.load %arg3[%c43, %c0_45] : memref<64x32xf32, #tpu.memory_space<vmem>>, vector<1x32xf32>
    %c43_i32 = arith.constant 43 : i32
    %347 = vector.broadcast %c43_i32 : i32 to vector<8x1xi32>
    %348 = arith.cmpi eq, %0, %347 : vector<8x1xi32>
    %349 = vector.shape_cast %348 : vector<8x1xi1> to vector<8x1xi1>
    %350 = vector.broadcast %349 : vector<8x1xi1> to vector<8x32xi1>
    %351 = vector.shape_cast %346 : vector<1x32xf32> to vector<1x32xf32>
    %352 = vector.broadcast %351 : vector<1x32xf32> to vector<8x32xf32>
    %353 = arith.select %350, %352, %345 : vector<8x32xi1>, vector<8x32xf32>
    %c44 = arith.constant 44 : index
    %c0_46 = arith.constant 0 : index
    %354 = vector.load %arg3[%c44, %c0_46] : memref<64x32xf32, #tpu.memory_space<vmem>>, vector<1x32xf32>
    %c44_i32 = arith.constant 44 : i32
    %355 = vector.broadcast %c44_i32 : i32 to vector<8x1xi32>
    %356 = arith.cmpi eq, %0, %355 : vector<8x1xi32>
    %357 = vector.shape_cast %356 : vector<8x1xi1> to vector<8x1xi1>
    %358 = vector.broadcast %357 : vector<8x1xi1> to vector<8x32xi1>
    %359 = vector.shape_cast %354 : vector<1x32xf32> to vector<1x32xf32>
    %360 = vector.broadcast %359 : vector<1x32xf32> to vector<8x32xf32>
    %361 = arith.select %358, %360, %353 : vector<8x32xi1>, vector<8x32xf32>
    %c45 = arith.constant 45 : index
    %c0_47 = arith.constant 0 : index
    %362 = vector.load %arg3[%c45, %c0_47] : memref<64x32xf32, #tpu.memory_space<vmem>>, vector<1x32xf32>
    %c45_i32 = arith.constant 45 : i32
    %363 = vector.broadcast %c45_i32 : i32 to vector<8x1xi32>
    %364 = arith.cmpi eq, %0, %363 : vector<8x1xi32>
    %365 = vector.shape_cast %364 : vector<8x1xi1> to vector<8x1xi1>
    %366 = vector.broadcast %365 : vector<8x1xi1> to vector<8x32xi1>
    %367 = vector.shape_cast %362 : vector<1x32xf32> to vector<1x32xf32>
    %368 = vector.broadcast %367 : vector<1x32xf32> to vector<8x32xf32>
    %369 = arith.select %366, %368, %361 : vector<8x32xi1>, vector<8x32xf32>
    %c46 = arith.constant 46 : index
    %c0_48 = arith.constant 0 : index
    %370 = vector.load %arg3[%c46, %c0_48] : memref<64x32xf32, #tpu.memory_space<vmem>>, vector<1x32xf32>
    %c46_i32 = arith.constant 46 : i32
    %371 = vector.broadcast %c46_i32 : i32 to vector<8x1xi32>
    %372 = arith.cmpi eq, %0, %371 : vector<8x1xi32>
    %373 = vector.shape_cast %372 : vector<8x1xi1> to vector<8x1xi1>
    %374 = vector.broadcast %373 : vector<8x1xi1> to vector<8x32xi1>
    %375 = vector.shape_cast %370 : vector<1x32xf32> to vector<1x32xf32>
    %376 = vector.broadcast %375 : vector<1x32xf32> to vector<8x32xf32>
    %377 = arith.select %374, %376, %369 : vector<8x32xi1>, vector<8x32xf32>
    %c47 = arith.constant 47 : index
    %c0_49 = arith.constant 0 : index
    %378 = vector.load %arg3[%c47, %c0_49] : memref<64x32xf32, #tpu.memory_space<vmem>>, vector<1x32xf32>
    %c47_i32 = arith.constant 47 : i32
    %379 = vector.broadcast %c47_i32 : i32 to vector<8x1xi32>
    %380 = arith.cmpi eq, %0, %379 : vector<8x1xi32>
    %381 = vector.shape_cast %380 : vector<8x1xi1> to vector<8x1xi1>
    %382 = vector.broadcast %381 : vector<8x1xi1> to vector<8x32xi1>
    %383 = vector.shape_cast %378 : vector<1x32xf32> to vector<1x32xf32>
    %384 = vector.broadcast %383 : vector<1x32xf32> to vector<8x32xf32>
    %385 = arith.select %382, %384, %377 : vector<8x32xi1>, vector<8x32xf32>
    %c48 = arith.constant 48 : index
    %c0_50 = arith.constant 0 : index
    %386 = vector.load %arg3[%c48, %c0_50] : memref<64x32xf32, #tpu.memory_space<vmem>>, vector<1x32xf32>
    %c48_i32 = arith.constant 48 : i32
    %387 = vector.broadcast %c48_i32 : i32 to vector<8x1xi32>
    %388 = arith.cmpi eq, %0, %387 : vector<8x1xi32>
    %389 = vector.shape_cast %388 : vector<8x1xi1> to vector<8x1xi1>
    %390 = vector.broadcast %389 : vector<8x1xi1> to vector<8x32xi1>
    %391 = vector.shape_cast %386 : vector<1x32xf32> to vector<1x32xf32>
    %392 = vector.broadcast %391 : vector<1x32xf32> to vector<8x32xf32>
    %393 = arith.select %390, %392, %385 : vector<8x32xi1>, vector<8x32xf32>
    %c49 = arith.constant 49 : index
    %c0_51 = arith.constant 0 : index
    %394 = vector.load %arg3[%c49, %c0_51] : memref<64x32xf32, #tpu.memory_space<vmem>>, vector<1x32xf32>
    %c49_i32 = arith.constant 49 : i32
    %395 = vector.broadcast %c49_i32 : i32 to vector<8x1xi32>
    %396 = arith.cmpi eq, %0, %395 : vector<8x1xi32>
    %397 = vector.shape_cast %396 : vector<8x1xi1> to vector<8x1xi1>
    %398 = vector.broadcast %397 : vector<8x1xi1> to vector<8x32xi1>
    %399 = vector.shape_cast %394 : vector<1x32xf32> to vector<1x32xf32>
    %400 = vector.broadcast %399 : vector<1x32xf32> to vector<8x32xf32>
    %401 = arith.select %398, %400, %393 : vector<8x32xi1>, vector<8x32xf32>
    %c50 = arith.constant 50 : index
    %c0_52 = arith.constant 0 : index
    %402 = vector.load %arg3[%c50, %c0_52] : memref<64x32xf32, #tpu.memory_space<vmem>>, vector<1x32xf32>
    %c50_i32 = arith.constant 50 : i32
    %403 = vector.broadcast %c50_i32 : i32 to vector<8x1xi32>
    %404 = arith.cmpi eq, %0, %403 : vector<8x1xi32>
    %405 = vector.shape_cast %404 : vector<8x1xi1> to vector<8x1xi1>
    %406 = vector.broadcast %405 : vector<8x1xi1> to vector<8x32xi1>
    %407 = vector.shape_cast %402 : vector<1x32xf32> to vector<1x32xf32>
    %408 = vector.broadcast %407 : vector<1x32xf32> to vector<8x32xf32>
    %409 = arith.select %406, %408, %401 : vector<8x32xi1>, vector<8x32xf32>
    %c51 = arith.constant 51 : index
    %c0_53 = arith.constant 0 : index
    %410 = vector.load %arg3[%c51, %c0_53] : memref<64x32xf32, #tpu.memory_space<vmem>>, vector<1x32xf32>
    %c51_i32 = arith.constant 51 : i32
    %411 = vector.broadcast %c51_i32 : i32 to vector<8x1xi32>
    %412 = arith.cmpi eq, %0, %411 : vector<8x1xi32>
    %413 = vector.shape_cast %412 : vector<8x1xi1> to vector<8x1xi1>
    %414 = vector.broadcast %413 : vector<8x1xi1> to vector<8x32xi1>
    %415 = vector.shape_cast %410 : vector<1x32xf32> to vector<1x32xf32>
    %416 = vector.broadcast %415 : vector<1x32xf32> to vector<8x32xf32>
    %417 = arith.select %414, %416, %409 : vector<8x32xi1>, vector<8x32xf32>
    %c52 = arith.constant 52 : index
    %c0_54 = arith.constant 0 : index
    %418 = vector.load %arg3[%c52, %c0_54] : memref<64x32xf32, #tpu.memory_space<vmem>>, vector<1x32xf32>
    %c52_i32 = arith.constant 52 : i32
    %419 = vector.broadcast %c52_i32 : i32 to vector<8x1xi32>
    %420 = arith.cmpi eq, %0, %419 : vector<8x1xi32>
    %421 = vector.shape_cast %420 : vector<8x1xi1> to vector<8x1xi1>
    %422 = vector.broadcast %421 : vector<8x1xi1> to vector<8x32xi1>
    %423 = vector.shape_cast %418 : vector<1x32xf32> to vector<1x32xf32>
    %424 = vector.broadcast %423 : vector<1x32xf32> to vector<8x32xf32>
    %425 = arith.select %422, %424, %417 : vector<8x32xi1>, vector<8x32xf32>
    %c53 = arith.constant 53 : index
    %c0_55 = arith.constant 0 : index
    %426 = vector.load %arg3[%c53, %c0_55] : memref<64x32xf32, #tpu.memory_space<vmem>>, vector<1x32xf32>
    %c53_i32 = arith.constant 53 : i32
    %427 = vector.broadcast %c53_i32 : i32 to vector<8x1xi32>
    %428 = arith.cmpi eq, %0, %427 : vector<8x1xi32>
    %429 = vector.shape_cast %428 : vector<8x1xi1> to vector<8x1xi1>
    %430 = vector.broadcast %429 : vector<8x1xi1> to vector<8x32xi1>
    %431 = vector.shape_cast %426 : vector<1x32xf32> to vector<1x32xf32>
    %432 = vector.broadcast %431 : vector<1x32xf32> to vector<8x32xf32>
    %433 = arith.select %430, %432, %425 : vector<8x32xi1>, vector<8x32xf32>
    %c54 = arith.constant 54 : index
    %c0_56 = arith.constant 0 : index
    %434 = vector.load %arg3[%c54, %c0_56] : memref<64x32xf32, #tpu.memory_space<vmem>>, vector<1x32xf32>
    %c54_i32 = arith.constant 54 : i32
    %435 = vector.broadcast %c54_i32 : i32 to vector<8x1xi32>
    %436 = arith.cmpi eq, %0, %435 : vector<8x1xi32>
    %437 = vector.shape_cast %436 : vector<8x1xi1> to vector<8x1xi1>
    %438 = vector.broadcast %437 : vector<8x1xi1> to vector<8x32xi1>
    %439 = vector.shape_cast %434 : vector<1x32xf32> to vector<1x32xf32>
    %440 = vector.broadcast %439 : vector<1x32xf32> to vector<8x32xf32>
    %441 = arith.select %438, %440, %433 : vector<8x32xi1>, vector<8x32xf32>
    %c55 = arith.constant 55 : index
    %c0_57 = arith.constant 0 : index
    %442 = vector.load %arg3[%c55, %c0_57] : memref<64x32xf32, #tpu.memory_space<vmem>>, vector<1x32xf32>
    %c55_i32 = arith.constant 55 : i32
    %443 = vector.broadcast %c55_i32 : i32 to vector<8x1xi32>
    %444 = arith.cmpi eq, %0, %443 : vector<8x1xi32>
    %445 = vector.shape_cast %444 : vector<8x1xi1> to vector<8x1xi1>
    %446 = vector.broadcast %445 : vector<8x1xi1> to vector<8x32xi1>
    %447 = vector.shape_cast %442 : vector<1x32xf32> to vector<1x32xf32>
    %448 = vector.broadcast %447 : vector<1x32xf32> to vector<8x32xf32>
    %449 = arith.select %446, %448, %441 : vector<8x32xi1>, vector<8x32xf32>
    %c56 = arith.constant 56 : index
    %c0_58 = arith.constant 0 : index
    %450 = vector.load %arg3[%c56, %c0_58] : memref<64x32xf32, #tpu.memory_space<vmem>>, vector<1x32xf32>
    %c56_i32 = arith.constant 56 : i32
    %451 = vector.broadcast %c56_i32 : i32 to vector<8x1xi32>
    %452 = arith.cmpi eq, %0, %451 : vector<8x1xi32>
    %453 = vector.shape_cast %452 : vector<8x1xi1> to vector<8x1xi1>
    %454 = vector.broadcast %453 : vector<8x1xi1> to vector<8x32xi1>
    %455 = vector.shape_cast %450 : vector<1x32xf32> to vector<1x32xf32>
    %456 = vector.broadcast %455 : vector<1x32xf32> to vector<8x32xf32>
    %457 = arith.select %454, %456, %449 : vector<8x32xi1>, vector<8x32xf32>
    %c57 = arith.constant 57 : index
    %c0_59 = arith.constant 0 : index
    %458 = vector.load %arg3[%c57, %c0_59] : memref<64x32xf32, #tpu.memory_space<vmem>>, vector<1x32xf32>
    %c57_i32 = arith.constant 57 : i32
    %459 = vector.broadcast %c57_i32 : i32 to vector<8x1xi32>
    %460 = arith.cmpi eq, %0, %459 : vector<8x1xi32>
    %461 = vector.shape_cast %460 : vector<8x1xi1> to vector<8x1xi1>
    %462 = vector.broadcast %461 : vector<8x1xi1> to vector<8x32xi1>
    %463 = vector.shape_cast %458 : vector<1x32xf32> to vector<1x32xf32>
    %464 = vector.broadcast %463 : vector<1x32xf32> to vector<8x32xf32>
    %465 = arith.select %462, %464, %457 : vector<8x32xi1>, vector<8x32xf32>
    %c58 = arith.constant 58 : index
    %c0_60 = arith.constant 0 : index
    %466 = vector.load %arg3[%c58, %c0_60] : memref<64x32xf32, #tpu.memory_space<vmem>>, vector<1x32xf32>
    %c58_i32 = arith.constant 58 : i32
    %467 = vector.broadcast %c58_i32 : i32 to vector<8x1xi32>
    %468 = arith.cmpi eq, %0, %467 : vector<8x1xi32>
    %469 = vector.shape_cast %468 : vector<8x1xi1> to vector<8x1xi1>
    %470 = vector.broadcast %469 : vector<8x1xi1> to vector<8x32xi1>
    %471 = vector.shape_cast %466 : vector<1x32xf32> to vector<1x32xf32>
    %472 = vector.broadcast %471 : vector<1x32xf32> to vector<8x32xf32>
    %473 = arith.select %470, %472, %465 : vector<8x32xi1>, vector<8x32xf32>
    %c59 = arith.constant 59 : index
    %c0_61 = arith.constant 0 : index
    %474 = vector.load %arg3[%c59, %c0_61] : memref<64x32xf32, #tpu.memory_space<vmem>>, vector<1x32xf32>
    %c59_i32 = arith.constant 59 : i32
    %475 = vector.broadcast %c59_i32 : i32 to vector<8x1xi32>
    %476 = arith.cmpi eq, %0, %475 : vector<8x1xi32>
    %477 = vector.shape_cast %476 : vector<8x1xi1> to vector<8x1xi1>
    %478 = vector.broadcast %477 : vector<8x1xi1> to vector<8x32xi1>
    %479 = vector.shape_cast %474 : vector<1x32xf32> to vector<1x32xf32>
    %480 = vector.broadcast %479 : vector<1x32xf32> to vector<8x32xf32>
    %481 = arith.select %478, %480, %473 : vector<8x32xi1>, vector<8x32xf32>
    %c60 = arith.constant 60 : index
    %c0_62 = arith.constant 0 : index
    %482 = vector.load %arg3[%c60, %c0_62] : memref<64x32xf32, #tpu.memory_space<vmem>>, vector<1x32xf32>
    %c60_i32 = arith.constant 60 : i32
    %483 = vector.broadcast %c60_i32 : i32 to vector<8x1xi32>
    %484 = arith.cmpi eq, %0, %483 : vector<8x1xi32>
    %485 = vector.shape_cast %484 : vector<8x1xi1> to vector<8x1xi1>
    %486 = vector.broadcast %485 : vector<8x1xi1> to vector<8x32xi1>
    %487 = vector.shape_cast %482 : vector<1x32xf32> to vector<1x32xf32>
    %488 = vector.broadcast %487 : vector<1x32xf32> to vector<8x32xf32>
    %489 = arith.select %486, %488, %481 : vector<8x32xi1>, vector<8x32xf32>
    %c61 = arith.constant 61 : index
    %c0_63 = arith.constant 0 : index
    %490 = vector.load %arg3[%c61, %c0_63] : memref<64x32xf32, #tpu.memory_space<vmem>>, vector<1x32xf32>
    %c61_i32 = arith.constant 61 : i32
    %491 = vector.broadcast %c61_i32 : i32 to vector<8x1xi32>
    %492 = arith.cmpi eq, %0, %491 : vector<8x1xi32>
    %493 = vector.shape_cast %492 : vector<8x1xi1> to vector<8x1xi1>
    %494 = vector.broadcast %493 : vector<8x1xi1> to vector<8x32xi1>
    %495 = vector.shape_cast %490 : vector<1x32xf32> to vector<1x32xf32>
    %496 = vector.broadcast %495 : vector<1x32xf32> to vector<8x32xf32>
    %497 = arith.select %494, %496, %489 : vector<8x32xi1>, vector<8x32xf32>
    %c62 = arith.constant 62 : index
    %c0_64 = arith.constant 0 : index
    %498 = vector.load %arg3[%c62, %c0_64] : memref<64x32xf32, #tpu.memory_space<vmem>>, vector<1x32xf32>
    %c62_i32 = arith.constant 62 : i32
    %499 = vector.broadcast %c62_i32 : i32 to vector<8x1xi32>
    %500 = arith.cmpi eq, %0, %499 : vector<8x1xi32>
    %501 = vector.shape_cast %500 : vector<8x1xi1> to vector<8x1xi1>
    %502 = vector.broadcast %501 : vector<8x1xi1> to vector<8x32xi1>
    %503 = vector.shape_cast %498 : vector<1x32xf32> to vector<1x32xf32>
    %504 = vector.broadcast %503 : vector<1x32xf32> to vector<8x32xf32>
    %505 = arith.select %502, %504, %497 : vector<8x32xi1>, vector<8x32xf32>
    %c63 = arith.constant 63 : index
    %c0_65 = arith.constant 0 : index
    %506 = vector.load %arg3[%c63, %c0_65] : memref<64x32xf32, #tpu.memory_space<vmem>>, vector<1x32xf32>
    %c63_i32 = arith.constant 63 : i32
    %507 = vector.broadcast %c63_i32 : i32 to vector<8x1xi32>
    %508 = arith.cmpi eq, %0, %507 : vector<8x1xi32>
    %509 = vector.shape_cast %508 : vector<8x1xi1> to vector<8x1xi1>
    %510 = vector.broadcast %509 : vector<8x1xi1> to vector<8x32xi1>
    %511 = vector.shape_cast %506 : vector<1x32xf32> to vector<1x32xf32>
    %512 = vector.broadcast %511 : vector<1x32xf32> to vector<8x32xf32>
    %513 = arith.select %510, %512, %505 : vector<8x32xi1>, vector<8x32xf32>
    %c0_66 = arith.constant 0 : index
    %c0_67 = arith.constant 0 : index
    %514 = vector.load %arg6[%c0_66, %c0_67] : memref<8x96xf32, #tpu.memory_space<vmem>>, vector<8x32xf32>
    tpu.vector_store %arg6[%c0_66, %c0_67], %513 {strides = array<i32>} : memref<8x96xf32, #tpu.memory_space<vmem>>, vector<8x32xf32>,
    %c0_68 = arith.constant 0 : index
    %c1_69 = arith.constant 1 : index
    %515 = vector.load %arg1[%c0_68, %c1_69] : memref<8x3xi32, #tpu.memory_space<vmem>>, vector<8x1xi32>
    %cst_70 = arith.constant 0.000000e+00 : f32
    %516 = vector.broadcast %cst_70 : f32 to vector<8x32xf32>
    %c0_71 = arith.constant 0 : index
    %c0_72 = arith.constant 0 : index
    %517 = vector.load %arg4[%c0_71, %c0_72] : memref<2x32xf32, #tpu.memory_space<vmem>>, vector<1x32xf32>
    %c0_i32_73 = arith.constant 0 : i32
    %518 = vector.broadcast %c0_i32_73 : i32 to vector<8x1xi32>
    %519 = arith.cmpi eq, %515, %518 : vector<8x1xi32>
    %520 = vector.shape_cast %519 : vector<8x1xi1> to vector<8x1xi1>
    %521 = vector.broadcast %520 : vector<8x1xi1> to vector<8x32xi1>
    %522 = vector.shape_cast %517 : vector<1x32xf32> to vector<1x32xf32>
    %523 = vector.broadcast %522 : vector<1x32xf32> to vector<8x32xf32>
    %524 = arith.select %521, %523, %516 : vector<8x32xi1>, vector<8x32xf32>
    %c1_74 = arith.constant 1 : index
    %c0_75 = arith.constant 0 : index
    %525 = vector.load %arg4[%c1_74, %c0_75] : memref<2x32xf32, #tpu.memory_space<vmem>>, vector<1x32xf32>
    %c1_i32_76 = arith.constant 1 : i32
    %526 = vector.broadcast %c1_i32_76 : i32 to vector<8x1xi32>
    %527 = arith.cmpi eq, %515, %526 : vector<8x1xi32>
    %528 = vector.shape_cast %527 : vector<8x1xi1> to vector<8x1xi1>
    %529 = vector.broadcast %528 : vector<8x1xi1> to vector<8x32xi1>
    %530 = vector.shape_cast %525 : vector<1x32xf32> to vector<1x32xf32>
    %531 = vector.broadcast %530 : vector<1x32xf32> to vector<8x32xf32>
    %532 = arith.select %529, %531, %524 : vector<8x32xi1>, vector<8x32xf32>
    %c0_77 = arith.constant 0 : index
    %c32_78 = arith.constant 32 : index
    %533 = vector.load %arg6[%c0_77, %c32_78] : memref<8x96xf32, #tpu.memory_space<vmem>>, vector<8x32xf32>
    tpu.vector_store %arg6[%c0_77, %c32_78], %532 {strides = array<i32>} : memref<8x96xf32, #tpu.memory_space<vmem>>, vector<8x32xf32>,
    %c0_79 = arith.constant 0 : index
    %c2_80 = arith.constant 2 : index
    %534 = vector.load %arg1[%c0_79, %c2_80] : memref<8x3xi32, #tpu.memory_space<vmem>>, vector<8x1xi32>
    %cst_81 = arith.constant 0.000000e+00 : f32
    %535 = vector.broadcast %cst_81 : f32 to vector<8x32xf32>
    %c0_82 = arith.constant 0 : index
    %c0_83 = arith.constant 0 : index
    %536 = vector.load %arg5[%c0_82, %c0_83] : memref<8x32xf32, #tpu.memory_space<vmem>>, vector<1x32xf32>
    %c0_i32_84 = arith.constant 0 : i32
    %537 = vector.broadcast %c0_i32_84 : i32 to vector<8x1xi32>
    %538 = arith.cmpi eq, %534, %537 : vector<8x1xi32>
    %539 = vector.shape_cast %538 : vector<8x1xi1> to vector<8x1xi1>
    %540 = vector.broadcast %539 : vector<8x1xi1> to vector<8x32xi1>
    %541 = vector.shape_cast %536 : vector<1x32xf32> to vector<1x32xf32>
    %542 = vector.broadcast %541 : vector<1x32xf32> to vector<8x32xf32>
    %543 = arith.select %540, %542, %535 : vector<8x32xi1>, vector<8x32xf32>
    %c1_85 = arith.constant 1 : index
    %c0_86 = arith.constant 0 : index
    %544 = vector.load %arg5[%c1_85, %c0_86] : memref<8x32xf32, #tpu.memory_space<vmem>>, vector<1x32xf32>
    %c1_i32_87 = arith.constant 1 : i32
    %545 = vector.broadcast %c1_i32_87 : i32 to vector<8x1xi32>
    %546 = arith.cmpi eq, %534, %545 : vector<8x1xi32>
    %547 = vector.shape_cast %546 : vector<8x1xi1> to vector<8x1xi1>
    %548 = vector.broadcast %547 : vector<8x1xi1> to vector<8x32xi1>
    %549 = vector.shape_cast %544 : vector<1x32xf32> to vector<1x32xf32>
    %550 = vector.broadcast %549 : vector<1x32xf32> to vector<8x32xf32>
    %551 = arith.select %548, %550, %543 : vector<8x32xi1>, vector<8x32xf32>
    %c2_88 = arith.constant 2 : index
    %c0_89 = arith.constant 0 : index
    %552 = vector.load %arg5[%c2_88, %c0_89] : memref<8x32xf32, #tpu.memory_space<vmem>>, vector<1x32xf32>
    %c2_i32_90 = arith.constant 2 : i32
    %553 = vector.broadcast %c2_i32_90 : i32 to vector<8x1xi32>
    %554 = arith.cmpi eq, %534, %553 : vector<8x1xi32>
    %555 = vector.shape_cast %554 : vector<8x1xi1> to vector<8x1xi1>
    %556 = vector.broadcast %555 : vector<8x1xi1> to vector<8x32xi1>
    %557 = vector.shape_cast %552 : vector<1x32xf32> to vector<1x32xf32>
    %558 = vector.broadcast %557 : vector<1x32xf32> to vector<8x32xf32>
    %559 = arith.select %556, %558, %551 : vector<8x32xi1>, vector<8x32xf32>
    %c3_91 = arith.constant 3 : index
    %c0_92 = arith.constant 0 : index
    %560 = vector.load %arg5[%c3_91, %c0_92] : memref<8x32xf32, #tpu.memory_space<vmem>>, vector<1x32xf32>
    %c3_i32_93 = arith.constant 3 : i32
    %561 = vector.broadcast %c3_i32_93 : i32 to vector<8x1xi32>
    %562 = arith.cmpi eq, %534, %561 : vector<8x1xi32>
    %563 = vector.shape_cast %562 : vector<8x1xi1> to vector<8x1xi1>
    %564 = vector.broadcast %563 : vector<8x1xi1> to vector<8x32xi1>
    %565 = vector.shape_cast %560 : vector<1x32xf32> to vector<1x32xf32>
    %566 = vector.broadcast %565 : vector<1x32xf32> to vector<8x32xf32>
    %567 = arith.select %564, %566, %559 : vector<8x32xi1>, vector<8x32xf32>
    %c4_94 = arith.constant 4 : index
    %c0_95 = arith.constant 0 : index
    %568 = vector.load %arg5[%c4_94, %c0_95] : memref<8x32xf32, #tpu.memory_space<vmem>>, vector<1x32xf32>
    %c4_i32_96 = arith.constant 4 : i32
    %569 = vector.broadcast %c4_i32_96 : i32 to vector<8x1xi32>
    %570 = arith.cmpi eq, %534, %569 : vector<8x1xi32>
    %571 = vector.shape_cast %570 : vector<8x1xi1> to vector<8x1xi1>
    %572 = vector.broadcast %571 : vector<8x1xi1> to vector<8x32xi1>
    %573 = vector.shape_cast %568 : vector<1x32xf32> to vector<1x32xf32>
    %574 = vector.broadcast %573 : vector<1x32xf32> to vector<8x32xf32>
    %575 = arith.select %572, %574, %567 : vector<8x32xi1>, vector<8x32xf32>
    %c5_97 = arith.constant 5 : index
    %c0_98 = arith.constant 0 : index
    %576 = vector.load %arg5[%c5_97, %c0_98] : memref<8x32xf32, #tpu.memory_space<vmem>>, vector<1x32xf32>
    %c5_i32_99 = arith.constant 5 : i32
    %577 = vector.broadcast %c5_i32_99 : i32 to vector<8x1xi32>
    %578 = arith.cmpi eq, %534, %577 : vector<8x1xi32>
    %579 = vector.shape_cast %578 : vector<8x1xi1> to vector<8x1xi1>
    %580 = vector.broadcast %579 : vector<8x1xi1> to vector<8x32xi1>
    %581 = vector.shape_cast %576 : vector<1x32xf32> to vector<1x32xf32>
    %582 = vector.broadcast %581 : vector<1x32xf32> to vector<8x32xf32>
    %583 = arith.select %580, %582, %575 : vector<8x32xi1>, vector<8x32xf32>
    %c6_100 = arith.constant 6 : index
    %c0_101 = arith.constant 0 : index
    %584 = vector.load %arg5[%c6_100, %c0_101] : memref<8x32xf32, #tpu.memory_space<vmem>>, vector<1x32xf32>
    %c6_i32_102 = arith.constant 6 : i32
    %585 = vector.broadcast %c6_i32_102 : i32 to vector<8x1xi32>
    %586 = arith.cmpi eq, %534, %585 : vector<8x1xi32>
    %587 = vector.shape_cast %586 : vector<8x1xi1> to vector<8x1xi1>
    %588 = vector.broadcast %587 : vector<8x1xi1> to vector<8x32xi1>
    %589 = vector.shape_cast %584 : vector<1x32xf32> to vector<1x32xf32>
    %590 = vector.broadcast %589 : vector<1x32xf32> to vector<8x32xf32>
    %591 = arith.select %588, %590, %583 : vector<8x32xi1>, vector<8x32xf32>
    %c7_103 = arith.constant 7 : index
    %c0_104 = arith.constant 0 : index
    %592 = vector.load %arg5[%c7_103, %c0_104] : memref<8x32xf32, #tpu.memory_space<vmem>>, vector<1x32xf32>
    %c7_i32_105 = arith.constant 7 : i32
    %593 = vector.broadcast %c7_i32_105 : i32 to vector<8x1xi32>
    %594 = arith.cmpi eq, %534, %593 : vector<8x1xi32>
    %595 = vector.shape_cast %594 : vector<8x1xi1> to vector<8x1xi1>
    %596 = vector.broadcast %595 : vector<8x1xi1> to vector<8x32xi1>
    %597 = vector.shape_cast %592 : vector<1x32xf32> to vector<1x32xf32>
    %598 = vector.broadcast %597 : vector<1x32xf32> to vector<8x32xf32>
    %599 = arith.select %596, %598, %591 : vector<8x32xi1>, vector<8x32xf32>
    %c0_106 = arith.constant 0 : index
    %c64 = arith.constant 64 : index
    %600 = vector.load %arg6[%c0_106, %c64] : memref<8x96xf32, #tpu.memory_space<vmem>>, vector<8x32xf32>
    tpu.vector_store %arg6[%c0_106, %c64], %599 {strides = array<i32>} : memref<8x96xf32, #tpu.memory_space<vmem>>, vector<8x32xf32>,
    return
  }
  func.func @transform_0(%arg0: i32) -> (i32, i32) {
    %c0_i32 = arith.constant 0 : i32
    %c0_i32_0 = arith.constant 0 : i32
    return %arg0, %c0_i32 : i32, i32
  }
  func.func @transform_1(%arg0: i32) -> i32 {
    %c0_i32 = arith.constant 0 : i32
    %c0_i32_0 = arith.constant 0 : i32
    return %c0_i32 : i32
  }
  func.func @transform_2(%arg0: i32) -> (i32, i32) {
    %c0_i32 = arith.constant 0 : i32
    %c0_i32_0 = arith.constant 0 : i32
    %c0_i32_1 = arith.constant 0 : i32
    return %c0_i32, %c0_i32_0 : i32, i32
  }
  func.func @transform_3(%arg0: i32) -> (i32, i32) {
    %c0_i32 = arith.constant 0 : i32
    %c0_i32_0 = arith.constant 0 : i32
    %c0_i32_1 = arith.constant 0 : i32
    return %c0_i32, %c0_i32_0 : i32, i32
  }
  func.func @transform_4(%arg0: i32) -> (i32, i32) {
    %c0_i32 = arith.constant 0 : i32
    %c0_i32_0 = arith.constant 0 : i32
    %c0_i32_1 = arith.constant 0 : i32
    return %c0_i32, %c0_i32_0 : i32, i32
  }
  func.func @transform_5(%arg0: i32) -> (i32, i32) {
    %c0_i32 = arith.constant 0 : i32
    %c0_i32_0 = arith.constant 0 : i32
    return %arg0, %c0_i32 : i32, i32
  }
}

</mosaic_0001>

<llo_original>
// kernel: tpu_custom_call.1
$region0: #{tpu_custom_call.1}
  #allocation0 [shape = 'u32[]', space=smem, size = 0x4, offset = 0x4, fixed_abs, tag = 'smem constant byte address 0x4 - core index']
  #allocation1 [shape = 'u32[144,128]{1,0:T(1,128)}', space=vmem, size = 0x12000, scoped, tag = 'internal scratch']
  %s0 = inlined_call_operand.vmem [shape: s32[8,3], index: 0, kind: input, shape index: {}]
  %s1 = inlined_call_operand.vmem [shape: s32[24], index: 1, kind: input, shape index: {}]
  %s2 = inlined_call_operand.vmem [shape: f32[64,32], index: 2, kind: input, shape index: {}]
  %s3 = inlined_call_operand.vmem [shape: f32[2,32], index: 3, kind: input, shape index: {}]
  %s4 = inlined_call_operand.vmem [shape: f32[8,32], index: 4, kind: input, shape index: {}]
  %s5 = inlined_call_operand.hbm [shape: f32[8,96], index: 5, kind: output, shape index: {}]
  %s6 = sld [smem:[#allocation0]]
  $region34: #{tpu_custom_call.1} parent=0
    _
  %s8 = ssub.s32 1, %s6
  %s9 = scalar_select 0, %s8, %s6
  $region1: #{tpu_custom_call.1} parent=0
    #allocation2 [shape = 'u8[512]{0}', space=smem, size = 0x200, scoped, tag = 'input window, operand 1, single buffered']
    #allocation3 [shape = 's32[1]{0}', space=sflag, size = 0x4, scoped, tag = 'scoped memory for tpu_custom_call.1']
    #allocation4 [shape = 's32[1]{0}', space=sflag, size = 0x4, scoped, tag = 'scoped memory for tpu_custom_call.1']
    #allocation5 [shape = 'u8[4096]{0}', space=vmem, size = 0x1000, scoped, tag = 'output window, operand 0, single buffered']
    %10 = vsyncpa [#allocation4], 0
    %11 = vsyncpa [#allocation3], 0
    // Predicated region
    $region2: #{tpu_custom_call.1} parent=1 // pred_check
      _
    $region3: #{tpu_custom_call.1} parent=1 // pred_check_branch
      %13 = sbr.rel (0) target = $region5
    $region4: #{tpu_custom_call.1} parent=1 // pred_region
      _
    $region5: #{tpu_custom_call.1} parent=1 // pred_fallthru
      _
    // Predicated region
    $region6: #{tpu_custom_call.1} parent=1 // pred_check
      _
    $region7: #{tpu_custom_call.1} parent=1 // pred_check_branch
      %15 = sbr.rel (0) target = $region9
    $region8: #{tpu_custom_call.1} parent=1 // pred_region
      %s17 = ssub.s32 16, 16
      %18 = vsyncadd [#allocation4], %s17
      %s20 = sshll.u32 %s1, 4
      %s21 = int_to_ptr.vmem [resolvable:$true] %s20
      %23 = dma.vmem_to_smem %s21, 16, [#allocation2], [#allocation4]
    $region9: #{tpu_custom_call.1} parent=1 // pred_fallthru
      _
    // Predicated region
    $region10: #{tpu_custom_call.1} parent=1 // pred_check
      _
    $region11: #{tpu_custom_call.1} parent=1 // pred_check_branch
      %25 = sbr.rel (0) target = $region13
    $region12: #{tpu_custom_call.1} parent=1 // pred_region
      _
    $region13: #{tpu_custom_call.1} parent=1 // pred_fallthru
      _
    // Predicated region
    $region14: #{tpu_custom_call.1} parent=1 // pred_check
      _
    $region15: #{tpu_custom_call.1} parent=1 // pred_check_branch
      %27 = sbr.rel (0) target = $region17
    $region16: #{tpu_custom_call.1} parent=1 // pred_region
      _
    $region17: #{tpu_custom_call.1} parent=1 // pred_fallthru
      _
    // Predicated region
    $region18: #{tpu_custom_call.1} parent=1 // pred_check
      _
    $region19: #{tpu_custom_call.1} parent=1 // pred_check_branch
      %29 = sbr.rel (0) target = $region21
    $region20: #{tpu_custom_call.1} parent=1 // pred_region
      _
    $region21: #{tpu_custom_call.1} parent=1 // pred_fallthru
      _
    // Predicated region
    $region22: #{tpu_custom_call.1} parent=1 // pred_check
      _
    $region23: #{tpu_custom_call.1} parent=1 // pred_check_branch
      %31 = sbr.rel (0) target = $region25
    $region24: #{tpu_custom_call.1} parent=1 // pred_region
      %32 = dma.done [#allocation4], 16
    $region25: #{tpu_custom_call.1} parent=1 // pred_fallthru
      _
    %33 = sfence
    %v34 = vld [vmem:[%s0] sm:$0xff]
    %v35 = vld [vmem:[%s2] sm:$0x1]
    %vm36 = vcmp.eq.s32.totalorder %v34, 0
    %v37 = vsel %vm36, 1, 0
    %38 = vset.pattern.permute.xlu0 0
    %39 = vperm.xlu0 %38, %v37
    %v40 = vpop.permute.xlu0 %39
    %vm41 = vcmp.eq.s32.totalorder %v40, 1
    %v42 = vlaneseq
    %v43 = vshrl.u32 %v42, 7
    %v44 = vsub.s32 0, %v43
    %v45 = vrot.slane %v35, %v44
    %v46 = vsel %vm41, %v45, 0.0
    %v47 = vld [vmem:[%s2 + $0x1] sm:$0x1]
    %vm48 = vcmp.eq.s32.totalorder %v34, 1
    %v49 = vsel %vm48, 1, 0
    %50 = vset.pattern.permute.xlu0 0
    %51 = vperm.xlu0 %50, %v49
    %v52 = vpop.permute.xlu0 %51
    %vm53 = vcmp.eq.s32.totalorder %v52, 1
    %v54 = vlaneseq
    %v55 = vshrl.u32 %v54, 7
    %v56 = vsub.s32 0, %v55
    %v57 = vrot.slane %v47, %v56
    %v58 = vsel %vm53, %v57, %v46
    %v59 = vld [vmem:[%s2 + $0x2] sm:$0x1]
    %vm60 = vcmp.eq.s32.totalorder %v34, 2
    %v61 = vsel %vm60, 1, 0
    %62 = vset.pattern.permute.xlu0 0
    %63 = vperm.xlu0 %62, %v61
    %v64 = vpop.permute.xlu0 %63
    %vm65 = vcmp.eq.s32.totalorder %v64, 1
    %v66 = vlaneseq
    %v67 = vshrl.u32 %v66, 7
    %v68 = vsub.s32 0, %v67
    %v69 = vrot.slane %v59, %v68
    %v70 = vsel %vm65, %v69, %v58
    %v71 = vld [vmem:[%s2 + $0x3] sm:$0x1]
    %vm72 = vcmp.eq.s32.totalorder %v34, 3
    %v73 = vsel %vm72, 1, 0
    %74 = vset.pattern.permute.xlu0 0
    %75 = vperm.xlu0 %74, %v73
    %v76 = vpop.permute.xlu0 %75
    %vm77 = vcmp.eq.s32.totalorder %v76, 1
    %v78 = vlaneseq
    %v79 = vshrl.u32 %v78, 7
    %v80 = vsub.s32 0, %v79
    %v81 = vrot.slane %v71, %v80
    %v82 = vsel %vm77, %v81, %v70
    %v83 = vld [vmem:[%s2 + $0x4] sm:$0x1]
    %vm84 = vcmp.eq.s32.totalorder %v34, 4
    %v85 = vsel %vm84, 1, 0
    %86 = vset.pattern.permute.xlu0 0
    %87 = vperm.xlu0 %86, %v85
    %v88 = vpop.permute.xlu0 %87
    %vm89 = vcmp.eq.s32.totalorder %v88, 1
    %v90 = vlaneseq
    %v91 = vshrl.u32 %v90, 7
    %v92 = vsub.s32 0, %v91
    %v93 = vrot.slane %v83, %v92
    %v94 = vsel %vm89, %v93, %v82
    %v95 = vld [vmem:[%s2 + $0x5] sm:$0x1]
    %vm96 = vcmp.eq.s32.totalorder %v34, 5
    %v97 = vsel %vm96, 1, 0
    %98 = vset.pattern.permute.xlu0 0
    %99 = vperm.xlu0 %98, %v97
    %v100 = vpop.permute.xlu0 %99
    %vm101 = vcmp.eq.s32.totalorder %v100, 1
    %v102 = vlaneseq
    %v103 = vshrl.u32 %v102, 7
    %v104 = vsub.s32 0, %v103
    %v105 = vrot.slane %v95, %v104
    %v106 = vsel %vm101, %v105, %v94
    %v107 = vld [vmem:[%s2 + $0x6] sm:$0x1]
    %vm108 = vcmp.eq.s32.totalorder %v34, 6
    %v109 = vsel %vm108, 1, 0
    %110 = vset.pattern.permute.xlu0 0
    %111 = vperm.xlu0 %110, %v109
    %v112 = vpop.permute.xlu0 %111
    %vm113 = vcmp.eq.s32.totalorder %v112, 1
    %v114 = vlaneseq
    %v115 = vshrl.u32 %v114, 7
    %v116 = vsub.s32 0, %v115
    %v117 = vrot.slane %v107, %v116
    %v118 = vsel %vm113, %v117, %v106
    %v119 = vld [vmem:[%s2 + $0x7] sm:$0x1]
    %vm120 = vcmp.eq.s32.totalorder %v34, 7
    %v121 = vsel %vm120, 1, 0
    %122 = vset.pattern.permute.xlu0 0
    %123 = vperm.xlu0 %122, %v121
    %v124 = vpop.permute.xlu0 %123
    %vm125 = vcmp.eq.s32.totalorder %v124, 1
    %v126 = vlaneseq
    %v127 = vshrl.u32 %v126, 7
    %v128 = vsub.s32 0, %v127
    %v129 = vrot.slane %v119, %v128
    %v130 = vsel %vm125, %v129, %v118
    %v131 = vld [vmem:[%s2 + $0x8] sm:$0x1]
    %vm132 = vcmp.eq.s32.totalorder %v34, 8
    %v133 = vsel %vm132, 1, 0
    %134 = vset.pattern.permute.xlu0 0
    %135 = vperm.xlu0 %134, %v133
    %v136 = vpop.permute.xlu0 %135
    %vm137 = vcmp.eq.s32.totalorder %v136, 1
    %v138 = vlaneseq
    %v139 = vshrl.u32 %v138, 7
    %v140 = vsub.s32 0, %v139
    %v141 = vrot.slane %v131, %v140
    %v142 = vsel %vm137, %v141, %v130
    %v143 = vld [vmem:[%s2 + $0x9] sm:$0x1]
    %vm144 = vcmp.eq.s32.totalorder %v34, 9
    %v145 = vsel %vm144, 1, 0
    %146 = vset.pattern.permute.xlu0 0
    %147 = vperm.xlu0 %146, %v145
    %v148 = vpop.permute.xlu0 %147
    %vm149 = vcmp.eq.s32.totalorder %v148, 1
    %v150 = vlaneseq
    %v151 = vshrl.u32 %v150, 7
    %v152 = vsub.s32 0, %v151
    %v153 = vrot.slane %v143, %v152
    %v154 = vsel %vm149, %v153, %v142
    %v155 = vld [vmem:[%s2 + $0xa] sm:$0x1]
    %vm156 = vcmp.eq.s32.totalorder %v34, 10
    %v157 = vsel %vm156, 1, 0
    %158 = vset.pattern.permute.xlu0 0
    %159 = vperm.xlu0 %158, %v157
    %v160 = vpop.permute.xlu0 %159
    %vm161 = vcmp.eq.s32.totalorder %v160, 1
    %v162 = vlaneseq
    %v163 = vshrl.u32 %v162, 7
    %v164 = vsub.s32 0, %v163
    %v165 = vrot.slane %v155, %v164
    %v166 = vsel %vm161, %v165, %v154
    %v167 = vld [vmem:[%s2 + $0xb] sm:$0x1]
    %vm168 = vcmp.eq.s32.totalorder %v34, 11
    %v169 = vsel %vm168, 1, 0
    %170 = vset.pattern.permute.xlu0 0
    %171 = vperm.xlu0 %170, %v169
    %v172 = vpop.permute.xlu0 %171
    %vm173 = vcmp.eq.s32.totalorder %v172, 1
    %v174 = vlaneseq
    %v175 = vshrl.u32 %v174, 7
    %v176 = vsub.s32 0, %v175
    %v177 = vrot.slane %v167, %v176
    %v178 = vsel %vm173, %v177, %v166
    %v179 = vld [vmem:[%s2 + $0xc] sm:$0x1]
    %vm180 = vcmp.eq.s32.totalorder %v34, 12
    %v181 = vsel %vm180, 1, 0
    %182 = vset.pattern.permute.xlu0 0
    %183 = vperm.xlu0 %182, %v181
    %v184 = vpop.permute.xlu0 %183
    %vm185 = vcmp.eq.s32.totalorder %v184, 1
    %v186 = vlaneseq
    %v187 = vshrl.u32 %v186, 7
    %v188 = vsub.s32 0, %v187
    %v189 = vrot.slane %v179, %v188
    %v190 = vsel %vm185, %v189, %v178
    %v191 = vld [vmem:[%s2 + $0xd] sm:$0x1]
    %vm192 = vcmp.eq.s32.totalorder %v34, 13
    %v193 = vsel %vm192, 1, 0
    %194 = vset.pattern.permute.xlu0 0
    %195 = vperm.xlu0 %194, %v193
    %v196 = vpop.permute.xlu0 %195
    %vm197 = vcmp.eq.s32.totalorder %v196, 1
    %v198 = vlaneseq
    %v199 = vshrl.u32 %v198, 7
    %v200 = vsub.s32 0, %v199
    %v201 = vrot.slane %v191, %v200
    %v202 = vsel %vm197, %v201, %v190
    %v203 = vld [vmem:[%s2 + $0xe] sm:$0x1]
    %vm204 = vcmp.eq.s32.totalorder %v34, 14
    %v205 = vsel %vm204, 1, 0
    %206 = vset.pattern.permute.xlu0 0
    %207 = vperm.xlu0 %206, %v205
    %v208 = vpop.permute.xlu0 %207
    %vm209 = vcmp.eq.s32.totalorder %v208, 1
    %v210 = vlaneseq
    %v211 = vshrl.u32 %v210, 7
    %v212 = vsub.s32 0, %v211
    %v213 = vrot.slane %v203, %v212
    %v214 = vsel %vm209, %v213, %v202
    %v215 = vld [vmem:[%s2 + $0xf] sm:$0x1]
    %vm216 = vcmp.eq.s32.totalorder %v34, 15
    %v217 = vsel %vm216, 1, 0
    %218 = vset.pattern.permute.xlu0 0
    %219 = vperm.xlu0 %218, %v217
    %v220 = vpop.permute.xlu0 %219
    %vm221 = vcmp.eq.s32.totalorder %v220, 1
    %v222 = vlaneseq
    %v223 = vshrl.u32 %v222, 7
    %v224 = vsub.s32 0, %v223
    %v225 = vrot.slane %v215, %v224
    %v226 = vsel %vm221, %v225, %v214
    %v227 = vld [vmem:[%s2 + $0x10] sm:$0x1]
    %vm228 = vcmp.eq.s32.totalorder %v34, 16
    %v229 = vsel %vm228, 1, 0
    %230 = vset.pattern.permute.xlu0 0
    %231 = vperm.xlu0 %230, %v229
    %v232 = vpop.permute.xlu0 %231
    %vm233 = vcmp.eq.s32.totalorder %v232, 1
    %v234 = vlaneseq
    %v235 = vshrl.u32 %v234, 7
    %v236 = vsub.s32 0, %v235
    %v237 = vrot.slane %v227, %v236
    %v238 = vsel %vm233, %v237, %v226
    %v239 = vld [vmem:[%s2 + $0x11] sm:$0x1]
    %vm240 = vcmp.eq.s32.totalorder %v34, 17
    %v241 = vsel %vm240, 1, 0
    %242 = vset.pattern.permute.xlu0 0
    %243 = vperm.xlu0 %242, %v241
    %v244 = vpop.permute.xlu0 %243
    %vm245 = vcmp.eq.s32.totalorder %v244, 1
    %v246 = vlaneseq
    %v247 = vshrl.u32 %v246, 7
    %v248 = vsub.s32 0, %v247
    %v249 = vrot.slane %v239, %v248
    %v250 = vsel %vm245, %v249, %v238
    %v251 = vld [vmem:[%s2 + $0x12] sm:$0x1]
    %vm252 = vcmp.eq.s32.totalorder %v34, 18
    %v253 = vsel %vm252, 1, 0
    %254 = vset.pattern.permute.xlu0 0
    %255 = vperm.xlu0 %254, %v253
    %v256 = vpop.permute.xlu0 %255
    %vm257 = vcmp.eq.s32.totalorder %v256, 1
    %v258 = vlaneseq
    %v259 = vshrl.u32 %v258, 7
    %v260 = vsub.s32 0, %v259
    %v261 = vrot.slane %v251, %v260
    %v262 = vsel %vm257, %v261, %v250
    %v263 = vld [vmem:[%s2 + $0x13] sm:$0x1]
    %vm264 = vcmp.eq.s32.totalorder %v34, 19
    %v265 = vsel %vm264, 1, 0
    %266 = vset.pattern.permute.xlu0 0
    %267 = vperm.xlu0 %266, %v265
    %v268 = vpop.permute.xlu0 %267
    %vm269 = vcmp.eq.s32.totalorder %v268, 1
    %v270 = vlaneseq
    %v271 = vshrl.u32 %v270, 7
    %v272 = vsub.s32 0, %v271
    %v273 = vrot.slane %v263, %v272
    %v274 = vsel %vm269, %v273, %v262
    %v275 = vld [vmem:[%s2 + $0x14] sm:$0x1]
    %vm276 = vcmp.eq.s32.totalorder %v34, 20
    %v277 = vsel %vm276, 1, 0
    %278 = vset.pattern.permute.xlu0 0
    %279 = vperm.xlu0 %278, %v277
    %v280 = vpop.permute.xlu0 %279
    %vm281 = vcmp.eq.s32.totalorder %v280, 1
    %v282 = vlaneseq
    %v283 = vshrl.u32 %v282, 7
    %v284 = vsub.s32 0, %v283
    %v285 = vrot.slane %v275, %v284
    %v286 = vsel %vm281, %v285, %v274
    %v287 = vld [vmem:[%s2 + $0x15] sm:$0x1]
    %vm288 = vcmp.eq.s32.totalorder %v34, 21
    %v289 = vsel %vm288, 1, 0
    %290 = vset.pattern.permute.xlu0 0
    %291 = vperm.xlu0 %290, %v289
    %v292 = vpop.permute.xlu0 %291
    %vm293 = vcmp.eq.s32.totalorder %v292, 1
    %v294 = vlaneseq
    %v295 = vshrl.u32 %v294, 7
    %v296 = vsub.s32 0, %v295
    %v297 = vrot.slane %v287, %v296
    %v298 = vsel %vm293, %v297, %v286
    %v299 = vld [vmem:[%s2 + $0x16] sm:$0x1]
    %vm300 = vcmp.eq.s32.totalorder %v34, 22
    %v301 = vsel %vm300, 1, 0
    %302 = vset.pattern.permute.xlu0 0
    %303 = vperm.xlu0 %302, %v301
    %v304 = vpop.permute.xlu0 %303
    %vm305 = vcmp.eq.s32.totalorder %v304, 1
    %v306 = vlaneseq
    %v307 = vshrl.u32 %v306, 7
    %v308 = vsub.s32 0, %v307
    %v309 = vrot.slane %v299, %v308
    %v310 = vsel %vm305, %v309, %v298
    %v311 = vld [vmem:[%s2 + $0x17] sm:$0x1]
    %vm312 = vcmp.eq.s32.totalorder %v34, 23
    %v313 = vsel %vm312, 1, 0
    %314 = vset.pattern.permute.xlu0 0
    %315 = vperm.xlu0 %314, %v313
    %v316 = vpop.permute.xlu0 %315
    %vm317 = vcmp.eq.s32.totalorder %v316, 1
    %v318 = vlaneseq
    %v319 = vshrl.u32 %v318, 7
    %v320 = vsub.s32 0, %v319
    %v321 = vrot.slane %v311, %v320
    %v322 = vsel %vm317, %v321, %v310
    %v323 = vld [vmem:[%s2 + $0x18] sm:$0x1]
    %vm324 = vcmp.eq.s32.totalorder %v34, 24
    %v325 = vsel %vm324, 1, 0
    %326 = vset.pattern.permute.xlu0 0
    %327 = vperm.xlu0 %326, %v325
    %v328 = vpop.permute.xlu0 %327
    %vm329 = vcmp.eq.s32.totalorder %v328, 1
    %v330 = vlaneseq
    %v331 = vshrl.u32 %v330, 7
    %v332 = vsub.s32 0, %v331
    %v333 = vrot.slane %v323, %v332
    %v334 = vsel %vm329, %v333, %v322
    %v335 = vld [vmem:[%s2 + $0x19] sm:$0x1]
    %vm336 = vcmp.eq.s32.totalorder %v34, 25
    %v337 = vsel %vm336, 1, 0
    %338 = vset.pattern.permute.xlu0 0
    %339 = vperm.xlu0 %338, %v337
    %v340 = vpop.permute.xlu0 %339
    %vm341 = vcmp.eq.s32.totalorder %v340, 1
    %v342 = vlaneseq
    %v343 = vshrl.u32 %v342, 7
    %v344 = vsub.s32 0, %v343
    %v345 = vrot.slane %v335, %v344
    %v346 = vsel %vm341, %v345, %v334
    %v347 = vld [vmem:[%s2 + $0x1a] sm:$0x1]
    %vm348 = vcmp.eq.s32.totalorder %v34, 26
    %v349 = vsel %vm348, 1, 0
    %350 = vset.pattern.permute.xlu0 0
    %351 = vperm.xlu0 %350, %v349
    %v352 = vpop.permute.xlu0 %351
    %vm353 = vcmp.eq.s32.totalorder %v352, 1
    %v354 = vlaneseq
    %v355 = vshrl.u32 %v354, 7
    %v356 = vsub.s32 0, %v355
    %v357 = vrot.slane %v347, %v356
    %v358 = vsel %vm353, %v357, %v346
    %v359 = vld [vmem:[%s2 + $0x1b] sm:$0x1]
    %vm360 = vcmp.eq.s32.totalorder %v34, 27
    %v361 = vsel %vm360, 1, 0
    %362 = vset.pattern.permute.xlu0 0
    %363 = vperm.xlu0 %362, %v361
    %v364 = vpop.permute.xlu0 %363
    %vm365 = vcmp.eq.s32.totalorder %v364, 1
    %v366 = vlaneseq
    %v367 = vshrl.u32 %v366, 7
    %v368 = vsub.s32 0, %v367
    %v369 = vrot.slane %v359, %v368
    %v370 = vsel %vm365, %v369, %v358
    %v371 = vld [vmem:[%s2 + $0x1c] sm:$0x1]
    %vm372 = vcmp.eq.s32.totalorder %v34, 28
    %v373 = vsel %vm372, 1, 0
    %374 = vset.pattern.permute.xlu0 0
    %375 = vperm.xlu0 %374, %v373
    %v376 = vpop.permute.xlu0 %375
    %vm377 = vcmp.eq.s32.totalorder %v376, 1
    %v378 = vlaneseq
    %v379 = vshrl.u32 %v378, 7
    %v380 = vsub.s32 0, %v379
    %v381 = vrot.slane %v371, %v380
    %v382 = vsel %vm377, %v381, %v370
    %v383 = vld [vmem:[%s2 + $0x1d] sm:$0x1]
    %vm384 = vcmp.eq.s32.totalorder %v34, 29
    %v385 = vsel %vm384, 1, 0
    %386 = vset.pattern.permute.xlu0 0
    %387 = vperm.xlu0 %386, %v385
    %v388 = vpop.permute.xlu0 %387
    %vm389 = vcmp.eq.s32.totalorder %v388, 1
    %v390 = vlaneseq
    %v391 = vshrl.u32 %v390, 7
    %v392 = vsub.s32 0, %v391
    %v393 = vrot.slane %v383, %v392
    %v394 = vsel %vm389, %v393, %v382
    %v395 = vld [vmem:[%s2 + $0x1e] sm:$0x1]
    %vm396 = vcmp.eq.s32.totalorder %v34, 30
    %v397 = vsel %vm396, 1, 0
    %398 = vset.pattern.permute.xlu0 0
    %399 = vperm.xlu0 %398, %v397
    %v400 = vpop.permute.xlu0 %399
    %vm401 = vcmp.eq.s32.totalorder %v400, 1
    %v402 = vlaneseq
    %v403 = vshrl.u32 %v402, 7
    %v404 = vsub.s32 0, %v403
    %v405 = vrot.slane %v395, %v404
    %v406 = vsel %vm401, %v405, %v394
    %v407 = vld [vmem:[%s2 + $0x1f] sm:$0x1]
    %vm408 = vcmp.eq.s32.totalorder %v34, 31
    %v409 = vsel %vm408, 1, 0
    %410 = vset.pattern.permute.xlu0 0
    %411 = vperm.xlu0 %410, %v409
    %v412 = vpop.permute.xlu0 %411
    %vm413 = vcmp.eq.s32.totalorder %v412, 1
    %v414 = vlaneseq
    %v415 = vshrl.u32 %v414, 7
    %v416 = vsub.s32 0, %v415
    %v417 = vrot.slane %v407, %v416
    %v418 = vsel %vm413, %v417, %v406
    %v419 = vld [vmem:[%s2 + $0x20] sm:$0x1]
    %vm420 = vcmp.eq.s32.totalorder %v34, 32
    %v421 = vsel %vm420, 1, 0
    %422 = vset.pattern.permute.xlu0 0
    %423 = vperm.xlu0 %422, %v421
    %v424 = vpop.permute.xlu0 %423
    %vm425 = vcmp.eq.s32.totalorder %v424, 1
    %v426 = vlaneseq
    %v427 = vshrl.u32 %v426, 7
    %v428 = vsub.s32 0, %v427
    %v429 = vrot.slane %v419, %v428
    %v430 = vsel %vm425, %v429, %v418
    %v431 = vld [vmem:[%s2 + $0x21] sm:$0x1]
    %vm432 = vcmp.eq.s32.totalorder %v34, 33
    %v433 = vsel %vm432, 1, 0
    %434 = vset.pattern.permute.xlu0 0
    %435 = vperm.xlu0 %434, %v433
    %v436 = vpop.permute.xlu0 %435
    %vm437 = vcmp.eq.s32.totalorder %v436, 1
    %v438 = vlaneseq
    %v439 = vshrl.u32 %v438, 7
    %v440 = vsub.s32 0, %v439
    %v441 = vrot.slane %v431, %v440
    %v442 = vsel %vm437, %v441, %v430
    %v443 = vld [vmem:[%s2 + $0x22] sm:$0x1]
    %vm444 = vcmp.eq.s32.totalorder %v34, 34
    %v445 = vsel %vm444, 1, 0
    %446 = vset.pattern.permute.xlu0 0
    %447 = vperm.xlu0 %446, %v445
    %v448 = vpop.permute.xlu0 %447
    %vm449 = vcmp.eq.s32.totalorder %v448, 1
    %v450 = vlaneseq
    %v451 = vshrl.u32 %v450, 7
    %v452 = vsub.s32 0, %v451
    %v453 = vrot.slane %v443, %v452
    %v454 = vsel %vm449, %v453, %v442
    %v455 = vld [vmem:[%s2 + $0x23] sm:$0x1]
    %vm456 = vcmp.eq.s32.totalorder %v34, 35
    %v457 = vsel %vm456, 1, 0
    %458 = vset.pattern.permute.xlu0 0
    %459 = vperm.xlu0 %458, %v457
    %v460 = vpop.permute.xlu0 %459
    %vm461 = vcmp.eq.s32.totalorder %v460, 1
    %v462 = vlaneseq
    %v463 = vshrl.u32 %v462, 7
    %v464 = vsub.s32 0, %v463
    %v465 = vrot.slane %v455, %v464
    %v466 = vsel %vm461, %v465, %v454
    %v467 = vld [vmem:[%s2 + $0x24] sm:$0x1]
    %vm468 = vcmp.eq.s32.totalorder %v34, 36
    %v469 = vsel %vm468, 1, 0
    %470 = vset.pattern.permute.xlu0 0
    %471 = vperm.xlu0 %470, %v469
    %v472 = vpop.permute.xlu0 %471
    %vm473 = vcmp.eq.s32.totalorder %v472, 1
    %v474 = vlaneseq
    %v475 = vshrl.u32 %v474, 7
    %v476 = vsub.s32 0, %v475
    %v477 = vrot.slane %v467, %v476
    %v478 = vsel %vm473, %v477, %v466
    %v479 = vld [vmem:[%s2 + $0x25] sm:$0x1]
    %vm480 = vcmp.eq.s32.totalorder %v34, 37
    %v481 = vsel %vm480, 1, 0
    %482 = vset.pattern.permute.xlu0 0
    %483 = vperm.xlu0 %482, %v481
    %v484 = vpop.permute.xlu0 %483
    %vm485 = vcmp.eq.s32.totalorder %v484, 1
    %v486 = vlaneseq
    %v487 = vshrl.u32 %v486, 7
    %v488 = vsub.s32 0, %v487
    %v489 = vrot.slane %v479, %v488
    %v490 = vsel %vm485, %v489, %v478
    %v491 = vld [vmem:[%s2 + $0x26] sm:$0x1]
    %vm492 = vcmp.eq.s32.totalorder %v34, 38
    %v493 = vsel %vm492, 1, 0
    %494 = vset.pattern.permute.xlu0 0
    %495 = vperm.xlu0 %494, %v493
    %v496 = vpop.permute.xlu0 %495
    %vm497 = vcmp.eq.s32.totalorder %v496, 1
    %v498 = vlaneseq
    %v499 = vshrl.u32 %v498, 7
    %v500 = vsub.s32 0, %v499
    %v501 = vrot.slane %v491, %v500
    %v502 = vsel %vm497, %v501, %v490
    %v503 = vld [vmem:[%s2 + $0x27] sm:$0x1]
    %vm504 = vcmp.eq.s32.totalorder %v34, 39
    %v505 = vsel %vm504, 1, 0
    %506 = vset.pattern.permute.xlu0 0
    %507 = vperm.xlu0 %506, %v505
    %v508 = vpop.permute.xlu0 %507
    %vm509 = vcmp.eq.s32.totalorder %v508, 1
    %v510 = vlaneseq
    %v511 = vshrl.u32 %v510, 7
    %v512 = vsub.s32 0, %v511
    %v513 = vrot.slane %v503, %v512
    %v514 = vsel %vm509, %v513, %v502
    %v515 = vld [vmem:[%s2 + $0x28] sm:$0x1]
    %vm516 = vcmp.eq.s32.totalorder %v34, 40
    %v517 = vsel %vm516, 1, 0
    %518 = vset.pattern.permute.xlu0 0
    %519 = vperm.xlu0 %518, %v517
    %v520 = vpop.permute.xlu0 %519
    %vm521 = vcmp.eq.s32.totalorder %v520, 1
    %v522 = vlaneseq
    %v523 = vshrl.u32 %v522, 7
    %v524 = vsub.s32 0, %v523
    %v525 = vrot.slane %v515, %v524
    %v526 = vsel %vm521, %v525, %v514
    %v527 = vld [vmem:[%s2 + $0x29] sm:$0x1]
    %vm528 = vcmp.eq.s32.totalorder %v34, 41
    %v529 = vsel %vm528, 1, 0
    %530 = vset.pattern.permute.xlu0 0
    %531 = vperm.xlu0 %530, %v529
    %v532 = vpop.permute.xlu0 %531
    %vm533 = vcmp.eq.s32.totalorder %v532, 1
    %v534 = vlaneseq
    %v535 = vshrl.u32 %v534, 7
    %v536 = vsub.s32 0, %v535
    %v537 = vrot.slane %v527, %v536
    %v538 = vsel %vm533, %v537, %v526
    %v539 = vld [vmem:[%s2 + $0x2a] sm:$0x1]
    %vm540 = vcmp.eq.s32.totalorder %v34, 42
    %v541 = vsel %vm540, 1, 0
    %542 = vset.pattern.permute.xlu0 0
    %543 = vperm.xlu0 %542, %v541
    %v544 = vpop.permute.xlu0 %543
    %vm545 = vcmp.eq.s32.totalorder %v544, 1
    %v546 = vlaneseq
    %v547 = vshrl.u32 %v546, 7
    %v548 = vsub.s32 0, %v547
    %v549 = vrot.slane %v539, %v548
    %v550 = vsel %vm545, %v549, %v538
    %v551 = vld [vmem:[%s2 + $0x2b] sm:$0x1]
    %vm552 = vcmp.eq.s32.totalorder %v34, 43
    %v553 = vsel %vm552, 1, 0
    %554 = vset.pattern.permute.xlu0 0
    %555 = vperm.xlu0 %554, %v553
    %v556 = vpop.permute.xlu0 %555
    %vm557 = vcmp.eq.s32.totalorder %v556, 1
    %v558 = vlaneseq
    %v559 = vshrl.u32 %v558, 7
    %v560 = vsub.s32 0, %v559
    %v561 = vrot.slane %v551, %v560
    %v562 = vsel %vm557, %v561, %v550
    %v563 = vld [vmem:[%s2 + $0x2c] sm:$0x1]
    %vm564 = vcmp.eq.s32.totalorder %v34, 44
    %v565 = vsel %vm564, 1, 0
    %566 = vset.pattern.permute.xlu0 0
    %567 = vperm.xlu0 %566, %v565
    %v568 = vpop.permute.xlu0 %567
    %vm569 = vcmp.eq.s32.totalorder %v568, 1
    %v570 = vlaneseq
    %v571 = vshrl.u32 %v570, 7
    %v572 = vsub.s32 0, %v571
    %v573 = vrot.slane %v563, %v572
    %v574 = vsel %vm569, %v573, %v562
    %v575 = vld [vmem:[%s2 + $0x2d] sm:$0x1]
    %vm576 = vcmp.eq.s32.totalorder %v34, 45
    %v577 = vsel %vm576, 1, 0
    %578 = vset.pattern.permute.xlu0 0
    %579 = vperm.xlu0 %578, %v577
    %v580 = vpop.permute.xlu0 %579
    %vm581 = vcmp.eq.s32.totalorder %v580, 1
    %v582 = vlaneseq
    %v583 = vshrl.u32 %v582, 7
    %v584 = vsub.s32 0, %v583
    %v585 = vrot.slane %v575, %v584
    %v586 = vsel %vm581, %v585, %v574
    %v587 = vld [vmem:[%s2 + $0x2e] sm:$0x1]
    %vm588 = vcmp.eq.s32.totalorder %v34, 46
    %v589 = vsel %vm588, 1, 0
    %590 = vset.pattern.permute.xlu0 0
    %591 = vperm.xlu0 %590, %v589
    %v592 = vpop.permute.xlu0 %591
    %vm593 = vcmp.eq.s32.totalorder %v592, 1
    %v594 = vlaneseq
    %v595 = vshrl.u32 %v594, 7
    %v596 = vsub.s32 0, %v595
    %v597 = vrot.slane %v587, %v596
    %v598 = vsel %vm593, %v597, %v586
    %v599 = vld [vmem:[%s2 + $0x2f] sm:$0x1]
    %vm600 = vcmp.eq.s32.totalorder %v34, 47
    %v601 = vsel %vm600, 1, 0
    %602 = vset.pattern.permute.xlu0 0
    %603 = vperm.xlu0 %602, %v601
    %v604 = vpop.permute.xlu0 %603
    %vm605 = vcmp.eq.s32.totalorder %v604, 1
    %v606 = vlaneseq
    %v607 = vshrl.u32 %v606, 7
    %v608 = vsub.s32 0, %v607
    %v609 = vrot.slane %v599, %v608
    %v610 = vsel %vm605, %v609, %v598
    %v611 = vld [vmem:[%s2 + $0x30] sm:$0x1]
    %vm612 = vcmp.eq.s32.totalorder %v34, 48
    %v613 = vsel %vm612, 1, 0
    %614 = vset.pattern.permute.xlu0 0
    %615 = vperm.xlu0 %614, %v613
    %v616 = vpop.permute.xlu0 %615
    %vm617 = vcmp.eq.s32.totalorder %v616, 1
    %v618 = vlaneseq
    %v619 = vshrl.u32 %v618, 7
    %v620 = vsub.s32 0, %v619
    %v621 = vrot.slane %v611, %v620
    %v622 = vsel %vm617, %v621, %v610
    %v623 = vld [vmem:[%s2 + $0x31] sm:$0x1]
    %vm624 = vcmp.eq.s32.totalorder %v34, 49
    %v625 = vsel %vm624, 1, 0
    %626 = vset.pattern.permute.xlu0 0
    %627 = vperm.xlu0 %626, %v625
    %v628 = vpop.permute.xlu0 %627
    %vm629 = vcmp.eq.s32.totalorder %v628, 1
    %v630 = vlaneseq
    %v631 = vshrl.u32 %v630, 7
    %v632 = vsub.s32 0, %v631
    %v633 = vrot.slane %v623, %v632
    %v634 = vsel %vm629, %v633, %v622
    %v635 = vld [vmem:[%s2 + $0x32] sm:$0x1]
    %vm636 = vcmp.eq.s32.totalorder %v34, 50
    %v637 = vsel %vm636, 1, 0
    %638 = vset.pattern.permute.xlu0 0
    %639 = vperm.xlu0 %638, %v637
    %v640 = vpop.permute.xlu0 %639
    %vm641 = vcmp.eq.s32.totalorder %v640, 1
    %v642 = vlaneseq
    %v643 = vshrl.u32 %v642, 7
    %v644 = vsub.s32 0, %v643
    %v645 = vrot.slane %v635, %v644
    %v646 = vsel %vm641, %v645, %v634
    %v647 = vld [vmem:[%s2 + $0x33] sm:$0x1]
    %vm648 = vcmp.eq.s32.totalorder %v34, 51
    %v649 = vsel %vm648, 1, 0
    %650 = vset.pattern.permute.xlu0 0
    %651 = vperm.xlu0 %650, %v649
    %v652 = vpop.permute.xlu0 %651
    %vm653 = vcmp.eq.s32.totalorder %v652, 1
    %v654 = vlaneseq
    %v655 = vshrl.u32 %v654, 7
    %v656 = vsub.s32 0, %v655
    %v657 = vrot.slane %v647, %v656
    %v658 = vsel %vm653, %v657, %v646
    %v659 = vld [vmem:[%s2 + $0x34] sm:$0x1]
    %vm660 = vcmp.eq.s32.totalorder %v34, 52
    %v661 = vsel %vm660, 1, 0
    %662 = vset.pattern.permute.xlu0 0
    %663 = vperm.xlu0 %662, %v661
    %v664 = vpop.permute.xlu0 %663
    %vm665 = vcmp.eq.s32.totalorder %v664, 1
    %v666 = vlaneseq
    %v667 = vshrl.u32 %v666, 7
    %v668 = vsub.s32 0, %v667
    %v669 = vrot.slane %v659, %v668
    %v670 = vsel %vm665, %v669, %v658
    %v671 = vld [vmem:[%s2 + $0x35] sm:$0x1]
    %vm672 = vcmp.eq.s32.totalorder %v34, 53
    %v673 = vsel %vm672, 1, 0
    %674 = vset.pattern.permute.xlu0 0
    %675 = vperm.xlu0 %674, %v673
    %v676 = vpop.permute.xlu0 %675
    %vm677 = vcmp.eq.s32.totalorder %v676, 1
    %v678 = vlaneseq
    %v679 = vshrl.u32 %v678, 7
    %v680 = vsub.s32 0, %v679
    %v681 = vrot.slane %v671, %v680
    %v682 = vsel %vm677, %v681, %v670
    %v683 = vld [vmem:[%s2 + $0x36] sm:$0x1]
    %vm684 = vcmp.eq.s32.totalorder %v34, 54
    %v685 = vsel %vm684, 1, 0
    %686 = vset.pattern.permute.xlu0 0
    %687 = vperm.xlu0 %686, %v685
    %v688 = vpop.permute.xlu0 %687
    %vm689 = vcmp.eq.s32.totalorder %v688, 1
    %v690 = vlaneseq
    %v691 = vshrl.u32 %v690, 7
    %v692 = vsub.s32 0, %v691
    %v693 = vrot.slane %v683, %v692
    %v694 = vsel %vm689, %v693, %v682
    %v695 = vld [vmem:[%s2 + $0x37] sm:$0x1]
    %vm696 = vcmp.eq.s32.totalorder %v34, 55
    %v697 = vsel %vm696, 1, 0
    %698 = vset.pattern.permute.xlu0 0
    %699 = vperm.xlu0 %698, %v697
    %v700 = vpop.permute.xlu0 %699
    %vm701 = vcmp.eq.s32.totalorder %v700, 1
    %v702 = vlaneseq
    %v703 = vshrl.u32 %v702, 7
    %v704 = vsub.s32 0, %v703
    %v705 = vrot.slane %v695, %v704
    %v706 = vsel %vm701, %v705, %v694
    %v707 = vld [vmem:[%s2 + $0x38] sm:$0x1]
    %vm708 = vcmp.eq.s32.totalorder %v34, 56
    %v709 = vsel %vm708, 1, 0
    %710 = vset.pattern.permute.xlu0 0
    %711 = vperm.xlu0 %710, %v709
    %v712 = vpop.permute.xlu0 %711
    %vm713 = vcmp.eq.s32.totalorder %v712, 1
    %v714 = vlaneseq
    %v715 = vshrl.u32 %v714, 7
    %v716 = vsub.s32 0, %v715
    %v717 = vrot.slane %v707, %v716
    %v718 = vsel %vm713, %v717, %v706
    %v719 = vld [vmem:[%s2 + $0x39] sm:$0x1]
    %vm720 = vcmp.eq.s32.totalorder %v34, 57
    %v721 = vsel %vm720, 1, 0
    %722 = vset.pattern.permute.xlu0 0
    %723 = vperm.xlu0 %722, %v721
    %v724 = vpop.permute.xlu0 %723
    %vm725 = vcmp.eq.s32.totalorder %v724, 1
    %v726 = vlaneseq
    %v727 = vshrl.u32 %v726, 7
    %v728 = vsub.s32 0, %v727
    %v729 = vrot.slane %v719, %v728
    %v730 = vsel %vm725, %v729, %v718
    %v731 = vld [vmem:[%s2 + $0x3a] sm:$0x1]
    %vm732 = vcmp.eq.s32.totalorder %v34, 58
    %v733 = vsel %vm732, 1, 0
    %734 = vset.pattern.permute.xlu0 0
    %735 = vperm.xlu0 %734, %v733
    %v736 = vpop.permute.xlu0 %735
    %vm737 = vcmp.eq.s32.totalorder %v736, 1
    %v738 = vlaneseq
    %v739 = vshrl.u32 %v738, 7
    %v740 = vsub.s32 0, %v739
    %v741 = vrot.slane %v731, %v740
    %v742 = vsel %vm737, %v741, %v730
    %v743 = vld [vmem:[%s2 + $0x3b] sm:$0x1]
    %vm744 = vcmp.eq.s32.totalorder %v34, 59
    %v745 = vsel %vm744, 1, 0
    %746 = vset.pattern.permute.xlu0 0
    %747 = vperm.xlu0 %746, %v745
    %v748 = vpop.permute.xlu0 %747
    %vm749 = vcmp.eq.s32.totalorder %v748, 1
    %v750 = vlaneseq
    %v751 = vshrl.u32 %v750, 7
    %v752 = vsub.s32 0, %v751
    %v753 = vrot.slane %v743, %v752
    %v754 = vsel %vm749, %v753, %v742
    %v755 = vld [vmem:[%s2 + $0x3c] sm:$0x1]
    %vm756 = vcmp.eq.s32.totalorder %v34, 60
    %v757 = vsel %vm756, 1, 0
    %758 = vset.pattern.permute.xlu0 0
    %759 = vperm.xlu0 %758, %v757
    %v760 = vpop.permute.xlu0 %759
    %vm761 = vcmp.eq.s32.totalorder %v760, 1
    %v762 = vlaneseq
    %v763 = vshrl.u32 %v762, 7
    %v764 = vsub.s32 0, %v763
    %v765 = vrot.slane %v755, %v764
    %v766 = vsel %vm761, %v765, %v754
    %v767 = vld [vmem:[%s2 + $0x3d] sm:$0x1]
    %vm768 = vcmp.eq.s32.totalorder %v34, 61
    %v769 = vsel %vm768, 1, 0
    %770 = vset.pattern.permute.xlu0 0
    %771 = vperm.xlu0 %770, %v769
    %v772 = vpop.permute.xlu0 %771
    %vm773 = vcmp.eq.s32.totalorder %v772, 1
    %v774 = vlaneseq
    %v775 = vshrl.u32 %v774, 7
    %v776 = vsub.s32 0, %v775
    %v777 = vrot.slane %v767, %v776
    %v778 = vsel %vm773, %v777, %v766
    %v779 = vld [vmem:[%s2 + $0x3e] sm:$0x1]
    %vm780 = vcmp.eq.s32.totalorder %v34, 62
    %v781 = vsel %vm780, 1, 0
    %782 = vset.pattern.permute.xlu0 0
    %783 = vperm.xlu0 %782, %v781
    %v784 = vpop.permute.xlu0 %783
    %vm785 = vcmp.eq.s32.totalorder %v784, 1
    %v786 = vlaneseq
    %v787 = vshrl.u32 %v786, 7
    %v788 = vsub.s32 0, %v787
    %v789 = vrot.slane %v779, %v788
    %v790 = vsel %vm785, %v789, %v778
    %v791 = vld [vmem:[%s2 + $0x3f] sm:$0x1]
    %vm792 = vcmp.eq.s32.totalorder %v34, 63
    %v793 = vsel %vm792, 1, 0
    %794 = vset.pattern.permute.xlu0 0
    %795 = vperm.xlu0 %794, %v793
    %v796 = vpop.permute.xlu0 %795
    %vm797 = vcmp.eq.s32.totalorder %v796, 1
    %v798 = vlaneseq
    %v799 = vshrl.u32 %v798, 7
    %v800 = vsub.s32 0, %v799
    %v801 = vrot.slane %v791, %v800
    %v802 = vsel %vm797, %v801, %v790
    %vm803 = vcmask 261120
    %804 = vst.msk [vmem:[#allocation5] sm:$0xff] %vm803, %v802
    %v805 = vld [vmem:[%s0] sm:$0xff]
    %v806 = vld [vmem:[%s3] sm:$0x1]
    %vm807 = vcmp.eq.s32.totalorder %v805, 0
    %v808 = vsel %vm807, 1, 0
    %809 = vset.pattern.permute.xlu0 1
    %810 = vperm.xlu0 %809, %v808
    %v811 = vpop.permute.xlu0 %810
    %vm812 = vcmp.eq.s32.totalorder %v811, 1
    %v813 = vlaneseq
    %v814 = vshrl.u32 %v813, 7
    %v815 = vsub.s32 0, %v814
    %v816 = vrot.slane %v806, %v815
    %v817 = vsel %vm812, %v816, 0.0
    %v818 = vld [vmem:[%s3 + $0x1] sm:$0x1]
    %vm819 = vcmp.eq.s32.totalorder %v805, 1
    %v820 = vsel %vm819, 1, 0
    %821 = vset.pattern.permute.xlu0 1
    %822 = vperm.xlu0 %821, %v820
    %v823 = vpop.permute.xlu0 %822
    %vm824 = vcmp.eq.s32.totalorder %v823, 1
    %v825 = vlaneseq
    %v826 = vshrl.u32 %v825, 7
    %v827 = vsub.s32 0, %v826
    %v828 = vrot.slane %v818, %v827
    %v829 = vsel %vm824, %v828, %v817
    %831 = vrot.lane.b32.xlu0 %v829, 32
    %v832 = vpop.permute.xlu0 %831
    %vm834 = vcmask 523520
    %835 = vst.msk [vmem:[#allocation5] sm:$0xff] %vm834, %v832
    %v836 = vld [vmem:[%s0] sm:$0xff]
    %v837 = vld [vmem:[%s4] sm:$0x1]
    %vm838 = vcmp.eq.s32.totalorder %v836, 0
    %v839 = vsel %vm838, 1, 0
    %840 = vset.pattern.permute.xlu0 2
    %841 = vperm.xlu0 %840, %v839
    %v842 = vpop.permute.xlu0 %841
    %vm843 = vcmp.eq.s32.totalorder %v842, 1
    %v844 = vlaneseq
    %v845 = vshrl.u32 %v844, 7
    %v846 = vsub.s32 0, %v845
    %v847 = vrot.slane %v837, %v846
    %v848 = vsel %vm843, %v847, 0.0
    %v849 = vld [vmem:[%s4 + $0x1] sm:$0x1]
    %vm850 = vcmp.eq.s32.totalorder %v836, 1
    %v851 = vsel %vm850, 1, 0
    %852 = vset.pattern.permute.xlu0 2
    %853 = vperm.xlu0 %852, %v851
    %v854 = vpop.permute.xlu0 %853
    %vm855 = vcmp.eq.s32.totalorder %v854, 1
    %v856 = vlaneseq
    %v857 = vshrl.u32 %v856, 7
    %v858 = vsub.s32 0, %v857
    %v859 = vrot.slane %v849, %v858
    %v860 = vsel %vm855, %v859, %v848
    %v861 = vld [vmem:[%s4 + $0x2] sm:$0x1]
    %vm862 = vcmp.eq.s32.totalorder %v836, 2
    %v863 = vsel %vm862, 1, 0
    %864 = vset.pattern.permute.xlu0 2
    %865 = vperm.xlu0 %864, %v863
    %v866 = vpop.permute.xlu0 %865
    %vm867 = vcmp.eq.s32.totalorder %v866, 1
    %v868 = vlaneseq
    %v869 = vshrl.u32 %v868, 7
    %v870 = vsub.s32 0, %v869
    %v871 = vrot.slane %v861, %v870
    %v872 = vsel %vm867, %v871, %v860
    %v873 = vld [vmem:[%s4 + $0x3] sm:$0x1]
    %vm874 = vcmp.eq.s32.totalorder %v836, 3
    %v875 = vsel %vm874, 1, 0
    %876 = vset.pattern.permute.xlu0 2
    %877 = vperm.xlu0 %876, %v875
    %v878 = vpop.permute.xlu0 %877
    %vm879 = vcmp.eq.s32.totalorder %v878, 1
    %v880 = vlaneseq
    %v881 = vshrl.u32 %v880, 7
    %v882 = vsub.s32 0, %v881
    %v883 = vrot.slane %v873, %v882
    %v884 = vsel %vm879, %v883, %v872
    %v885 = vld [vmem:[%s4 + $0x4] sm:$0x1]
    %vm886 = vcmp.eq.s32.totalorder %v836, 4
    %v887 = vsel %vm886, 1, 0
    %888 = vset.pattern.permute.xlu0 2
    %889 = vperm.xlu0 %888, %v887
    %v890 = vpop.permute.xlu0 %889
    %vm891 = vcmp.eq.s32.totalorder %v890, 1
    %v892 = vlaneseq
    %v893 = vshrl.u32 %v892, 7
    %v894 = vsub.s32 0, %v893
    %v895 = vrot.slane %v885, %v894
    %v896 = vsel %vm891, %v895, %v884
    %v897 = vld [vmem:[%s4 + $0x5] sm:$0x1]
    %vm898 = vcmp.eq.s32.totalorder %v836, 5
    %v899 = vsel %vm898, 1, 0
    %900 = vset.pattern.permute.xlu0 2
    %901 = vperm.xlu0 %900, %v899
    %v902 = vpop.permute.xlu0 %901
    %vm903 = vcmp.eq.s32.totalorder %v902, 1
    %v904 = vlaneseq
    %v905 = vshrl.u32 %v904, 7
    %v906 = vsub.s32 0, %v905
    %v907 = vrot.slane %v897, %v906
    %v908 = vsel %vm903, %v907, %v896
    %v909 = vld [vmem:[%s4 + $0x6] sm:$0x1]
    %vm910 = vcmp.eq.s32.totalorder %v836, 6
    %v911 = vsel %vm910, 1, 0
    %912 = vset.pattern.permute.xlu0 2
    %913 = vperm.xlu0 %912, %v911
    %v914 = vpop.permute.xlu0 %913
    %vm915 = vcmp.eq.s32.totalorder %v914, 1
    %v916 = vlaneseq
    %v917 = vshrl.u32 %v916, 7
    %v918 = vsub.s32 0, %v917
    %v919 = vrot.slane %v909, %v918
    %v920 = vsel %vm915, %v919, %v908
    %v921 = vld [vmem:[%s4 + $0x7] sm:$0x1]
    %vm922 = vcmp.eq.s32.totalorder %v836, 7
    %v923 = vsel %vm922, 1, 0
    %924 = vset.pattern.permute.xlu0 2
    %925 = vperm.xlu0 %924, %v923
    %v926 = vpop.permute.xlu0 %925
    %vm927 = vcmp.eq.s32.totalorder %v926, 1
    %v928 = vlaneseq
    %v929 = vshrl.u32 %v928, 7
    %v930 = vsub.s32 0, %v929
    %v931 = vrot.slane %v921, %v930
    %v932 = vsel %vm927, %v931, %v920
    %934 = vrot.lane.b32.xlu0 %v932, 64
    %v935 = vpop.permute.xlu0 %934
    %vm937 = vcmask 785920
    %938 = vst.msk [vmem:[#allocation5] sm:$0xff] %vm937, %v935
    // Predicated region
    $region26: #{tpu_custom_call.1} parent=1 // pred_check
      _
    $region27: #{tpu_custom_call.1} parent=1 // pred_check_branch
      %940 = sbr.rel (0) target = $region29
    $region28: #{tpu_custom_call.1} parent=1 // pred_region
      %s942 = ssub.s32 128, 128
      %943 = vsyncadd [#allocation3], %s942
      %s945 = sshll.u32 [#allocation5], 4
      %s946 = int_to_ptr.vmem [resolvable:$true] %s945
      %948 = dma.vmem_to_hbm [thread:$0]  %s946, 128, %s5, [#allocation3]
    $region29: #{tpu_custom_call.1} parent=1 // pred_fallthru
      _
    // Predicated region
    $region30: #{tpu_custom_call.1} parent=1 // pred_check
      _
    $region31: #{tpu_custom_call.1} parent=1 // pred_check_branch
      %950 = sbr.rel (0) target = $region33
    $region32: #{tpu_custom_call.1} parent=1 // pred_region
      %951 = dma.done [#allocation3], 128
    $region33: #{tpu_custom_call.1} parent=1 // pred_fallthru
      _
    %952 = vsyncpa [#allocation3], 1
    %953 = vsyncpa [#allocation4], 1

// kernel: tpu_custom_call.1
$region0: #{tpu_custom_call.1}
  #allocation0 [shape = 'u32[]', space=smem, size = 0x4, offset = 0x4, fixed_abs, tag = 'smem constant byte address 0x4 - core index']
  #allocation1 [shape = 'u32[144,128]{1,0:T(1,128)}', space=vmem, size = 0x12000, scoped, tag = 'internal scratch']
  %s0 = inlined_call_operand.vmem [shape: s32[8,3], index: 0, kind: input, shape index: {}]
  %s1 = inlined_call_operand.vmem [shape: s32[24], index: 1, kind: input, shape index: {}]
  %s2 = inlined_call_operand.vmem [shape: f32[64,32], index: 2, kind: input, shape index: {}]
  %s3 = inlined_call_operand.vmem [shape: f32[2,32], index: 3, kind: input, shape index: {}]
  %s4 = inlined_call_operand.vmem [shape: f32[8,32], index: 4, kind: input, shape index: {}]
  %s5 = inlined_call_operand.hbm [shape: f32[8,96], index: 5, kind: output, shape index: {}]
  %s6 = sld [smem:[#allocation0]]
  $region34: #{tpu_custom_call.1} parent=0
    _
  %s8 = ssub.s32 1, %s6
  %s9 = scalar_select 0, %s8, %s6
  $region1: #{tpu_custom_call.1} parent=0
    #allocation2 [shape = 'u8[512]{0}', space=smem, size = 0x200, scoped, tag = 'input window, operand 1, single buffered']
    #allocation3 [shape = 's32[1]{0}', space=sflag, size = 0x4, scoped, tag = 'scoped memory for tpu_custom_call.1']
    #allocation4 [shape = 's32[1]{0}', space=sflag, size = 0x4, scoped, tag = 'scoped memory for tpu_custom_call.1']
    #allocation5 [shape = 'u8[4096]{0}', space=vmem, size = 0x1000, scoped, tag = 'output window, operand 0, single buffered']
    %10 = vsyncpa [#allocation4], 0
    %11 = vsyncpa [#allocation3], 0
    // Predicated region
    $region2: #{tpu_custom_call.1} parent=1 // pred_check
      _
    $region3: #{tpu_custom_call.1} parent=1 // pred_check_branch
      %13 = sbr.rel (0) target = $region5
    $region4: #{tpu_custom_call.1} parent=1 // pred_region
      _
    $region5: #{tpu_custom_call.1} parent=1 // pred_fallthru
      _
    // Predicated region
    $region6: #{tpu_custom_call.1} parent=1 // pred_check
      _
    $region7: #{tpu_custom_call.1} parent=1 // pred_check_branch
      %15 = sbr.rel (0) target = $region9
    $region8: #{tpu_custom_call.1} parent=1 // pred_region
      %s17 = ssub.s32 16, 16
      %18 = vsyncadd [#allocation4], %s17
      %s20 = sshll.u32 %s1, 4
      %s21 = int_to_ptr.vmem [resolvable:$true] %s20
      %23 = dma.vmem_to_smem %s21, 16, [#allocation2], [#allocation4]
    $region9: #{tpu_custom_call.1} parent=1 // pred_fallthru
      _
    // Predicated region
    $region10: #{tpu_custom_call.1} parent=1 // pred_check
      _
    $region11: #{tpu_custom_call.1} parent=1 // pred_check_branch
      %25 = sbr.rel (0) target = $region13
    $region12: #{tpu_custom_call.1} parent=1 // pred_region
      _
    $region13: #{tpu_custom_call.1} parent=1 // pred_fallthru
      _
    // Predicated region
    $region14: #{tpu_custom_call.1} parent=1 // pred_check
      _
    $region15: #{tpu_custom_call.1} parent=1 // pred_check_branch
      %27 = sbr.rel (0) target = $region17
    $region16: #{tpu_custom_call.1} parent=1 // pred_region
      _
    $region17: #{tpu_custom_call.1} parent=1 // pred_fallthru
      _
    // Predicated region
    $region18: #{tpu_custom_call.1} parent=1 // pred_check
      _
    $region19: #{tpu_custom_call.1} parent=1 // pred_check_branch
      %29 = sbr.rel (0) target = $region21
    $region20: #{tpu_custom_call.1} parent=1 // pred_region
      _
    $region21: #{tpu_custom_call.1} parent=1 // pred_fallthru
      _
    // Predicated region
    $region22: #{tpu_custom_call.1} parent=1 // pred_check
      _
    $region23: #{tpu_custom_call.1} parent=1 // pred_check_branch
      %31 = sbr.rel (0) target = $region25
    $region24: #{tpu_custom_call.1} parent=1 // pred_region
      %32 = dma.done [#allocation4], 16
    $region25: #{tpu_custom_call.1} parent=1 // pred_fallthru
      _
    %33 = sfence
    %v34 = vld [vmem:[%s0] sm:$0xff]
    %v35 = vld [vmem:[%s2] sm:$0x1]
    %vm36 = vcmp.eq.s32.totalorder %v34, 0
    %v37 = vsel %vm36, 1, 0
    %38 = vset.pattern.permute.xlu0 0
    %39 = vperm.xlu0 %38, %v37
    %v40 = vpop.permute.xlu0 %39
    %vm41 = vcmp.eq.s32.totalorder %v40, 1
    %v42 = vlaneseq
    %v43 = vshrl.u32 %v42, 7
    %v44 = vsub.s32 0, %v43
    %v45 = vrot.slane %v35, %v44
    %v46 = vsel %vm41, %v45, 0.0
    %v47 = vld [vmem:[%s2 + $0x1] sm:$0x1]
    %vm48 = vcmp.eq.s32.totalorder %v34, 1
    %v49 = vsel %vm48, 1, 0
    %50 = vset.pattern.permute.xlu0 0
    %51 = vperm.xlu0 %50, %v49
    %v52 = vpop.permute.xlu0 %51
    %vm53 = vcmp.eq.s32.totalorder %v52, 1
    %v54 = vlaneseq
    %v55 = vshrl.u32 %v54, 7
    %v56 = vsub.s32 0, %v55
    %v57 = vrot.slane %v47, %v56
    %v58 = vsel %vm53, %v57, %v46
    %v59 = vld [vmem:[%s2 + $0x2] sm:$0x1]
    %vm60 = vcmp.eq.s32.totalorder %v34, 2
    %v61 = vsel %vm60, 1, 0
    %62 = vset.pattern.permute.xlu0 0
    %63 = vperm.xlu0 %62, %v61
    %v64 = vpop.permute.xlu0 %63
    %vm65 = vcmp.eq.s32.totalorder %v64, 1
    %v66 = vlaneseq
    %v67 = vshrl.u32 %v66, 7
    %v68 = vsub.s32 0, %v67
    %v69 = vrot.slane %v59, %v68
    %v70 = vsel %vm65, %v69, %v58
    %v71 = vld [vmem:[%s2 + $0x3] sm:$0x1]
    %vm72 = vcmp.eq.s32.totalorder %v34, 3
    %v73 = vsel %vm72, 1, 0
    %74 = vset.pattern.permute.xlu0 0
    %75 = vperm.xlu0 %74, %v73
    %v76 = vpop.permute.xlu0 %75
    %vm77 = vcmp.eq.s32.totalorder %v76, 1
    %v78 = vlaneseq
    %v79 = vshrl.u32 %v78, 7
    %v80 = vsub.s32 0, %v79
    %v81 = vrot.slane %v71, %v80
    %v82 = vsel %vm77, %v81, %v70
    %v83 = vld [vmem:[%s2 + $0x4] sm:$0x1]
    %vm84 = vcmp.eq.s32.totalorder %v34, 4
    %v85 = vsel %vm84, 1, 0
    %86 = vset.pattern.permute.xlu0 0
    %87 = vperm.xlu0 %86, %v85
    %v88 = vpop.permute.xlu0 %87
    %vm89 = vcmp.eq.s32.totalorder %v88, 1
    %v90 = vlaneseq
    %v91 = vshrl.u32 %v90, 7
    %v92 = vsub.s32 0, %v91
    %v93 = vrot.slane %v83, %v92
    %v94 = vsel %vm89, %v93, %v82
    %v95 = vld [vmem:[%s2 + $0x5] sm:$0x1]
    %vm96 = vcmp.eq.s32.totalorder %v34, 5
    %v97 = vsel %vm96, 1, 0
    %98 = vset.pattern.permute.xlu0 0
    %99 = vperm.xlu0 %98, %v97
    %v100 = vpop.permute.xlu0 %99
    %vm101 = vcmp.eq.s32.totalorder %v100, 1
    %v102 = vlaneseq
    %v103 = vshrl.u32 %v102, 7
    %v104 = vsub.s32 0, %v103
    %v105 = vrot.slane %v95, %v104
    %v106 = vsel %vm101, %v105, %v94
    %v107 = vld [vmem:[%s2 + $0x6] sm:$0x1]
    %vm108 = vcmp.eq.s32.totalorder %v34, 6
    %v109 = vsel %vm108, 1, 0
    %110 = vset.pattern.permute.xlu0 0
    %111 = vperm.xlu0 %110, %v109
    %v112 = vpop.permute.xlu0 %111
    %vm113 = vcmp.eq.s32.totalorder %v112, 1
    %v114 = vlaneseq
    %v115 = vshrl.u32 %v114, 7
    %v116 = vsub.s32 0, %v115
    %v117 = vrot.slane %v107, %v116
    %v118 = vsel %vm113, %v117, %v106
    %v119 = vld [vmem:[%s2 + $0x7] sm:$0x1]
    %vm120 = vcmp.eq.s32.totalorder %v34, 7
    %v121 = vsel %vm120, 1, 0
    %122 = vset.pattern.permute.xlu0 0
    %123 = vperm.xlu0 %122, %v121
    %v124 = vpop.permute.xlu0 %123
    %vm125 = vcmp.eq.s32.totalorder %v124, 1
    %v126 = vlaneseq
    %v127 = vshrl.u32 %v126, 7
    %v128 = vsub.s32 0, %v127
    %v129 = vrot.slane %v119, %v128
    %v130 = vsel %vm125, %v129, %v118
    %v131 = vld [vmem:[%s2 + $0x8] sm:$0x1]
    %vm132 = vcmp.eq.s32.totalorder %v34, 8
    %v133 = vsel %vm132, 1, 0
    %134 = vset.pattern.permute.xlu0 0
    %135 = vperm.xlu0 %134, %v133
    %v136 = vpop.permute.xlu0 %135
    %vm137 = vcmp.eq.s32.totalorder %v136, 1
    %v138 = vlaneseq
    %v139 = vshrl.u32 %v138, 7
    %v140 = vsub.s32 0, %v139
    %v141 = vrot.slane %v131, %v140
    %v142 = vsel %vm137, %v141, %v130
    %v143 = vld [vmem:[%s2 + $0x9] sm:$0x1]
    %vm144 = vcmp.eq.s32.totalorder %v34, 9
    %v145 = vsel %vm144, 1, 0
    %146 = vset.pattern.permute.xlu0 0
    %147 = vperm.xlu0 %146, %v145
    %v148 = vpop.permute.xlu0 %147
    %vm149 = vcmp.eq.s32.totalorder %v148, 1
    %v150 = vlaneseq
    %v151 = vshrl.u32 %v150, 7
    %v152 = vsub.s32 0, %v151
    %v153 = vrot.slane %v143, %v152
    %v154 = vsel %vm149, %v153, %v142
    %v155 = vld [vmem:[%s2 + $0xa] sm:$0x1]
    %vm156 = vcmp.eq.s32.totalorder %v34, 10
    %v157 = vsel %vm156, 1, 0
    %158 = vset.pattern.permute.xlu0 0
    %159 = vperm.xlu0 %158, %v157
    %v160 = vpop.permute.xlu0 %159
    %vm161 = vcmp.eq.s32.totalorder %v160, 1
    %v162 = vlaneseq
    %v163 = vshrl.u32 %v162, 7
    %v164 = vsub.s32 0, %v163
    %v165 = vrot.slane %v155, %v164
    %v166 = vsel %vm161, %v165, %v154
    %v167 = vld [vmem:[%s2 + $0xb] sm:$0x1]
    %vm168 = vcmp.eq.s32.totalorder %v34, 11
    %v169 = vsel %vm168, 1, 0
    %170 = vset.pattern.permute.xlu0 0
    %171 = vperm.xlu0 %170, %v169
    %v172 = vpop.permute.xlu0 %171
    %vm173 = vcmp.eq.s32.totalorder %v172, 1
    %v174 = vlaneseq
    %v175 = vshrl.u32 %v174, 7
    %v176 = vsub.s32 0, %v175
    %v177 = vrot.slane %v167, %v176
    %v178 = vsel %vm173, %v177, %v166
    %v179 = vld [vmem:[%s2 + $0xc] sm:$0x1]
    %vm180 = vcmp.eq.s32.totalorder %v34, 12
    %v181 = vsel %vm180, 1, 0
    %182 = vset.pattern.permute.xlu0 0
    %183 = vperm.xlu0 %182, %v181
    %v184 = vpop.permute.xlu0 %183
    %vm185 = vcmp.eq.s32.totalorder %v184, 1
    %v186 = vlaneseq
    %v187 = vshrl.u32 %v186, 7
    %v188 = vsub.s32 0, %v187
    %v189 = vrot.slane %v179, %v188
    %v190 = vsel %vm185, %v189, %v178
    %v191 = vld [vmem:[%s2 + $0xd] sm:$0x1]
    %vm192 = vcmp.eq.s32.totalorder %v34, 13
    %v193 = vsel %vm192, 1, 0
    %194 = vset.pattern.permute.xlu0 0
    %195 = vperm.xlu0 %194, %v193
    %v196 = vpop.permute.xlu0 %195
    %vm197 = vcmp.eq.s32.totalorder %v196, 1
    %v198 = vlaneseq
    %v199 = vshrl.u32 %v198, 7
    %v200 = vsub.s32 0, %v199
    %v201 = vrot.slane %v191, %v200
    %v202 = vsel %vm197, %v201, %v190
    %v203 = vld [vmem:[%s2 + $0xe] sm:$0x1]
    %vm204 = vcmp.eq.s32.totalorder %v34, 14
    %v205 = vsel %vm204, 1, 0
    %206 = vset.pattern.permute.xlu0 0
    %207 = vperm.xlu0 %206, %v205
    %v208 = vpop.permute.xlu0 %207
    %vm209 = vcmp.eq.s32.totalorder %v208, 1
    %v210 = vlaneseq
    %v211 = vshrl.u32 %v210, 7
    %v212 = vsub.s32 0, %v211
    %v213 = vrot.slane %v203, %v212
    %v214 = vsel %vm209, %v213, %v202
    %v215 = vld [vmem:[%s2 + $0xf] sm:$0x1]
    %vm216 = vcmp.eq.s32.totalorder %v34, 15
    %v217 = vsel %vm216, 1, 0
    %218 = vset.pattern.permute.xlu0 0
    %219 = vperm.xlu0 %218, %v217
    %v220 = vpop.permute.xlu0 %219
    %vm221 = vcmp.eq.s32.totalorder %v220, 1
    %v222 = vlaneseq
    %v223 = vshrl.u32 %v222, 7
    %v224 = vsub.s32 0, %v223
    %v225 = vrot.slane %v215, %v224
    %v226 = vsel %vm221, %v225, %v214
    %v227 = vld [vmem:[%s2 + $0x10] sm:$0x1]
    %vm228 = vcmp.eq.s32.totalorder %v34, 16
    %v229 = vsel %vm228, 1, 0
    %230 = vset.pattern.permute.xlu0 0
    %231 = vperm.xlu0 %230, %v229
    %v232 = vpop.permute.xlu0 %231
    %vm233 = vcmp.eq.s32.totalorder %v232, 1
    %v234 = vlaneseq
    %v235 = vshrl.u32 %v234, 7
    %v236 = vsub.s32 0, %v235
    %v237 = vrot.slane %v227, %v236
    %v238 = vsel %vm233, %v237, %v226
    %v239 = vld [vmem:[%s2 + $0x11] sm:$0x1]
    %vm240 = vcmp.eq.s32.totalorder %v34, 17
    %v241 = vsel %vm240, 1, 0
    %242 = vset.pattern.permute.xlu0 0
    %243 = vperm.xlu0 %242, %v241
    %v244 = vpop.permute.xlu0 %243
    %vm245 = vcmp.eq.s32.totalorder %v244, 1
    %v246 = vlaneseq
    %v247 = vshrl.u32 %v246, 7
    %v248 = vsub.s32 0, %v247
    %v249 = vrot.slane %v239, %v248
    %v250 = vsel %vm245, %v249, %v238
    %v251 = vld [vmem:[%s2 + $0x12] sm:$0x1]
    %vm252 = vcmp.eq.s32.totalorder %v34, 18
    %v253 = vsel %vm252, 1, 0
    %254 = vset.pattern.permute.xlu0 0
    %255 = vperm.xlu0 %254, %v253
    %v256 = vpop.permute.xlu0 %255
    %vm257 = vcmp.eq.s32.totalorder %v256, 1
    %v258 = vlaneseq
    %v259 = vshrl.u32 %v258, 7
    %v260 = vsub.s32 0, %v259
    %v261 = vrot.slane %v251, %v260
    %v262 = vsel %vm257, %v261, %v250
    %v263 = vld [vmem:[%s2 + $0x13] sm:$0x1]
    %vm264 = vcmp.eq.s32.totalorder %v34, 19
    %v265 = vsel %vm264, 1, 0
    %266 = vset.pattern.permute.xlu0 0
    %267 = vperm.xlu0 %266, %v265
    %v268 = vpop.permute.xlu0 %267
    %vm269 = vcmp.eq.s32.totalorder %v268, 1
    %v270 = vlaneseq
    %v271 = vshrl.u32 %v270, 7
    %v272 = vsub.s32 0, %v271
    %v273 = vrot.slane %v263, %v272
    %v274 = vsel %vm269, %v273, %v262
    %v275 = vld [vmem:[%s2 + $0x14] sm:$0x1]
    %vm276 = vcmp.eq.s32.totalorder %v34, 20
    %v277 = vsel %vm276, 1, 0
    %278 = vset.pattern.permute.xlu0 0
    %279 = vperm.xlu0 %278, %v277
    %v280 = vpop.permute.xlu0 %279
    %vm281 = vcmp.eq.s32.totalorder %v280, 1
    %v282 = vlaneseq
    %v283 = vshrl.u32 %v282, 7
    %v284 = vsub.s32 0, %v283
    %v285 = vrot.slane %v275, %v284
    %v286 = vsel %vm281, %v285, %v274
    %v287 = vld [vmem:[%s2 + $0x15] sm:$0x1]
    %vm288 = vcmp.eq.s32.totalorder %v34, 21
    %v289 = vsel %vm288, 1, 0
    %290 = vset.pattern.permute.xlu0 0
    %291 = vperm.xlu0 %290, %v289
    %v292 = vpop.permute.xlu0 %291
    %vm293 = vcmp.eq.s32.totalorder %v292, 1
    %v294 = vlaneseq
    %v295 = vshrl.u32 %v294, 7
    %v296 = vsub.s32 0, %v295
    %v297 = vrot.slane %v287, %v296
    %v298 = vsel %vm293, %v297, %v286
    %v299 = vld [vmem:[%s2 + $0x16] sm:$0x1]
    %vm300 = vcmp.eq.s32.totalorder %v34, 22
    %v301 = vsel %vm300, 1, 0
    %302 = vset.pattern.permute.xlu0 0
    %303 = vperm.xlu0 %302, %v301
    %v304 = vpop.permute.xlu0 %303
    %vm305 = vcmp.eq.s32.totalorder %v304, 1
    %v306 = vlaneseq
    %v307 = vshrl.u32 %v306, 7
    %v308 = vsub.s32 0, %v307
    %v309 = vrot.slane %v299, %v308
    %v310 = vsel %vm305, %v309, %v298
    %v311 = vld [vmem:[%s2 + $0x17] sm:$0x1]
    %vm312 = vcmp.eq.s32.totalorder %v34, 23
    %v313 = vsel %vm312, 1, 0
    %314 = vset.pattern.permute.xlu0 0
    %315 = vperm.xlu0 %314, %v313
    %v316 = vpop.permute.xlu0 %315
    %vm317 = vcmp.eq.s32.totalorder %v316, 1
    %v318 = vlaneseq
    %v319 = vshrl.u32 %v318, 7
    %v320 = vsub.s32 0, %v319
    %v321 = vrot.slane %v311, %v320
    %v322 = vsel %vm317, %v321, %v310
    %v323 = vld [vmem:[%s2 + $0x18] sm:$0x1]
    %vm324 = vcmp.eq.s32.totalorder %v34, 24
    %v325 = vsel %vm324, 1, 0
    %326 = vset.pattern.permute.xlu0 0
    %327 = vperm.xlu0 %326, %v325
    %v328 = vpop.permute.xlu0 %327
    %vm329 = vcmp.eq.s32.totalorder %v328, 1
    %v330 = vlaneseq
    %v331 = vshrl.u32 %v330, 7
    %v332 = vsub.s32 0, %v331
    %v333 = vrot.slane %v323, %v332
    %v334 = vsel %vm329, %v333, %v322
    %v335 = vld [vmem:[%s2 + $0x19] sm:$0x1]
    %vm336 = vcmp.eq.s32.totalorder %v34, 25
    %v337 = vsel %vm336, 1, 0
    %338 = vset.pattern.permute.xlu0 0
    %339 = vperm.xlu0 %338, %v337
    %v340 = vpop.permute.xlu0 %339
    %vm341 = vcmp.eq.s32.totalorder %v340, 1
    %v342 = vlaneseq
    %v343 = vshrl.u32 %v342, 7
    %v344 = vsub.s32 0, %v343
    %v345 = vrot.slane %v335, %v344
    %v346 = vsel %vm341, %v345, %v334
    %v347 = vld [vmem:[%s2 + $0x1a] sm:$0x1]
    %vm348 = vcmp.eq.s32.totalorder %v34, 26
    %v349 = vsel %vm348, 1, 0
    %350 = vset.pattern.permute.xlu0 0
    %351 = vperm.xlu0 %350, %v349
    %v352 = vpop.permute.xlu0 %351
    %vm353 = vcmp.eq.s32.totalorder %v352, 1
    %v354 = vlaneseq
    %v355 = vshrl.u32 %v354, 7
    %v356 = vsub.s32 0, %v355
    %v357 = vrot.slane %v347, %v356
    %v358 = vsel %vm353, %v357, %v346
    %v359 = vld [vmem:[%s2 + $0x1b] sm:$0x1]
    %vm360 = vcmp.eq.s32.totalorder %v34, 27
    %v361 = vsel %vm360, 1, 0
    %362 = vset.pattern.permute.xlu0 0
    %363 = vperm.xlu0 %362, %v361
    %v364 = vpop.permute.xlu0 %363
    %vm365 = vcmp.eq.s32.totalorder %v364, 1
    %v366 = vlaneseq
    %v367 = vshrl.u32 %v366, 7
    %v368 = vsub.s32 0, %v367
    %v369 = vrot.slane %v359, %v368
    %v370 = vsel %vm365, %v369, %v358
    %v371 = vld [vmem:[%s2 + $0x1c] sm:$0x1]
    %vm372 = vcmp.eq.s32.totalorder %v34, 28
    %v373 = vsel %vm372, 1, 0
    %374 = vset.pattern.permute.xlu0 0
    %375 = vperm.xlu0 %374, %v373
    %v376 = vpop.permute.xlu0 %375
    %vm377 = vcmp.eq.s32.totalorder %v376, 1
    %v378 = vlaneseq
    %v379 = vshrl.u32 %v378, 7
    %v380 = vsub.s32 0, %v379
    %v381 = vrot.slane %v371, %v380
    %v382 = vsel %vm377, %v381, %v370
    %v383 = vld [vmem:[%s2 + $0x1d] sm:$0x1]
    %vm384 = vcmp.eq.s32.totalorder %v34, 29
    %v385 = vsel %vm384, 1, 0
    %386 = vset.pattern.permute.xlu0 0
    %387 = vperm.xlu0 %386, %v385
    %v388 = vpop.permute.xlu0 %387
    %vm389 = vcmp.eq.s32.totalorder %v388, 1
    %v390 = vlaneseq
    %v391 = vshrl.u32 %v390, 7
    %v392 = vsub.s32 0, %v391
    %v393 = vrot.slane %v383, %v392
    %v394 = vsel %vm389, %v393, %v382
    %v395 = vld [vmem:[%s2 + $0x1e] sm:$0x1]
    %vm396 = vcmp.eq.s32.totalorder %v34, 30
    %v397 = vsel %vm396, 1, 0
    %398 = vset.pattern.permute.xlu0 0
    %399 = vperm.xlu0 %398, %v397
    %v400 = vpop.permute.xlu0 %399
    %vm401 = vcmp.eq.s32.totalorder %v400, 1
    %v402 = vlaneseq
    %v403 = vshrl.u32 %v402, 7
    %v404 = vsub.s32 0, %v403
    %v405 = vrot.slane %v395, %v404
    %v406 = vsel %vm401, %v405, %v394
    %v407 = vld [vmem:[%s2 + $0x1f] sm:$0x1]
    %vm408 = vcmp.eq.s32.totalorder %v34, 31
    %v409 = vsel %vm408, 1, 0
    %410 = vset.pattern.permute.xlu0 0
    %411 = vperm.xlu0 %410, %v409
    %v412 = vpop.permute.xlu0 %411
    %vm413 = vcmp.eq.s32.totalorder %v412, 1
    %v414 = vlaneseq
    %v415 = vshrl.u32 %v414, 7
    %v416 = vsub.s32 0, %v415
    %v417 = vrot.slane %v407, %v416
    %v418 = vsel %vm413, %v417, %v406
    %v419 = vld [vmem:[%s2 + $0x20] sm:$0x1]
    %vm420 = vcmp.eq.s32.totalorder %v34, 32
    %v421 = vsel %vm420, 1, 0
    %422 = vset.pattern.permute.xlu0 0
    %423 = vperm.xlu0 %422, %v421
    %v424 = vpop.permute.xlu0 %423
    %vm425 = vcmp.eq.s32.totalorder %v424, 1
    %v426 = vlaneseq
    %v427 = vshrl.u32 %v426, 7
    %v428 = vsub.s32 0, %v427
    %v429 = vrot.slane %v419, %v428
    %v430 = vsel %vm425, %v429, %v418
    %v431 = vld [vmem:[%s2 + $0x21] sm:$0x1]
    %vm432 = vcmp.eq.s32.totalorder %v34, 33
    %v433 = vsel %vm432, 1, 0
    %434 = vset.pattern.permute.xlu0 0
    %435 = vperm.xlu0 %434, %v433
    %v436 = vpop.permute.xlu0 %435
    %vm437 = vcmp.eq.s32.totalorder %v436, 1
    %v438 = vlaneseq
    %v439 = vshrl.u32 %v438, 7
    %v440 = vsub.s32 0, %v439
    %v441 = vrot.slane %v431, %v440
    %v442 = vsel %vm437, %v441, %v430
    %v443 = vld [vmem:[%s2 + $0x22] sm:$0x1]
    %vm444 = vcmp.eq.s32.totalorder %v34, 34
    %v445 = vsel %vm444, 1, 0
    %446 = vset.pattern.permute.xlu0 0
    %447 = vperm.xlu0 %446, %v445
    %v448 = vpop.permute.xlu0 %447
    %vm449 = vcmp.eq.s32.totalorder %v448, 1
    %v450 = vlaneseq
    %v451 = vshrl.u32 %v450, 7
    %v452 = vsub.s32 0, %v451
    %v453 = vrot.slane %v443, %v452
    %v454 = vsel %vm449, %v453, %v442
    %v455 = vld [vmem:[%s2 + $0x23] sm:$0x1]
    %vm456 = vcmp.eq.s32.totalorder %v34, 35
    %v457 = vsel %vm456, 1, 0
    %458 = vset.pattern.permute.xlu0 0
    %459 = vperm.xlu0 %458, %v457
    %v460 = vpop.permute.xlu0 %459
    %vm461 = vcmp.eq.s32.totalorder %v460, 1
    %v462 = vlaneseq
    %v463 = vshrl.u32 %v462, 7
    %v464 = vsub.s32 0, %v463
    %v465 = vrot.slane %v455, %v464
    %v466 = vsel %vm461, %v465, %v454
    %v467 = vld [vmem:[%s2 + $0x24] sm:$0x1]
    %vm468 = vcmp.eq.s32.totalorder %v34, 36
    %v469 = vsel %vm468, 1, 0
    %470 = vset.pattern.permute.xlu0 0
    %471 = vperm.xlu0 %470, %v469
    %v472 = vpop.permute.xlu0 %471
    %vm473 = vcmp.eq.s32.totalorder %v472, 1
    %v474 = vlaneseq
    %v475 = vshrl.u32 %v474, 7
    %v476 = vsub.s32 0, %v475
    %v477 = vrot.slane %v467, %v476
    %v478 = vsel %vm473, %v477, %v466
    %v479 = vld [vmem:[%s2 + $0x25] sm:$0x1]
    %vm480 = vcmp.eq.s32.totalorder %v34, 37
    %v481 = vsel %vm480, 1, 0
    %482 = vset.pattern.permute.xlu0 0
    %483 = vperm.xlu0 %482, %v481
    %v484 = vpop.permute.xlu0 %483
    %vm485 = vcmp.eq.s32.totalorder %v484, 1
    %v486 = vlaneseq
    %v487 = vshrl.u32 %v486, 7
    %v488 = vsub.s32 0, %v487
    %v489 = vrot.slane %v479, %v488
    %v490 = vsel %vm485, %v489, %v478
    %v491 = vld [vmem:[%s2 + $0x26] sm:$0x1]
    %vm492 = vcmp.eq.s32.totalorder %v34, 38
    %v493 = vsel %vm492, 1, 0
    %494 = vset.pattern.permute.xlu0 0
    %495 = vperm.xlu0 %494, %v493
    %v496 = vpop.permute.xlu0 %495
    %vm497 = vcmp.eq.s32.totalorder %v496, 1
    %v498 = vlaneseq
    %v499 = vshrl.u32 %v498, 7
    %v500 = vsub.s32 0, %v499
    %v501 = vrot.slane %v491, %v500
    %v502 = vsel %vm497, %v501, %v490
    %v503 = vld [vmem:[%s2 + $0x27] sm:$0x1]
    %vm504 = vcmp.eq.s32.totalorder %v34, 39
    %v505 = vsel %vm504, 1, 0
    %506 = vset.pattern.permute.xlu0 0
    %507 = vperm.xlu0 %506, %v505
    %v508 = vpop.permute.xlu0 %507
    %vm509 = vcmp.eq.s32.totalorder %v508, 1
    %v510 = vlaneseq
    %v511 = vshrl.u32 %v510, 7
    %v512 = vsub.s32 0, %v511
    %v513 = vrot.slane %v503, %v512
    %v514 = vsel %vm509, %v513, %v502
    %v515 = vld [vmem:[%s2 + $0x28] sm:$0x1]
    %vm516 = vcmp.eq.s32.totalorder %v34, 40
    %v517 = vsel %vm516, 1, 0
    %518 = vset.pattern.permute.xlu0 0
    %519 = vperm.xlu0 %518, %v517
    %v520 = vpop.permute.xlu0 %519
    %vm521 = vcmp.eq.s32.totalorder %v520, 1
    %v522 = vlaneseq
    %v523 = vshrl.u32 %v522, 7
    %v524 = vsub.s32 0, %v523
    %v525 = vrot.slane %v515, %v524
    %v526 = vsel %vm521, %v525, %v514
    %v527 = vld [vmem:[%s2 + $0x29] sm:$0x1]
    %vm528 = vcmp.eq.s32.totalorder %v34, 41
    %v529 = vsel %vm528, 1, 0
    %530 = vset.pattern.permute.xlu0 0
    %531 = vperm.xlu0 %530, %v529
    %v532 = vpop.permute.xlu0 %531
    %vm533 = vcmp.eq.s32.totalorder %v532, 1
    %v534 = vlaneseq
    %v535 = vshrl.u32 %v534, 7
    %v536 = vsub.s32 0, %v535
    %v537 = vrot.slane %v527, %v536
    %v538 = vsel %vm533, %v537, %v526
    %v539 = vld [vmem:[%s2 + $0x2a] sm:$0x1]
    %vm540 = vcmp.eq.s32.totalorder %v34, 42
    %v541 = vsel %vm540, 1, 0
    %542 = vset.pattern.permute.xlu0 0
    %543 = vperm.xlu0 %542, %v541
    %v544 = vpop.permute.xlu0 %543
    %vm545 = vcmp.eq.s32.totalorder %v544, 1
    %v546 = vlaneseq
    %v547 = vshrl.u32 %v546, 7
    %v548 = vsub.s32 0, %v547
    %v549 = vrot.slane %v539, %v548
    %v550 = vsel %vm545, %v549, %v538
    %v551 = vld [vmem:[%s2 + $0x2b] sm:$0x1]
    %vm552 = vcmp.eq.s32.totalorder %v34, 43
    %v553 = vsel %vm552, 1, 0
    %554 = vset.pattern.permute.xlu0 0
    %555 = vperm.xlu0 %554, %v553
    %v556 = vpop.permute.xlu0 %555
    %vm557 = vcmp.eq.s32.totalorder %v556, 1
    %v558 = vlaneseq
    %v559 = vshrl.u32 %v558, 7
    %v560 = vsub.s32 0, %v559
    %v561 = vrot.slane %v551, %v560
    %v562 = vsel %vm557, %v561, %v550
    %v563 = vld [vmem:[%s2 + $0x2c] sm:$0x1]
    %vm564 = vcmp.eq.s32.totalorder %v34, 44
    %v565 = vsel %vm564, 1, 0
    %566 = vset.pattern.permute.xlu0 0
    %567 = vperm.xlu0 %566, %v565
    %v568 = vpop.permute.xlu0 %567
    %vm569 = vcmp.eq.s32.totalorder %v568, 1
    %v570 = vlaneseq
    %v571 = vshrl.u32 %v570, 7
    %v572 = vsub.s32 0, %v571
    %v573 = vrot.slane %v563, %v572
    %v574 = vsel %vm569, %v573, %v562
    %v575 = vld [vmem:[%s2 + $0x2d] sm:$0x1]
    %vm576 = vcmp.eq.s32.totalorder %v34, 45
    %v577 = vsel %vm576, 1, 0
    %578 = vset.pattern.permute.xlu0 0
    %579 = vperm.xlu0 %578, %v577
    %v580 = vpop.permute.xlu0 %579
    %vm581 = vcmp.eq.s32.totalorder %v580, 1
    %v582 = vlaneseq
    %v583 = vshrl.u32 %v582, 7
    %v584 = vsub.s32 0, %v583
    %v585 = vrot.slane %v575, %v584
    %v586 = vsel %vm581, %v585, %v574
    %v587 = vld [vmem:[%s2 + $0x2e] sm:$0x1]
    %vm588 = vcmp.eq.s32.totalorder %v34, 46
    %v589 = vsel %vm588, 1, 0
    %590 = vset.pattern.permute.xlu0 0
    %591 = vperm.xlu0 %590, %v589
    %v592 = vpop.permute.xlu0 %591
    %vm593 = vcmp.eq.s32.totalorder %v592, 1
    %v594 = vlaneseq
    %v595 = vshrl.u32 %v594, 7
    %v596 = vsub.s32 0, %v595
    %v597 = vrot.slane %v587, %v596
    %v598 = vsel %vm593, %v597, %v586
    %v599 = vld [vmem:[%s2 + $0x2f] sm:$0x1]
    %vm600 = vcmp.eq.s32.totalorder %v34, 47
    %v601 = vsel %vm600, 1, 0
    %602 = vset.pattern.permute.xlu0 0
    %603 = vperm.xlu0 %602, %v601
    %v604 = vpop.permute.xlu0 %603
    %vm605 = vcmp.eq.s32.totalorder %v604, 1
    %v606 = vlaneseq
    %v607 = vshrl.u32 %v606, 7
    %v608 = vsub.s32 0, %v607
    %v609 = vrot.slane %v599, %v608
    %v610 = vsel %vm605, %v609, %v598
    %v611 = vld [vmem:[%s2 + $0x30] sm:$0x1]
    %vm612 = vcmp.eq.s32.totalorder %v34, 48
    %v613 = vsel %vm612, 1, 0
    %614 = vset.pattern.permute.xlu0 0
    %615 = vperm.xlu0 %614, %v613
    %v616 = vpop.permute.xlu0 %615
    %vm617 = vcmp.eq.s32.totalorder %v616, 1
    %v618 = vlaneseq
    %v619 = vshrl.u32 %v618, 7
    %v620 = vsub.s32 0, %v619
    %v621 = vrot.slane %v611, %v620
    %v622 = vsel %vm617, %v621, %v610
    %v623 = vld [vmem:[%s2 + $0x31] sm:$0x1]
    %vm624 = vcmp.eq.s32.totalorder %v34, 49
    %v625 = vsel %vm624, 1, 0
    %626 = vset.pattern.permute.xlu0 0
    %627 = vperm.xlu0 %626, %v625
    %v628 = vpop.permute.xlu0 %627
    %vm629 = vcmp.eq.s32.totalorder %v628, 1
    %v630 = vlaneseq
    %v631 = vshrl.u32 %v630, 7
    %v632 = vsub.s32 0, %v631
    %v633 = vrot.slane %v623, %v632
    %v634 = vsel %vm629, %v633, %v622
    %v635 = vld [vmem:[%s2 + $0x32] sm:$0x1]
    %vm636 = vcmp.eq.s32.totalorder %v34, 50
    %v637 = vsel %vm636, 1, 0
    %638 = vset.pattern.permute.xlu0 0
    %639 = vperm.xlu0 %638, %v637
    %v640 = vpop.permute.xlu0 %639
    %vm641 = vcmp.eq.s32.totalorder %v640, 1
    %v642 = vlaneseq
    %v643 = vshrl.u32 %v642, 7
    %v644 = vsub.s32 0, %v643
    %v645 = vrot.slane %v635, %v644
    %v646 = vsel %vm641, %v645, %v634
    %v647 = vld [vmem:[%s2 + $0x33] sm:$0x1]
    %vm648 = vcmp.eq.s32.totalorder %v34, 51
    %v649 = vsel %vm648, 1, 0
    %650 = vset.pattern.permute.xlu0 0
    %651 = vperm.xlu0 %650, %v649
    %v652 = vpop.permute.xlu0 %651
    %vm653 = vcmp.eq.s32.totalorder %v652, 1
    %v654 = vlaneseq
    %v655 = vshrl.u32 %v654, 7
    %v656 = vsub.s32 0, %v655
    %v657 = vrot.slane %v647, %v656
    %v658 = vsel %vm653, %v657, %v646
    %v659 = vld [vmem:[%s2 + $0x34] sm:$0x1]
    %vm660 = vcmp.eq.s32.totalorder %v34, 52
    %v661 = vsel %vm660, 1, 0
    %662 = vset.pattern.permute.xlu0 0
    %663 = vperm.xlu0 %662, %v661
    %v664 = vpop.permute.xlu0 %663
    %vm665 = vcmp.eq.s32.totalorder %v664, 1
    %v666 = vlaneseq
    %v667 = vshrl.u32 %v666, 7
    %v668 = vsub.s32 0, %v667
    %v669 = vrot.slane %v659, %v668
    %v670 = vsel %vm665, %v669, %v658
    %v671 = vld [vmem:[%s2 + $0x35] sm:$0x1]
    %vm672 = vcmp.eq.s32.totalorder %v34, 53
    %v673 = vsel %vm672, 1, 0
    %674 = vset.pattern.permute.xlu0 0
    %675 = vperm.xlu0 %674, %v673
    %v676 = vpop.permute.xlu0 %675
    %vm677 = vcmp.eq.s32.totalorder %v676, 1
    %v678 = vlaneseq
    %v679 = vshrl.u32 %v678, 7
    %v680 = vsub.s32 0, %v679
    %v681 = vrot.slane %v671, %v680
    %v682 = vsel %vm677, %v681, %v670
    %v683 = vld [vmem:[%s2 + $0x36] sm:$0x1]
    %vm684 = vcmp.eq.s32.totalorder %v34, 54
    %v685 = vsel %vm684, 1, 0
    %686 = vset.pattern.permute.xlu0 0
    %687 = vperm.xlu0 %686, %v685
    %v688 = vpop.permute.xlu0 %687
    %vm689 = vcmp.eq.s32.totalorder %v688, 1
    %v690 = vlaneseq
    %v691 = vshrl.u32 %v690, 7
    %v692 = vsub.s32 0, %v691
    %v693 = vrot.slane %v683, %v692
    %v694 = vsel %vm689, %v693, %v682
    %v695 = vld [vmem:[%s2 + $0x37] sm:$0x1]
    %vm696 = vcmp.eq.s32.totalorder %v34, 55
    %v697 = vsel %vm696, 1, 0
    %698 = vset.pattern.permute.xlu0 0
    %699 = vperm.xlu0 %698, %v697
    %v700 = vpop.permute.xlu0 %699
    %vm701 = vcmp.eq.s32.totalorder %v700, 1
    %v702 = vlaneseq
    %v703 = vshrl.u32 %v702, 7
    %v704 = vsub.s32 0, %v703
    %v705 = vrot.slane %v695, %v704
    %v706 = vsel %vm701, %v705, %v694
    %v707 = vld [vmem:[%s2 + $0x38] sm:$0x1]
    %vm708 = vcmp.eq.s32.totalorder %v34, 56
    %v709 = vsel %vm708, 1, 0
    %710 = vset.pattern.permute.xlu0 0
    %711 = vperm.xlu0 %710, %v709
    %v712 = vpop.permute.xlu0 %711
    %vm713 = vcmp.eq.s32.totalorder %v712, 1
    %v714 = vlaneseq
    %v715 = vshrl.u32 %v714, 7
    %v716 = vsub.s32 0, %v715
    %v717 = vrot.slane %v707, %v716
    %v718 = vsel %vm713, %v717, %v706
    %v719 = vld [vmem:[%s2 + $0x39] sm:$0x1]
    %vm720 = vcmp.eq.s32.totalorder %v34, 57
    %v721 = vsel %vm720, 1, 0
    %722 = vset.pattern.permute.xlu0 0
    %723 = vperm.xlu0 %722, %v721
    %v724 = vpop.permute.xlu0 %723
    %vm725 = vcmp.eq.s32.totalorder %v724, 1
    %v726 = vlaneseq
    %v727 = vshrl.u32 %v726, 7
    %v728 = vsub.s32 0, %v727
    %v729 = vrot.slane %v719, %v728
    %v730 = vsel %vm725, %v729, %v718
    %v731 = vld [vmem:[%s2 + $0x3a] sm:$0x1]
    %vm732 = vcmp.eq.s32.totalorder %v34, 58
    %v733 = vsel %vm732, 1, 0
    %734 = vset.pattern.permute.xlu0 0
    %735 = vperm.xlu0 %734, %v733
    %v736 = vpop.permute.xlu0 %735
    %vm737 = vcmp.eq.s32.totalorder %v736, 1
    %v738 = vlaneseq
    %v739 = vshrl.u32 %v738, 7
    %v740 = vsub.s32 0, %v739
    %v741 = vrot.slane %v731, %v740
    %v742 = vsel %vm737, %v741, %v730
    %v743 = vld [vmem:[%s2 + $0x3b] sm:$0x1]
    %vm744 = vcmp.eq.s32.totalorder %v34, 59
    %v745 = vsel %vm744, 1, 0
    %746 = vset.pattern.permute.xlu0 0
    %747 = vperm.xlu0 %746, %v745
    %v748 = vpop.permute.xlu0 %747
    %vm749 = vcmp.eq.s32.totalorder %v748, 1
    %v750 = vlaneseq
    %v751 = vshrl.u32 %v750, 7
    %v752 = vsub.s32 0, %v751
    %v753 = vrot.slane %v743, %v752
    %v754 = vsel %vm749, %v753, %v742
    %v755 = vld [vmem:[%s2 + $0x3c] sm:$0x1]
    %vm756 = vcmp.eq.s32.totalorder %v34, 60
    %v757 = vsel %vm756, 1, 0
    %758 = vset.pattern.permute.xlu0 0
    %759 = vperm.xlu0 %758, %v757
    %v760 = vpop.permute.xlu0 %759
    %vm761 = vcmp.eq.s32.totalorder %v760, 1
    %v762 = vlaneseq
    %v763 = vshrl.u32 %v762, 7
    %v764 = vsub.s32 0, %v763
    %v765 = vrot.slane %v755, %v764
    %v766 = vsel %vm761, %v765, %v754
    %v767 = vld [vmem:[%s2 + $0x3d] sm:$0x1]
    %vm768 = vcmp.eq.s32.totalorder %v34, 61
    %v769 = vsel %vm768, 1, 0
    %770 = vset.pattern.permute.xlu0 0
    %771 = vperm.xlu0 %770, %v769
    %v772 = vpop.permute.xlu0 %771
    %vm773 = vcmp.eq.s32.totalorder %v772, 1
    %v774 = vlaneseq
    %v775 = vshrl.u32 %v774, 7
    %v776 = vsub.s32 0, %v775
    %v777 = vrot.slane %v767, %v776
    %v778 = vsel %vm773, %v777, %v766
    %v779 = vld [vmem:[%s2 + $0x3e] sm:$0x1]
    %vm780 = vcmp.eq.s32.totalorder %v34, 62
    %v781 = vsel %vm780, 1, 0
    %782 = vset.pattern.permute.xlu0 0
    %783 = vperm.xlu0 %782, %v781
    %v784 = vpop.permute.xlu0 %783
    %vm785 = vcmp.eq.s32.totalorder %v784, 1
    %v786 = vlaneseq
    %v787 = vshrl.u32 %v786, 7
    %v788 = vsub.s32 0, %v787
    %v789 = vrot.slane %v779, %v788
    %v790 = vsel %vm785, %v789, %v778
    %v791 = vld [vmem:[%s2 + $0x3f] sm:$0x1]
    %vm792 = vcmp.eq.s32.totalorder %v34, 63
    %v793 = vsel %vm792, 1, 0
    %794 = vset.pattern.permute.xlu0 0
    %795 = vperm.xlu0 %794, %v793
    %v796 = vpop.permute.xlu0 %795
    %vm797 = vcmp.eq.s32.totalorder %v796, 1
    %v798 = vlaneseq
    %v799 = vshrl.u32 %v798, 7
    %v800 = vsub.s32 0, %v799
    %v801 = vrot.slane %v791, %v800
    %v802 = vsel %vm797, %v801, %v790
    %vm803 = vcmask 261120
    %804 = vst.msk [vmem:[#allocation5] sm:$0xff] %vm803, %v802
    %v805 = vld [vmem:[%s0] sm:$0xff]
    %v806 = vld [vmem:[%s3] sm:$0x1]
    %vm807 = vcmp.eq.s32.totalorder %v805, 0
    %v808 = vsel %vm807, 1, 0
    %809 = vset.pattern.permute.xlu0 1
    %810 = vperm.xlu0 %809, %v808
    %v811 = vpop.permute.xlu0 %810
    %vm812 = vcmp.eq.s32.totalorder %v811, 1
    %v813 = vlaneseq
    %v814 = vshrl.u32 %v813, 7
    %v815 = vsub.s32 0, %v814
    %v816 = vrot.slane %v806, %v815
    %v817 = vsel %vm812, %v816, 0.0
    %v818 = vld [vmem:[%s3 + $0x1] sm:$0x1]
    %vm819 = vcmp.eq.s32.totalorder %v805, 1
    %v820 = vsel %vm819, 1, 0
    %821 = vset.pattern.permute.xlu0 1
    %822 = vperm.xlu0 %821, %v820
    %v823 = vpop.permute.xlu0 %822
    %vm824 = vcmp.eq.s32.totalorder %v823, 1
    %v825 = vlaneseq
    %v826 = vshrl.u32 %v825, 7
    %v827 = vsub.s32 0, %v826
    %v828 = vrot.slane %v818, %v827
    %v829 = vsel %vm824, %v828, %v817
    %831 = vrot.lane.b32.xlu0 %v829, 32
    %v832 = vpop.permute.xlu0 %831
    %vm834 = vcmask 523520
    %835 = vst.msk [vmem:[#allocation5] sm:$0xff] %vm834, %v832
    %v836 = vld [vmem:[%s0] sm:$0xff]
    %v837 = vld [vmem:[%s4] sm:$0x1]
    %vm838 = vcmp.eq.s32.totalorder %v836, 0
    %v839 = vsel %vm838, 1, 0
    %840 = vset.pattern.permute.xlu0 2
    %841 = vperm.xlu0 %840, %v839
    %v842 = vpop.permute.xlu0 %841
    %vm843 = vcmp.eq.s32.totalorder %v842, 1
    %v844 = vlaneseq
    %v845 = vshrl.u32 %v844, 7
    %v846 = vsub.s32 0, %v845
    %v847 = vrot.slane %v837, %v846
    %v848 = vsel %vm843, %v847, 0.0
    %v849 = vld [vmem:[%s4 + $0x1] sm:$0x1]
    %vm850 = vcmp.eq.s32.totalorder %v836, 1
    %v851 = vsel %vm850, 1, 0
    %852 = vset.pattern.permute.xlu0 2
    %853 = vperm.xlu0 %852, %v851
    %v854 = vpop.permute.xlu0 %853
    %vm855 = vcmp.eq.s32.totalorder %v854, 1
    %v856 = vlaneseq
    %v857 = vshrl.u32 %v856, 7
    %v858 = vsub.s32 0, %v857
    %v859 = vrot.slane %v849, %v858
    %v860 = vsel %vm855, %v859, %v848
    %v861 = vld [vmem:[%s4 + $0x2] sm:$0x1]
    %vm862 = vcmp.eq.s32.totalorder %v836, 2
    %v863 = vsel %vm862, 1, 0
    %864 = vset.pattern.permute.xlu0 2
    %865 = vperm.xlu0 %864, %v863
    %v866 = vpop.permute.xlu0 %865
    %vm867 = vcmp.eq.s32.totalorder %v866, 1
    %v868 = vlaneseq
    %v869 = vshrl.u32 %v868, 7
    %v870 = vsub.s32 0, %v869
    %v871 = vrot.slane %v861, %v870
    %v872 = vsel %vm867, %v871, %v860
    %v873 = vld [vmem:[%s4 + $0x3] sm:$0x1]
    %vm874 = vcmp.eq.s32.totalorder %v836, 3
    %v875 = vsel %vm874, 1, 0
    %876 = vset.pattern.permute.xlu0 2
    %877 = vperm.xlu0 %876, %v875
    %v878 = vpop.permute.xlu0 %877
    %vm879 = vcmp.eq.s32.totalorder %v878, 1
    %v880 = vlaneseq
    %v881 = vshrl.u32 %v880, 7
    %v882 = vsub.s32 0, %v881
    %v883 = vrot.slane %v873, %v882
    %v884 = vsel %vm879, %v883, %v872
    %v885 = vld [vmem:[%s4 + $0x4] sm:$0x1]
    %vm886 = vcmp.eq.s32.totalorder %v836, 4
    %v887 = vsel %vm886, 1, 0
    %888 = vset.pattern.permute.xlu0 2
    %889 = vperm.xlu0 %888, %v887
    %v890 = vpop.permute.xlu0 %889
    %vm891 = vcmp.eq.s32.totalorder %v890, 1
    %v892 = vlaneseq
    %v893 = vshrl.u32 %v892, 7
    %v894 = vsub.s32 0, %v893
    %v895 = vrot.slane %v885, %v894
    %v896 = vsel %vm891, %v895, %v884
    %v897 = vld [vmem:[%s4 + $0x5] sm:$0x1]
    %vm898 = vcmp.eq.s32.totalorder %v836, 5
    %v899 = vsel %vm898, 1, 0
    %900 = vset.pattern.permute.xlu0 2
    %901 = vperm.xlu0 %900, %v899
    %v902 = vpop.permute.xlu0 %901
    %vm903 = vcmp.eq.s32.totalorder %v902, 1
    %v904 = vlaneseq
    %v905 = vshrl.u32 %v904, 7
    %v906 = vsub.s32 0, %v905
    %v907 = vrot.slane %v897, %v906
    %v908 = vsel %vm903, %v907, %v896
    %v909 = vld [vmem:[%s4 + $0x6] sm:$0x1]
    %vm910 = vcmp.eq.s32.totalorder %v836, 6
    %v911 = vsel %vm910, 1, 0
    %912 = vset.pattern.permute.xlu0 2
    %913 = vperm.xlu0 %912, %v911
    %v914 = vpop.permute.xlu0 %913
    %vm915 = vcmp.eq.s32.totalorder %v914, 1
    %v916 = vlaneseq
    %v917 = vshrl.u32 %v916, 7
    %v918 = vsub.s32 0, %v917
    %v919 = vrot.slane %v909, %v918
    %v920 = vsel %vm915, %v919, %v908
    %v921 = vld [vmem:[%s4 + $0x7] sm:$0x1]
    %vm922 = vcmp.eq.s32.totalorder %v836, 7
    %v923 = vsel %vm922, 1, 0
    %924 = vset.pattern.permute.xlu0 2
    %925 = vperm.xlu0 %924, %v923
    %v926 = vpop.permute.xlu0 %925
    %vm927 = vcmp.eq.s32.totalorder %v926, 1
    %v928 = vlaneseq
    %v929 = vshrl.u32 %v928, 7
    %v930 = vsub.s32 0, %v929
    %v931 = vrot.slane %v921, %v930
    %v932 = vsel %vm927, %v931, %v920
    %934 = vrot.lane.b32.xlu0 %v932, 64
    %v935 = vpop.permute.xlu0 %934
    %vm937 = vcmask 785920
    %938 = vst.msk [vmem:[#allocation5] sm:$0xff] %vm937, %v935
    // Predicated region
    $region26: #{tpu_custom_call.1} parent=1 // pred_check
      _
    $region27: #{tpu_custom_call.1} parent=1 // pred_check_branch
      %940 = sbr.rel (0) target = $region29
    $region28: #{tpu_custom_call.1} parent=1 // pred_region
      %s942 = ssub.s32 128, 128
      %943 = vsyncadd [#allocation3], %s942
      %s945 = sshll.u32 [#allocation5], 4
      %s946 = int_to_ptr.vmem [resolvable:$true] %s945
      %948 = dma.vmem_to_hbm [thread:$0]  %s946, 128, %s5, [#allocation3]
    $region29: #{tpu_custom_call.1} parent=1 // pred_fallthru
      _
    // Predicated region
    $region30: #{tpu_custom_call.1} parent=1 // pred_check
      _
    $region31: #{tpu_custom_call.1} parent=1 // pred_check_branch
      %950 = sbr.rel (0) target = $region33
    $region32: #{tpu_custom_call.1} parent=1 // pred_region
      %951 = dma.done [#allocation3], 128
    $region33: #{tpu_custom_call.1} parent=1 // pred_fallthru
      _
    %952 = vsyncpa [#allocation3], 1
    %953 = vsyncpa [#allocation4], 1

</llo_original>
